<compile_context>
chip_gen: v5e
topology: v5e:2x2
jax: 0.10.0
libtpu: 0.0.40
codegen_flags: <defaults>
</compile_context>

<pallas_src>
import functools
import math

import jax
import jax.numpy as jnp
from jax.experimental import pallas as pl
from jax.experimental.pallas import tpu as pltpu

# ----------------------------- model config ---------------------------------
D_MODEL = 32
NHEAD = 4
HEAD_DIM = D_MODEL // NHEAD
DIM_FF = 64
LN_EPS = 1e-5

# ----------------------------- small shapes ---------------------------------
BATCH = 2
TGT_LEN = 8
MEM_LEN = 16


def _layernorm(x, gamma, beta):
    mean = jnp.mean(x, axis=-1, keepdims=True)
    var = jnp.mean((x - mean) ** 2, axis=-1, keepdims=True)
    inv = jax.lax.rsqrt(var + LN_EPS)
    return (x - mean) * inv * gamma + beta


# --------------------------------- kernel ------------------------------------
def decoder_layer_kernel(
    tgt_ref, qpos_ref, mem_ref, pos_ref,
    wq_ref, bq_ref, wk_ref, bk_ref, wv_ref, bv_ref,
    wo_ref, bo_ref, w1_ref, b1_ref, w2_ref, b2_ref,
    g2_ref, be2_ref, g3_ref, be3_ref,
    out_ref,
    *, nbatch, nhead, head_dim,
):
    f32 = jnp.float32
    bf16 = jnp.bfloat16
    tq = tgt_ref.shape[0]          # query rows in this block
    dm = wo_ref.shape[1]           # d_model

    # Load weights once per grid step (already bf16; q-scale folded into wq/bq).
    wq = wq_ref[...]; wk = wk_ref[...]; wv = wv_ref[...]
    wo = wo_ref[...]; w1 = w1_ref[...]; w2 = w2_ref[...]
    bq = bq_ref[...]; bk = bk_ref[...]; bv = bv_ref[...]
    b1 = b1_ref[...]; b2 = b2_ref[...]
    g2 = g2_ref[...]; be2 = be2_ref[...]; g3 = g3_ref[...]; be3 = be3_ref[...]
    # Hoisted broadcast (JAX does not CSE broadcast_in_dim inside loops).
    bo_rows = jnp.broadcast_to(bo_ref[...], (tq, dm)).astype(f32)

    contract_last = (((1,), (1,)), ((), ()))   # q . k^T without any transpose

    for bi in range(nbatch):                   # static loop: batch folded in
        tgt = tgt_ref[:, bi, :]                # (tq, D) f32, kept for residual
        q_in = (tgt + qpos_ref[:, bi, :]).astype(bf16)      # with_pos_embed(tgt, query_pos)
        mem = mem_ref[:, bi, :]
        k_in = (mem + pos_ref[:, bi, :]).astype(bf16)       # with_pos_embed(memory, pos)
        v_in = mem.astype(bf16)                              # value = memory

        # in-projections (bf16 operands, f32 accumulation; q-scale pre-folded)
        q = jnp.dot(q_in, wq, preferred_element_type=f32) + bq
        k = jnp.dot(k_in, wk, preferred_element_type=f32) + bk
        v = jnp.dot(v_in, wv, preferred_element_type=f32) + bv

        # multi-head attention; per-head results accumulate straight into the
        # output projection via row-slices of wo (no lane concatenate).
        attn_out = bo_rows
        for h in range(nhead):
            lo = h * head_dim
            hi = lo + head_dim
            qh = q[:, lo:hi].astype(bf16)      # (tq, hd)
            kh = k[:, lo:hi].astype(bf16)      # (Lm, hd)
            vh = v[:, lo:hi].astype(bf16)      # (Lm, hd)
            s = jax.lax.dot_general(qh, kh, contract_last,
                                    preferred_element_type=f32)   # (tq, Lm)
            s = s - jnp.max(s, axis=-1, keepdims=True)
            p = jnp.exp(s)
            denom = jnp.sum(p, axis=-1, keepdims=True)            # (tq, 1)
            o_h = jnp.dot(p.astype(bf16), vh, preferred_element_type=f32)
            o_h = o_h * pl.reciprocal(denom, approx=True)         # EUP, not VALU
            attn_out = attn_out + jnp.dot(o_h.astype(bf16), wo[lo:hi, :],
                                          preferred_element_type=f32)

        # residual + LayerNorm2 (dropout2 = identity in eval mode)
        x = _layernorm(tgt + attn_out, g2, be2)

        # FFN: linear1 -> relu -> (dropout = identity) -> linear2
        h1 = jnp.dot(x.astype(bf16), w1, preferred_element_type=f32) + b1
        h1 = jnp.maximum(h1, 0.0)
        h2 = jnp.dot(h1.astype(bf16), w2, preferred_element_type=f32) + b2

        # residual + LayerNorm3 (dropout3 = identity in eval mode)
        y = _layernorm(x + h2, g3, be3)
        out_ref[:, bi, :] = y.astype(out_ref.dtype)


# -------------------------------- wrapper ------------------------------------
def _full_spec(shape):
    # whole-array block, same block for every grid step
    return pl.BlockSpec(shape, lambda i: (0,) * len(shape))


def _query_block(lt):
    """Query rows per grid step.

    v7x has two TensorCores per chip: split query rows across a parallel grid
    axis so both cores get work.  v5e / v6e are single-TC, so extra grid steps
    only add ~0.35us/step pipeline overhead -- run everything in one step.
    """
    try:
        kind = jax.devices()[0].device_kind.lower()
    except Exception:
        kind = ""
    if ("v7" in kind or "7x" in kind) and lt % 2 == 0:
        return lt // 2
    return lt


@jax.jit
def transformer_decoder_layer(tgt, memory, pos, query_pos, kp):
    """tgt / query_pos: (Lt, N, D); memory / pos: (Lm, N, D).
    Returns (Lt, N, D), same layout as the PyTorch module (no transposes)."""
    lt, n, d = tgt.shape
    lm = memory.shape[0]
    tq = _query_block(lt)

    weights = [
        kp["wq"], kp["bq"], kp["wk"], kp["bk"], kp["wv"], kp["bv"],
        kp["wo"], kp["bo"], kp["w1"], kp["b1"], kp["w2"], kp["b2"],
        kp["g2"], kp["be2"], kp["g3"], kp["be3"],
    ]

    in_specs = [
        pl.BlockSpec((tq, n, d), lambda i: (i, 0, 0)),   # tgt (query rows tiled)
        pl.BlockSpec((tq, n, d), lambda i: (i, 0, 0)),   # query_pos
        pl.BlockSpec((lm, n, d), lambda i: (0, 0, 0)),   # memory (full)
        pl.BlockSpec((lm, n, d), lambda i: (0, 0, 0)),   # pos (full)
    ] + [_full_spec(w.shape) for w in weights]

    kernel = functools.partial(
        decoder_layer_kernel, nbatch=n, nhead=NHEAD, head_dim=HEAD_DIM)

    return pl.pallas_call(
        kernel,
        out_shape=jax.ShapeDtypeStruct((lt, n, d), tgt.dtype),
        grid_spec=pltpu.PrefetchScalarGridSpec(
            num_scalar_prefetch=0,
            grid=(lt // tq,),
            in_specs=in_specs,
            out_specs=pl.BlockSpec((tq, n, d), lambda i: (i, 0, 0)),
        ),
        compiler_params=pltpu.CompilerParams(
            dimension_semantics=("parallel",)),
    )(tgt, query_pos, memory, pos, *weights)


# ------------------------- deterministic parameters --------------------------
def make_params(key):
    """Raw f32 parameters (PyTorch semantics; weights stored as (in, out))."""
    ks = jax.random.split(key, 16)
    s_attn = 1.0 / math.sqrt(D_MODEL)
    s_ff = 1.0 / math.sqrt(DIM_FF)
    f32 = jnp.float32
    return {
        "wq": jax.random.normal(ks[0], (D_MODEL, D_MODEL), f32) * s_attn,
        "wk": jax.random.normal(ks[1], (D_MODEL, D_MODEL), f32) * s_attn,
        "wv": jax.random.normal(ks[2], (D_MODEL, D_MODEL), f32) * s_attn,
        "wo": jax.random.normal(ks[3], (D_MODEL, D_MODEL), f32) * s_attn,
        "bq": jax.random.normal(ks[4], (1, D_MODEL), f32) * 0.02,
        "bk": jax.random.normal(ks[5], (1, D_MODEL), f32) * 0.02,
        "bv": jax.random.normal(ks[6], (1, D_MODEL), f32) * 0.02,
        "bo": jax.random.normal(ks[7], (1, D_MODEL), f32) * 0.02,
        "w1": jax.random.normal(ks[8], (D_MODEL, DIM_FF), f32) * s_attn,
        "b1": jax.random.normal(ks[9], (1, DIM_FF), f32) * 0.02,
        "w2": jax.random.normal(ks[10], (DIM_FF, D_MODEL), f32) * s_ff,
        "b2": jax.random.normal(ks[11], (1, D_MODEL), f32) * 0.02,
        "g2": 1.0 + jax.random.normal(ks[12], (1, D_MODEL), f32) * 0.05,
        "be2": jax.random.normal(ks[13], (1, D_MODEL), f32) * 0.02,
        "g3": 1.0 + jax.random.normal(ks[14], (1, D_MODEL), f32) * 0.05,
        "be3": jax.random.normal(ks[15], (1, D_MODEL), f32) * 0.02,
    }


def prepare_kernel_params(p):
    """One-time prep: fold 1/sqrt(head_dim) into wq/bq, cast matmul weights to
    bf16 (halves weight DMA / MXU passes).  Biases & LayerNorm params stay f32."""
    scale = 1.0 / math.sqrt(HEAD_DIM)
    bf16 = jnp.bfloat16
    return {
        "wq": (p["wq"] * scale).astype(bf16), "bq": p["bq"] * scale,
        "wk": p["wk"].astype(bf16), "bk": p["bk"],
        "wv": p["wv"].astype(bf16), "bv": p["bv"],
        "wo": p["wo"].astype(bf16), "bo": p["bo"],
        "w1": p["w1"].astype(bf16), "b1": p["b1"],
        "w2": p["w2"].astype(bf16), "b2": p["b2"],
        "g2": p["g2"], "be2": p["be2"], "g3": p["g3"], "be3": p["be3"],
    }


# --------------------------- pure-JAX references ------------------------------
def reference_f32(tgt, memory, pos, query_pos, p):
    """Full-precision reference of the PyTorch forward_post math."""
    t = jnp.transpose(tgt, (1, 0, 2))
    m = jnp.transpose(memory, (1, 0, 2))
    po = jnp.transpose(pos, (1, 0, 2))
    qp = jnp.transpose(query_pos, (1, 0, 2))
    q = (t + qp) @ p["wq"] + p["bq"]
    k = (m + po) @ p["wk"] + p["bk"]
    v = m @ p["wv"] + p["bv"]
    n, lt, d = q.shape
    lm = k.shape[1]
    qh = q.reshape(n, lt, NHEAD, HEAD_DIM).transpose(0, 2, 1, 3) / math.sqrt(HEAD_DIM)
    kh = k.reshape(n, lm, NHEAD, HEAD_DIM).transpose(0, 2, 1, 3)
    vh = v.reshape(n, lm, NHEAD, HEAD_DIM).transpose(0, 2, 1, 3)
    a = jax.nn.softmax(jnp.einsum("bhqd,bhkd->bhqk", qh, kh), axis=-1)
    o = jnp.einsum("bhqk,bhkd->bhqd", a, vh).transpose(0, 2, 1, 3).reshape(n, lt, d)
    o = o @ p["wo"] + p["bo"]
    x = _layernorm(t + o, p["g2"], p["be2"])
    h = jnp.maximum(x @ p["w1"] + p["b1"], 0.0)
    y = _layernorm(x + h @ p["w2"] + p["b2"], p["g3"], p["be3"])
    return jnp.transpose(y, (1, 0, 2))


def reference_mixed(tgt, memory, pos, query_pos, kp):
    """Pure-JAX mirror of the kernel's mixed-precision math (bf16 operands,
    f32 accumulation, folded q-scale).  Only intended difference from the
    kernel is the exact (vs. approx) softmax reciprocal."""
    bf16, f32 = jnp.bfloat16, jnp.float32
    dims = (((1,), (1,)), ((), ()))
    lt, n, d = tgt.shape
    outs = []
    for bi in range(n):
        t = tgt[:, bi, :]
        q = jnp.dot((t + query_pos[:, bi, :]).astype(bf16), kp["wq"],
                    preferred_element_type=f32) + kp["bq"]
        k = jnp.dot((memory[:, bi, :] + pos[:, bi, :]).astype(bf16), kp["wk"],
                    preferred_element_type=f32) + kp["bk"]
        v = jnp.dot(memory[:, bi, :].astype(bf16), kp["wv"],
                    preferred_element_type=f32) + kp["bv"]
        attn_out = jnp.broadcast_to(kp["bo"], (lt, d)).astype(f32)
        for h in range(NHEAD):
            lo, hi = h * HEAD_DIM, (h + 1) * HEAD_DIM
            qh = q[:, lo:hi].astype(bf16)
            kh = k[:, lo:hi].astype(bf16)
            vh = v[:, lo:hi].astype(bf16)
            s = jax.lax.dot_general(qh, kh, dims, preferred_element_type=f32)
            s = s - jnp.max(s, axis=-1, keepdims=True)
            p_ = jnp.exp(s)
            denom = jnp.sum(p_, axis=-1, keepdims=True)
            o_h = jnp.dot(p_.astype(bf16), vh, preferred_element_type=f32) / denom
            attn_out = attn_out + jnp.dot(o_h.astype(bf16), kp["wo"][lo:hi, :],
                                          preferred_element_type=f32)
        x = _layernorm(t + attn_out, kp["g2"], kp["be2"])
        h1 = jnp.maximum(jnp.dot(x.astype(bf16), kp["w1"],
                                 preferred_element_type=f32) + kp["b1"], 0.0)
        h2 = jnp.dot(h1.astype(bf16), kp["w2"],
                     preferred_element_type=f32) + kp["b2"]
        outs.append(_layernorm(x + h2, kp["g3"], kp["be3"]))
    return jnp.stack(outs, axis=1)


# ---------------------------------- main --------------------------------------
if __name__ == "__main__":
    key = jax.random.PRNGKey(0)
    k_tgt, k_mem, k_pos, k_qpos, k_par = jax.random.split(key, 5)

    tgt = jax.random.normal(k_tgt, (TGT_LEN, BATCH, D_MODEL), jnp.float32)
    memory = jax.random.normal(k_mem, (MEM_LEN, BATCH, D_MODEL), jnp.float32)
    pos = jax.random.normal(k_pos, (MEM_LEN, BATCH, D_MODEL), jnp.float32)
    query_pos = jax.random.normal(k_qpos, (TGT_LEN, BATCH, D_MODEL), jnp.float32)

    raw_params = make_params(k_par)
    kernel_params = prepare_kernel_params(raw_params)

    out = transformer_decoder_layer(tgt, memory, pos, query_pos, kernel_params)
    out = jax.block_until_ready(out)
    assert out.shape == (TGT_LEN, BATCH, D_MODEL)

    ref_mix = reference_mixed(tgt, memory, pos, query_pos, kernel_params)
    ref_full = reference_f32(tgt, memory, pos, query_pos, raw_params)

    err_mix = float(jnp.max(jnp.abs(out - ref_mix)))
    err_full = float(jnp.max(jnp.abs(out - ref_full)))
    assert jnp.allclose(out, ref_mix, rtol=2e-2, atol=2e-2), (
        f"mismatch vs matched-precision reference (max |err| = {err_mix:.3e})")
    assert jnp.allclose(out, ref_full, rtol=1e-1, atol=1e-1), (
        f"mismatch vs full-f32 reference (max |err| = {err_full:.3e})")

    print("KERNEL_OK")
</pallas_src>

<mosaic_0001>
module attributes {stable_mosaic.version = 11 : i64} {
  func.func @decoder_layer_kernel(%arg0: i32, %arg1: memref<8x2x32xf32, #tpu.memory_space<vmem>>, %arg2: memref<8x2x32xf32, #tpu.memory_space<vmem>>, %arg3: memref<16x2x32xf32, #tpu.memory_space<vmem>>, %arg4: memref<16x2x32xf32, #tpu.memory_space<vmem>>, %arg5: memref<32x32xbf16, #tpu.memory_space<vmem>>, %arg6: memref<1x32xf32, #tpu.memory_space<vmem>>, %arg7: memref<32x32xbf16, #tpu.memory_space<vmem>>, %arg8: memref<1x32xf32, #tpu.memory_space<vmem>>, %arg9: memref<32x32xbf16, #tpu.memory_space<vmem>>, %arg10: memref<1x32xf32, #tpu.memory_space<vmem>>, %arg11: memref<32x32xbf16, #tpu.memory_space<vmem>>, %arg12: memref<1x32xf32, #tpu.memory_space<vmem>>, %arg13: memref<32x64xbf16, #tpu.memory_space<vmem>>, %arg14: memref<1x64xf32, #tpu.memory_space<vmem>>, %arg15: memref<64x32xbf16, #tpu.memory_space<vmem>>, %arg16: memref<1x32xf32, #tpu.memory_space<vmem>>, %arg17: memref<1x32xf32, #tpu.memory_space<vmem>>, %arg18: memref<1x32xf32, #tpu.memory_space<vmem>>, %arg19: memref<1x32xf32, #tpu.memory_space<vmem>>, %arg20: memref<1x32xf32, #tpu.memory_space<vmem>>, %arg21: memref<8x2x32xf32, #tpu.memory_space<vmem>>) attributes {dimension_semantics = [#tpu.dimension_semantics<parallel>], iteration_bounds = array<i64: 1>, scalar_prefetch = 0 : i64, scratch_operands = 0 : i64, tpu.core_type = #tpu.core_type<tc>, window_params = [{transform_indices = @transform_0, window_bounds = array<i64: 8, 2, 32>}, {transform_indices = @transform_1, window_bounds = array<i64: 8, 2, 32>}, {pipeline_mode = #tpu.pipeline_mode<synchronous>, transform_indices = @transform_2, window_bounds = array<i64: 16, 2, 32>}, {pipeline_mode = #tpu.pipeline_mode<synchronous>, transform_indices = @transform_3, window_bounds = array<i64: 16, 2, 32>}, {pipeline_mode = #tpu.pipeline_mode<synchronous>, transform_indices = @transform_4, window_bounds = array<i64: 32, 32>}, {pipeline_mode = #tpu.pipeline_mode<synchronous>, transform_indices = @transform_5, window_bounds = array<i64: 1, 32>}, {pipeline_mode = #tpu.pipeline_mode<synchronous>, transform_indices = @transform_6, window_bounds = array<i64: 32, 32>}, {pipeline_mode = #tpu.pipeline_mode<synchronous>, transform_indices = @transform_7, window_bounds = array<i64: 1, 32>}, {pipeline_mode = #tpu.pipeline_mode<synchronous>, transform_indices = @transform_8, window_bounds = array<i64: 32, 32>}, {pipeline_mode = #tpu.pipeline_mode<synchronous>, transform_indices = @transform_9, window_bounds = array<i64: 1, 32>}, {pipeline_mode = #tpu.pipeline_mode<synchronous>, transform_indices = @transform_10, window_bounds = array<i64: 32, 32>}, {pipeline_mode = #tpu.pipeline_mode<synchronous>, transform_indices = @transform_11, window_bounds = array<i64: 1, 32>}, {pipeline_mode = #tpu.pipeline_mode<synchronous>, transform_indices = @transform_12, window_bounds = array<i64: 32, 64>}, {pipeline_mode = #tpu.pipeline_mode<synchronous>, transform_indices = @transform_13, window_bounds = array<i64: 1, 64>}, {pipeline_mode = #tpu.pipeline_mode<synchronous>, transform_indices = @transform_14, window_bounds = array<i64: 64, 32>}, {pipeline_mode = #tpu.pipeline_mode<synchronous>, transform_indices = @transform_15, window_bounds = array<i64: 1, 32>}, {pipeline_mode = #tpu.pipeline_mode<synchronous>, transform_indices = @transform_16, window_bounds = array<i64: 1, 32>}, {pipeline_mode = #tpu.pipeline_mode<synchronous>, transform_indices = @transform_17, window_bounds = array<i64: 1, 32>}, {pipeline_mode = #tpu.pipeline_mode<synchronous>, transform_indices = @transform_18, window_bounds = array<i64: 1, 32>}, {pipeline_mode = #tpu.pipeline_mode<synchronous>, transform_indices = @transform_19, window_bounds = array<i64: 1, 32>}, {transform_indices = @transform_20, window_bounds = array<i64: 8, 2, 32>}]} {
    %c0 = arith.constant 0 : index
    %c0_0 = arith.constant 0 : index
    %0 = vector.load %arg5[%c0, %c0_0] : memref<32x32xbf16, #tpu.memory_space<vmem>>, vector<32x32xbf16>
    %c0_1 = arith.constant 0 : index
    %c0_2 = arith.constant 0 : index
    %1 = vector.load %arg7[%c0_1, %c0_2] : memref<32x32xbf16, #tpu.memory_space<vmem>>, vector<32x32xbf16>
    %c0_3 = arith.constant 0 : index
    %c0_4 = arith.constant 0 : index
    %2 = vector.load %arg9[%c0_3, %c0_4] : memref<32x32xbf16, #tpu.memory_space<vmem>>, vector<32x32xbf16>
    %c0_5 = arith.constant 0 : index
    %c0_6 = arith.constant 0 : index
    %3 = vector.load %arg11[%c0_5, %c0_6] : memref<32x32xbf16, #tpu.memory_space<vmem>>, vector<32x32xbf16>
    %c0_7 = arith.constant 0 : index
    %c0_8 = arith.constant 0 : index
    %4 = vector.load %arg13[%c0_7, %c0_8] : memref<32x64xbf16, #tpu.memory_space<vmem>>, vector<32x64xbf16>
    %c0_9 = arith.constant 0 : index
    %c0_10 = arith.constant 0 : index
    %5 = vector.load %arg15[%c0_9, %c0_10] : memref<64x32xbf16, #tpu.memory_space<vmem>>, vector<64x32xbf16>
    %c0_11 = arith.constant 0 : index
    %c0_12 = arith.constant 0 : index
    %6 = vector.load %arg6[%c0_11, %c0_12] : memref<1x32xf32, #tpu.memory_space<vmem>>, vector<1x32xf32>
    %c0_13 = arith.constant 0 : index
    %c0_14 = arith.constant 0 : index
    %7 = vector.load %arg8[%c0_13, %c0_14] : memref<1x32xf32, #tpu.memory_space<vmem>>, vector<1x32xf32>
    %c0_15 = arith.constant 0 : index
    %c0_16 = arith.constant 0 : index
    %8 = vector.load %arg10[%c0_15, %c0_16] : memref<1x32xf32, #tpu.memory_space<vmem>>, vector<1x32xf32>
    %c0_17 = arith.constant 0 : index
    %c0_18 = arith.constant 0 : index
    %9 = vector.load %arg14[%c0_17, %c0_18] : memref<1x64xf32, #tpu.memory_space<vmem>>, vector<1x64xf32>
    %c0_19 = arith.constant 0 : index
    %c0_20 = arith.constant 0 : index
    %10 = vector.load %arg16[%c0_19, %c0_20] : memref<1x32xf32, #tpu.memory_space<vmem>>, vector<1x32xf32>
    %c0_21 = arith.constant 0 : index
    %c0_22 = arith.constant 0 : index
    %11 = vector.load %arg17[%c0_21, %c0_22] : memref<1x32xf32, #tpu.memory_space<vmem>>, vector<1x32xf32>
    %c0_23 = arith.constant 0 : index
    %c0_24 = arith.constant 0 : index
    %12 = vector.load %arg18[%c0_23, %c0_24] : memref<1x32xf32, #tpu.memory_space<vmem>>, vector<1x32xf32>
    %c0_25 = arith.constant 0 : index
    %c0_26 = arith.constant 0 : index
    %13 = vector.load %arg19[%c0_25, %c0_26] : memref<1x32xf32, #tpu.memory_space<vmem>>, vector<1x32xf32>
    %c0_27 = arith.constant 0 : index
    %c0_28 = arith.constant 0 : index
    %14 = vector.load %arg20[%c0_27, %c0_28] : memref<1x32xf32, #tpu.memory_space<vmem>>, vector<1x32xf32>
    %c0_29 = arith.constant 0 : index
    %c0_30 = arith.constant 0 : index
    %15 = vector.load %arg12[%c0_29, %c0_30] : memref<1x32xf32, #tpu.memory_space<vmem>>, vector<1x32xf32>
    %16 = vector.shape_cast %15 : vector<1x32xf32> to vector<1x32xf32>
    %17 = vector.broadcast %16 : vector<1x32xf32> to vector<8x32xf32>
    %c0_31 = arith.constant 0 : index
    %c0_32 = arith.constant 0 : index
    %c0_33 = arith.constant 0 : index
    %18 = vector.load %arg1[%c0_31, %c0_32, %c0_33] : memref<8x2x32xf32, #tpu.memory_space<vmem>>, vector<8x1x32xf32>
    %19 = vector.shape_cast %18 : vector<8x1x32xf32> to vector<8x32xf32>
    %c0_34 = arith.constant 0 : index
    %c0_35 = arith.constant 0 : index
    %c0_36 = arith.constant 0 : index
    %20 = vector.load %arg2[%c0_34, %c0_35, %c0_36] : memref<8x2x32xf32, #tpu.memory_space<vmem>>, vector<8x1x32xf32>
    %21 = vector.shape_cast %20 : vector<8x1x32xf32> to vector<8x32xf32>
    %22 = arith.addf %19, %21 : vector<8x32xf32>
    %23 = arith.truncf %22 : vector<8x32xf32> to vector<8x32xbf16>
    %c0_37 = arith.constant 0 : index
    %c0_38 = arith.constant 0 : index
    %c0_39 = arith.constant 0 : index
    %24 = vector.load %arg3[%c0_37, %c0_38, %c0_39] : memref<16x2x32xf32, #tpu.memory_space<vmem>>, vector<16x1x32xf32>
    %25 = vector.shape_cast %24 : vector<16x1x32xf32> to vector<16x32xf32>
    %c0_40 = arith.constant 0 : index
    %c0_41 = arith.constant 0 : index
    %c0_42 = arith.constant 0 : index
    %26 = vector.load %arg4[%c0_40, %c0_41, %c0_42] : memref<16x2x32xf32, #tpu.memory_space<vmem>>, vector<16x1x32xf32>
    %27 = vector.shape_cast %26 : vector<16x1x32xf32> to vector<16x32xf32>
    %28 = arith.addf %25, %27 : vector<16x32xf32>
    %29 = arith.truncf %28 : vector<16x32xf32> to vector<16x32xbf16>
    %30 = arith.truncf %25 : vector<16x32xf32> to vector<16x32xbf16>
    %cst = arith.constant dense<0.000000e+00> : vector<8x32xf32>
    %31 = tpu.matmul %23, %0, %cst {dimension_numbers = #tpu.dot_dimension_numbers<[1], [0], [0], [1], [0, 0, 1, 1], [], []>} : vector<8x32xbf16>, vector<32x32xbf16>, vector<8x32xf32> -> vector<8x32xf32>
    %32 = vector.broadcast %6 : vector<1x32xf32> to vector<8x32xf32>
    %33 = arith.addf %31, %32 : vector<8x32xf32>
    %cst_43 = arith.constant dense<0.000000e+00> : vector<16x32xf32>
    %34 = tpu.matmul %29, %1, %cst_43 {dimension_numbers = #tpu.dot_dimension_numbers<[1], [0], [0], [1], [0, 0, 1, 1], [], []>} : vector<16x32xbf16>, vector<32x32xbf16>, vector<16x32xf32> -> vector<16x32xf32>
    %35 = vector.broadcast %7 : vector<1x32xf32> to vector<16x32xf32>
    %36 = arith.addf %34, %35 : vector<16x32xf32>
    %cst_44 = arith.constant dense<0.000000e+00> : vector<16x32xf32>
    %37 = tpu.matmul %30, %2, %cst_44 {dimension_numbers = #tpu.dot_dimension_numbers<[1], [0], [0], [1], [0, 0, 1, 1], [], []>} : vector<16x32xbf16>, vector<32x32xbf16>, vector<16x32xf32> -> vector<16x32xf32>
    %38 = vector.broadcast %8 : vector<1x32xf32> to vector<16x32xf32>
    %39 = arith.addf %37, %38 : vector<16x32xf32>
    %40 = vector.extract_strided_slice %33 {offsets = [0, 0], sizes = [8, 8], strides = [1, 1]} : vector<8x32xf32> to vector<8x8xf32>
    %41 = arith.truncf %40 : vector<8x8xf32> to vector<8x8xbf16>
    %42 = vector.extract_strided_slice %36 {offsets = [0, 0], sizes = [16, 8], strides = [1, 1]} : vector<16x32xf32> to vector<16x8xf32>
    %43 = arith.truncf %42 : vector<16x8xf32> to vector<16x8xbf16>
    %44 = vector.extract_strided_slice %39 {offsets = [0, 0], sizes = [16, 8], strides = [1, 1]} : vector<16x32xf32> to vector<16x8xf32>
    %45 = arith.truncf %44 : vector<16x8xf32> to vector<16x8xbf16>
    %cst_45 = arith.constant dense<0.000000e+00> : vector<8x16xf32>
    %46 = tpu.matmul %41, %43, %cst_45 {dimension_numbers = #tpu.dot_dimension_numbers<[1], [1], [0], [0], [0, 0, 1, 0], [], []>} : vector<8x8xbf16>, vector<16x8xbf16>, vector<8x16xf32> -> vector<8x16xf32>
    %cst_46 = arith.constant dense<0xFF800000> : vector<8xf32>
    %47 = vector.multi_reduction <maximumf>, %46, %cst_46 [1] : vector<8x16xf32> to vector<8xf32>
    %48 = vector.shape_cast %47 : vector<8xf32> to vector<8x1xf32>
    %49 = vector.broadcast %48 : vector<8x1xf32> to vector<8x16xf32>
    %50 = arith.subf %46, %49 : vector<8x16xf32>
    %51 = math.exp %50 : vector<8x16xf32>
    %cst_47 = arith.constant dense<0.000000e+00> : vector<8xf32>
    %52 = vector.multi_reduction <add>, %51, %cst_47 [1] : vector<8x16xf32> to vector<8xf32>
    %53 = vector.shape_cast %52 : vector<8xf32> to vector<8x1xf32>
    %54 = arith.truncf %51 : vector<8x16xf32> to vector<8x16xbf16>
    %cst_48 = arith.constant dense<0.000000e+00> : vector<8x8xf32>
    %55 = tpu.matmul %54, %45, %cst_48 {dimension_numbers = #tpu.dot_dimension_numbers<[1], [0], [0], [1], [0, 0, 1, 1], [], []>} : vector<8x16xbf16>, vector<16x8xbf16>, vector<8x8xf32> -> vector<8x8xf32>
    %56 = tpu.reciprocal %53 {approx = true} : vector<8x1xf32> -> vector<8x1xf32>
    %57 = vector.broadcast %56 : vector<8x1xf32> to vector<8x8xf32>
    %58 = arith.mulf %55, %57 : vector<8x8xf32>
    %59 = arith.truncf %58 : vector<8x8xf32> to vector<8x8xbf16>
    %60 = vector.extract_strided_slice %3 {offsets = [0, 0], sizes = [8, 32], strides = [1, 1]} : vector<32x32xbf16> to vector<8x32xbf16>
    %cst_49 = arith.constant dense<0.000000e+00> : vector<8x32xf32>
    %61 = tpu.matmul %59, %60, %cst_49 {dimension_numbers = #tpu.dot_dimension_numbers<[1], [0], [0], [1], [0, 0, 1, 1], [], []>} : vector<8x8xbf16>, vector<8x32xbf16>, vector<8x32xf32> -> vector<8x32xf32>
    %62 = arith.addf %17, %61 : vector<8x32xf32>
    %63 = vector.extract_strided_slice %33 {offsets = [0, 8], sizes = [8, 8], strides = [1, 1]} : vector<8x32xf32> to vector<8x8xf32>
    %64 = arith.truncf %63 : vector<8x8xf32> to vector<8x8xbf16>
    %65 = vector.extract_strided_slice %36 {offsets = [0, 8], sizes = [16, 8], strides = [1, 1]} : vector<16x32xf32> to vector<16x8xf32>
    %66 = arith.truncf %65 : vector<16x8xf32> to vector<16x8xbf16>
    %67 = vector.extract_strided_slice %39 {offsets = [0, 8], sizes = [16, 8], strides = [1, 1]} : vector<16x32xf32> to vector<16x8xf32>
    %68 = arith.truncf %67 : vector<16x8xf32> to vector<16x8xbf16>
    %cst_50 = arith.constant dense<0.000000e+00> : vector<8x16xf32>
    %69 = tpu.matmul %64, %66, %cst_50 {dimension_numbers = #tpu.dot_dimension_numbers<[1], [1], [0], [0], [0, 0, 1, 0], [], []>} : vector<8x8xbf16>, vector<16x8xbf16>, vector<8x16xf32> -> vector<8x16xf32>
    %cst_51 = arith.constant dense<0xFF800000> : vector<8xf32>
    %70 = vector.multi_reduction <maximumf>, %69, %cst_51 [1] : vector<8x16xf32> to vector<8xf32>
    %71 = vector.shape_cast %70 : vector<8xf32> to vector<8x1xf32>
    %72 = vector.broadcast %71 : vector<8x1xf32> to vector<8x16xf32>
    %73 = arith.subf %69, %72 : vector<8x16xf32>
    %74 = math.exp %73 : vector<8x16xf32>
    %cst_52 = arith.constant dense<0.000000e+00> : vector<8xf32>
    %75 = vector.multi_reduction <add>, %74, %cst_52 [1] : vector<8x16xf32> to vector<8xf32>
    %76 = vector.shape_cast %75 : vector<8xf32> to vector<8x1xf32>
    %77 = arith.truncf %74 : vector<8x16xf32> to vector<8x16xbf16>
    %cst_53 = arith.constant dense<0.000000e+00> : vector<8x8xf32>
    %78 = tpu.matmul %77, %68, %cst_53 {dimension_numbers = #tpu.dot_dimension_numbers<[1], [0], [0], [1], [0, 0, 1, 1], [], []>} : vector<8x16xbf16>, vector<16x8xbf16>, vector<8x8xf32> -> vector<8x8xf32>
    %79 = tpu.reciprocal %76 {approx = true} : vector<8x1xf32> -> vector<8x1xf32>
    %80 = vector.broadcast %79 : vector<8x1xf32> to vector<8x8xf32>
    %81 = arith.mulf %78, %80 : vector<8x8xf32>
    %82 = arith.truncf %81 : vector<8x8xf32> to vector<8x8xbf16>
    %83 = vector.extract_strided_slice %3 {offsets = [8, 0], sizes = [8, 32], strides = [1, 1]} : vector<32x32xbf16> to vector<8x32xbf16>
    %cst_54 = arith.constant dense<0.000000e+00> : vector<8x32xf32>
    %84 = tpu.matmul %82, %83, %cst_54 {dimension_numbers = #tpu.dot_dimension_numbers<[1], [0], [0], [1], [0, 0, 1, 1], [], []>} : vector<8x8xbf16>, vector<8x32xbf16>, vector<8x32xf32> -> vector<8x32xf32>
    %85 = arith.addf %62, %84 : vector<8x32xf32>
    %86 = vector.extract_strided_slice %33 {offsets = [0, 16], sizes = [8, 8], strides = [1, 1]} : vector<8x32xf32> to vector<8x8xf32>
    %87 = arith.truncf %86 : vector<8x8xf32> to vector<8x8xbf16>
    %88 = vector.extract_strided_slice %36 {offsets = [0, 16], sizes = [16, 8], strides = [1, 1]} : vector<16x32xf32> to vector<16x8xf32>
    %89 = arith.truncf %88 : vector<16x8xf32> to vector<16x8xbf16>
    %90 = vector.extract_strided_slice %39 {offsets = [0, 16], sizes = [16, 8], strides = [1, 1]} : vector<16x32xf32> to vector<16x8xf32>
    %91 = arith.truncf %90 : vector<16x8xf32> to vector<16x8xbf16>
    %cst_55 = arith.constant dense<0.000000e+00> : vector<8x16xf32>
    %92 = tpu.matmul %87, %89, %cst_55 {dimension_numbers = #tpu.dot_dimension_numbers<[1], [1], [0], [0], [0, 0, 1, 0], [], []>} : vector<8x8xbf16>, vector<16x8xbf16>, vector<8x16xf32> -> vector<8x16xf32>
    %cst_56 = arith.constant dense<0xFF800000> : vector<8xf32>
    %93 = vector.multi_reduction <maximumf>, %92, %cst_56 [1] : vector<8x16xf32> to vector<8xf32>
    %94 = vector.shape_cast %93 : vector<8xf32> to vector<8x1xf32>
    %95 = vector.broadcast %94 : vector<8x1xf32> to vector<8x16xf32>
    %96 = arith.subf %92, %95 : vector<8x16xf32>
    %97 = math.exp %96 : vector<8x16xf32>
    %cst_57 = arith.constant dense<0.000000e+00> : vector<8xf32>
    %98 = vector.multi_reduction <add>, %97, %cst_57 [1] : vector<8x16xf32> to vector<8xf32>
    %99 = vector.shape_cast %98 : vector<8xf32> to vector<8x1xf32>
    %100 = arith.truncf %97 : vector<8x16xf32> to vector<8x16xbf16>
    %cst_58 = arith.constant dense<0.000000e+00> : vector<8x8xf32>
    %101 = tpu.matmul %100, %91, %cst_58 {dimension_numbers = #tpu.dot_dimension_numbers<[1], [0], [0], [1], [0, 0, 1, 1], [], []>} : vector<8x16xbf16>, vector<16x8xbf16>, vector<8x8xf32> -> vector<8x8xf32>
    %102 = tpu.reciprocal %99 {approx = true} : vector<8x1xf32> -> vector<8x1xf32>
    %103 = vector.broadcast %102 : vector<8x1xf32> to vector<8x8xf32>
    %104 = arith.mulf %101, %103 : vector<8x8xf32>
    %105 = arith.truncf %104 : vector<8x8xf32> to vector<8x8xbf16>
    %106 = vector.extract_strided_slice %3 {offsets = [16, 0], sizes = [8, 32], strides = [1, 1]} : vector<32x32xbf16> to vector<8x32xbf16>
    %cst_59 = arith.constant dense<0.000000e+00> : vector<8x32xf32>
    %107 = tpu.matmul %105, %106, %cst_59 {dimension_numbers = #tpu.dot_dimension_numbers<[1], [0], [0], [1], [0, 0, 1, 1], [], []>} : vector<8x8xbf16>, vector<8x32xbf16>, vector<8x32xf32> -> vector<8x32xf32>
    %108 = arith.addf %85, %107 : vector<8x32xf32>
    %109 = vector.extract_strided_slice %33 {offsets = [0, 24], sizes = [8, 8], strides = [1, 1]} : vector<8x32xf32> to vector<8x8xf32>
    %110 = arith.truncf %109 : vector<8x8xf32> to vector<8x8xbf16>
    %111 = vector.extract_strided_slice %36 {offsets = [0, 24], sizes = [16, 8], strides = [1, 1]} : vector<16x32xf32> to vector<16x8xf32>
    %112 = arith.truncf %111 : vector<16x8xf32> to vector<16x8xbf16>
    %113 = vector.extract_strided_slice %39 {offsets = [0, 24], sizes = [16, 8], strides = [1, 1]} : vector<16x32xf32> to vector<16x8xf32>
    %114 = arith.truncf %113 : vector<16x8xf32> to vector<16x8xbf16>
    %cst_60 = arith.constant dense<0.000000e+00> : vector<8x16xf32>
    %115 = tpu.matmul %110, %112, %cst_60 {dimension_numbers = #tpu.dot_dimension_numbers<[1], [1], [0], [0], [0, 0, 1, 0], [], []>} : vector<8x8xbf16>, vector<16x8xbf16>, vector<8x16xf32> -> vector<8x16xf32>
    %cst_61 = arith.constant dense<0xFF800000> : vector<8xf32>
    %116 = vector.multi_reduction <maximumf>, %115, %cst_61 [1] : vector<8x16xf32> to vector<8xf32>
    %117 = vector.shape_cast %116 : vector<8xf32> to vector<8x1xf32>
    %118 = vector.broadcast %117 : vector<8x1xf32> to vector<8x16xf32>
    %119 = arith.subf %115, %118 : vector<8x16xf32>
    %120 = math.exp %119 : vector<8x16xf32>
    %cst_62 = arith.constant dense<0.000000e+00> : vector<8xf32>
    %121 = vector.multi_reduction <add>, %120, %cst_62 [1] : vector<8x16xf32> to vector<8xf32>
    %122 = vector.shape_cast %121 : vector<8xf32> to vector<8x1xf32>
    %123 = arith.truncf %120 : vector<8x16xf32> to vector<8x16xbf16>
    %cst_63 = arith.constant dense<0.000000e+00> : vector<8x8xf32>
    %124 = tpu.matmul %123, %114, %cst_63 {dimension_numbers = #tpu.dot_dimension_numbers<[1], [0], [0], [1], [0, 0, 1, 1], [], []>} : vector<8x16xbf16>, vector<16x8xbf16>, vector<8x8xf32> -> vector<8x8xf32>
    %125 = tpu.reciprocal %122 {approx = true} : vector<8x1xf32> -> vector<8x1xf32>
    %126 = vector.broadcast %125 : vector<8x1xf32> to vector<8x8xf32>
    %127 = arith.mulf %124, %126 : vector<8x8xf32>
    %128 = arith.truncf %127 : vector<8x8xf32> to vector<8x8xbf16>
    %129 = vector.extract_strided_slice %3 {offsets = [24, 0], sizes = [8, 32], strides = [1, 1]} : vector<32x32xbf16> to vector<8x32xbf16>
    %cst_64 = arith.constant dense<0.000000e+00> : vector<8x32xf32>
    %130 = tpu.matmul %128, %129, %cst_64 {dimension_numbers = #tpu.dot_dimension_numbers<[1], [0], [0], [1], [0, 0, 1, 1], [], []>} : vector<8x8xbf16>, vector<8x32xbf16>, vector<8x32xf32> -> vector<8x32xf32>
    %131 = arith.addf %108, %130 : vector<8x32xf32>
    %132 = arith.addf %19, %131 : vector<8x32xf32>
    %cst_65 = arith.constant dense<0.000000e+00> : vector<8xf32>
    %133 = vector.multi_reduction <add>, %132, %cst_65 [1] : vector<8x32xf32> to vector<8xf32>
    %134 = vector.shape_cast %133 : vector<8xf32> to vector<8x1xf32>
    %cst_66 = arith.constant 3.200000e+01 : f32
    %135 = vector.broadcast %cst_66 : f32 to vector<8x1xf32>
    %136 = arith.divf %134, %135 : vector<8x1xf32>
    %137 = vector.broadcast %136 : vector<8x1xf32> to vector<8x32xf32>
    %138 = arith.subf %132, %137 : vector<8x32xf32>
    %139 = arith.mulf %138, %138 : vector<8x32xf32>
    %cst_67 = arith.constant dense<0.000000e+00> : vector<8xf32>
    %140 = vector.multi_reduction <add>, %139, %cst_67 [1] : vector<8x32xf32> to vector<8xf32>
    %141 = vector.shape_cast %140 : vector<8xf32> to vector<8x1xf32>
    %cst_68 = arith.constant 3.200000e+01 : f32
    %142 = vector.broadcast %cst_68 : f32 to vector<8x1xf32>
    %143 = arith.divf %141, %142 : vector<8x1xf32>
    %cst_69 = arith.constant 9.99999974E-6 : f32
    %144 = vector.broadcast %cst_69 : f32 to vector<8x1xf32>
    %145 = arith.addf %143, %144 : vector<8x1xf32>
    %146 = math.rsqrt %145 : vector<8x1xf32>
    %147 = vector.broadcast %136 : vector<8x1xf32> to vector<8x32xf32>
    %148 = arith.subf %132, %147 : vector<8x32xf32>
    %149 = vector.broadcast %146 : vector<8x1xf32> to vector<8x32xf32>
    %150 = arith.mulf %148, %149 : vector<8x32xf32>
    %151 = vector.broadcast %11 : vector<1x32xf32> to vector<8x32xf32>
    %152 = arith.mulf %150, %151 : vector<8x32xf32>
    %153 = vector.broadcast %12 : vector<1x32xf32> to vector<8x32xf32>
    %154 = arith.addf %152, %153 : vector<8x32xf32>
    %155 = arith.truncf %154 : vector<8x32xf32> to vector<8x32xbf16>
    %cst_70 = arith.constant dense<0.000000e+00> : vector<8x64xf32>
    %156 = tpu.matmul %155, %4, %cst_70 {dimension_numbers = #tpu.dot_dimension_numbers<[1], [0], [0], [1], [0, 0, 1, 1], [], []>} : vector<8x32xbf16>, vector<32x64xbf16>, vector<8x64xf32> -> vector<8x64xf32>
    %157 = vector.broadcast %9 : vector<1x64xf32> to vector<8x64xf32>
    %158 = arith.addf %156, %157 : vector<8x64xf32>
    %cst_71 = arith.constant 0.000000e+00 : f32
    %159 = vector.broadcast %cst_71 : f32 to vector<8x64xf32>
    %160 = arith.maximumf %158, %159 : vector<8x64xf32>
    %161 = arith.truncf %160 : vector<8x64xf32> to vector<8x64xbf16>
    %cst_72 = arith.constant dense<0.000000e+00> : vector<8x32xf32>
    %162 = tpu.matmul %161, %5, %cst_72 {dimension_numbers = #tpu.dot_dimension_numbers<[1], [0], [0], [1], [0, 0, 1, 1], [], []>} : vector<8x64xbf16>, vector<64x32xbf16>, vector<8x32xf32> -> vector<8x32xf32>
    %163 = vector.broadcast %10 : vector<1x32xf32> to vector<8x32xf32>
    %164 = arith.addf %162, %163 : vector<8x32xf32>
    %165 = arith.addf %154, %164 : vector<8x32xf32>
    %cst_73 = arith.constant dense<0.000000e+00> : vector<8xf32>
    %166 = vector.multi_reduction <add>, %165, %cst_73 [1] : vector<8x32xf32> to vector<8xf32>
    %167 = vector.shape_cast %166 : vector<8xf32> to vector<8x1xf32>
    %cst_74 = arith.constant 3.200000e+01 : f32
    %168 = vector.broadcast %cst_74 : f32 to vector<8x1xf32>
    %169 = arith.divf %167, %168 : vector<8x1xf32>
    %170 = vector.broadcast %169 : vector<8x1xf32> to vector<8x32xf32>
    %171 = arith.subf %165, %170 : vector<8x32xf32>
    %172 = arith.mulf %171, %171 : vector<8x32xf32>
    %cst_75 = arith.constant dense<0.000000e+00> : vector<8xf32>
    %173 = vector.multi_reduction <add>, %172, %cst_75 [1] : vector<8x32xf32> to vector<8xf32>
    %174 = vector.shape_cast %173 : vector<8xf32> to vector<8x1xf32>
    %cst_76 = arith.constant 3.200000e+01 : f32
    %175 = vector.broadcast %cst_76 : f32 to vector<8x1xf32>
    %176 = arith.divf %174, %175 : vector<8x1xf32>
    %cst_77 = arith.constant 9.99999974E-6 : f32
    %177 = vector.broadcast %cst_77 : f32 to vector<8x1xf32>
    %178 = arith.addf %176, %177 : vector<8x1xf32>
    %179 = math.rsqrt %178 : vector<8x1xf32>
    %180 = vector.broadcast %169 : vector<8x1xf32> to vector<8x32xf32>
    %181 = arith.subf %165, %180 : vector<8x32xf32>
    %182 = vector.broadcast %179 : vector<8x1xf32> to vector<8x32xf32>
    %183 = arith.mulf %181, %182 : vector<8x32xf32>
    %184 = vector.broadcast %13 : vector<1x32xf32> to vector<8x32xf32>
    %185 = arith.mulf %183, %184 : vector<8x32xf32>
    %186 = vector.broadcast %14 : vector<1x32xf32> to vector<8x32xf32>
    %187 = arith.addf %185, %186 : vector<8x32xf32>
    %c0_78 = arith.constant 0 : index
    %c0_79 = arith.constant 0 : index
    %c0_80 = arith.constant 0 : index
    %188 = vector.load %arg21[%c0_78, %c0_79, %c0_80] : memref<8x2x32xf32, #tpu.memory_space<vmem>>, vector<8x1x32xf32>
    %189 = vector.shape_cast %188 : vector<8x1x32xf32> to vector<8x32xf32>
    %190 = vector.shape_cast %187 : vector<8x32xf32> to vector<8x1x32xf32>
    tpu.vector_store %arg21[%c0_78, %c0_79, %c0_80], %190 {strides = array<i32>} : memref<8x2x32xf32, #tpu.memory_space<vmem>>, vector<8x1x32xf32>,
    %c0_81 = arith.constant 0 : index
    %c1 = arith.constant 1 : index
    %c0_82 = arith.constant 0 : index
    %191 = vector.load %arg1[%c0_81, %c1, %c0_82] : memref<8x2x32xf32, #tpu.memory_space<vmem>>, vector<8x1x32xf32>
    %192 = vector.shape_cast %191 : vector<8x1x32xf32> to vector<8x32xf32>
    %c0_83 = arith.constant 0 : index
    %c1_84 = arith.constant 1 : index
    %c0_85 = arith.constant 0 : index
    %193 = vector.load %arg2[%c0_83, %c1_84, %c0_85] : memref<8x2x32xf32, #tpu.memory_space<vmem>>, vector<8x1x32xf32>
    %194 = vector.shape_cast %193 : vector<8x1x32xf32> to vector<8x32xf32>
    %195 = arith.addf %192, %194 : vector<8x32xf32>
    %196 = arith.truncf %195 : vector<8x32xf32> to vector<8x32xbf16>
    %c0_86 = arith.constant 0 : index
    %c1_87 = arith.constant 1 : index
    %c0_88 = arith.constant 0 : index
    %197 = vector.load %arg3[%c0_86, %c1_87, %c0_88] : memref<16x2x32xf32, #tpu.memory_space<vmem>>, vector<16x1x32xf32>
    %198 = vector.shape_cast %197 : vector<16x1x32xf32> to vector<16x32xf32>
    %c0_89 = arith.constant 0 : index
    %c1_90 = arith.constant 1 : index
    %c0_91 = arith.constant 0 : index
    %199 = vector.load %arg4[%c0_89, %c1_90, %c0_91] : memref<16x2x32xf32, #tpu.memory_space<vmem>>, vector<16x1x32xf32>
    %200 = vector.shape_cast %199 : vector<16x1x32xf32> to vector<16x32xf32>
    %201 = arith.addf %198, %200 : vector<16x32xf32>
    %202 = arith.truncf %201 : vector<16x32xf32> to vector<16x32xbf16>
    %203 = arith.truncf %198 : vector<16x32xf32> to vector<16x32xbf16>
    %cst_92 = arith.constant dense<0.000000e+00> : vector<8x32xf32>
    %204 = tpu.matmul %196, %0, %cst_92 {dimension_numbers = #tpu.dot_dimension_numbers<[1], [0], [0], [1], [0, 0, 1, 1], [], []>} : vector<8x32xbf16>, vector<32x32xbf16>, vector<8x32xf32> -> vector<8x32xf32>
    %205 = vector.broadcast %6 : vector<1x32xf32> to vector<8x32xf32>
    %206 = arith.addf %204, %205 : vector<8x32xf32>
    %cst_93 = arith.constant dense<0.000000e+00> : vector<16x32xf32>
    %207 = tpu.matmul %202, %1, %cst_93 {dimension_numbers = #tpu.dot_dimension_numbers<[1], [0], [0], [1], [0, 0, 1, 1], [], []>} : vector<16x32xbf16>, vector<32x32xbf16>, vector<16x32xf32> -> vector<16x32xf32>
    %208 = vector.broadcast %7 : vector<1x32xf32> to vector<16x32xf32>
    %209 = arith.addf %207, %208 : vector<16x32xf32>
    %cst_94 = arith.constant dense<0.000000e+00> : vector<16x32xf32>
    %210 = tpu.matmul %203, %2, %cst_94 {dimension_numbers = #tpu.dot_dimension_numbers<[1], [0], [0], [1], [0, 0, 1, 1], [], []>} : vector<16x32xbf16>, vector<32x32xbf16>, vector<16x32xf32> -> vector<16x32xf32>
    %211 = vector.broadcast %8 : vector<1x32xf32> to vector<16x32xf32>
    %212 = arith.addf %210, %211 : vector<16x32xf32>
    %213 = vector.extract_strided_slice %206 {offsets = [0, 0], sizes = [8, 8], strides = [1, 1]} : vector<8x32xf32> to vector<8x8xf32>
    %214 = arith.truncf %213 : vector<8x8xf32> to vector<8x8xbf16>
    %215 = vector.extract_strided_slice %209 {offsets = [0, 0], sizes = [16, 8], strides = [1, 1]} : vector<16x32xf32> to vector<16x8xf32>
    %216 = arith.truncf %215 : vector<16x8xf32> to vector<16x8xbf16>
    %217 = vector.extract_strided_slice %212 {offsets = [0, 0], sizes = [16, 8], strides = [1, 1]} : vector<16x32xf32> to vector<16x8xf32>
    %218 = arith.truncf %217 : vector<16x8xf32> to vector<16x8xbf16>
    %cst_95 = arith.constant dense<0.000000e+00> : vector<8x16xf32>
    %219 = tpu.matmul %214, %216, %cst_95 {dimension_numbers = #tpu.dot_dimension_numbers<[1], [1], [0], [0], [0, 0, 1, 0], [], []>} : vector<8x8xbf16>, vector<16x8xbf16>, vector<8x16xf32> -> vector<8x16xf32>
    %cst_96 = arith.constant dense<0xFF800000> : vector<8xf32>
    %220 = vector.multi_reduction <maximumf>, %219, %cst_96 [1] : vector<8x16xf32> to vector<8xf32>
    %221 = vector.shape_cast %220 : vector<8xf32> to vector<8x1xf32>
    %222 = vector.broadcast %221 : vector<8x1xf32> to vector<8x16xf32>
    %223 = arith.subf %219, %222 : vector<8x16xf32>
    %224 = math.exp %223 : vector<8x16xf32>
    %cst_97 = arith.constant dense<0.000000e+00> : vector<8xf32>
    %225 = vector.multi_reduction <add>, %224, %cst_97 [1] : vector<8x16xf32> to vector<8xf32>
    %226 = vector.shape_cast %225 : vector<8xf32> to vector<8x1xf32>
    %227 = arith.truncf %224 : vector<8x16xf32> to vector<8x16xbf16>
    %cst_98 = arith.constant dense<0.000000e+00> : vector<8x8xf32>
    %228 = tpu.matmul %227, %218, %cst_98 {dimension_numbers = #tpu.dot_dimension_numbers<[1], [0], [0], [1], [0, 0, 1, 1], [], []>} : vector<8x16xbf16>, vector<16x8xbf16>, vector<8x8xf32> -> vector<8x8xf32>
    %229 = tpu.reciprocal %226 {approx = true} : vector<8x1xf32> -> vector<8x1xf32>
    %230 = vector.broadcast %229 : vector<8x1xf32> to vector<8x8xf32>
    %231 = arith.mulf %228, %230 : vector<8x8xf32>
    %232 = arith.truncf %231 : vector<8x8xf32> to vector<8x8xbf16>
    %233 = vector.extract_strided_slice %3 {offsets = [0, 0], sizes = [8, 32], strides = [1, 1]} : vector<32x32xbf16> to vector<8x32xbf16>
    %cst_99 = arith.constant dense<0.000000e+00> : vector<8x32xf32>
    %234 = tpu.matmul %232, %233, %cst_99 {dimension_numbers = #tpu.dot_dimension_numbers<[1], [0], [0], [1], [0, 0, 1, 1], [], []>} : vector<8x8xbf16>, vector<8x32xbf16>, vector<8x32xf32> -> vector<8x32xf32>
    %235 = arith.addf %17, %234 : vector<8x32xf32>
    %236 = vector.extract_strided_slice %206 {offsets = [0, 8], sizes = [8, 8], strides = [1, 1]} : vector<8x32xf32> to vector<8x8xf32>
    %237 = arith.truncf %236 : vector<8x8xf32> to vector<8x8xbf16>
    %238 = vector.extract_strided_slice %209 {offsets = [0, 8], sizes = [16, 8], strides = [1, 1]} : vector<16x32xf32> to vector<16x8xf32>
    %239 = arith.truncf %238 : vector<16x8xf32> to vector<16x8xbf16>
    %240 = vector.extract_strided_slice %212 {offsets = [0, 8], sizes = [16, 8], strides = [1, 1]} : vector<16x32xf32> to vector<16x8xf32>
    %241 = arith.truncf %240 : vector<16x8xf32> to vector<16x8xbf16>
    %cst_100 = arith.constant dense<0.000000e+00> : vector<8x16xf32>
    %242 = tpu.matmul %237, %239, %cst_100 {dimension_numbers = #tpu.dot_dimension_numbers<[1], [1], [0], [0], [0, 0, 1, 0], [], []>} : vector<8x8xbf16>, vector<16x8xbf16>, vector<8x16xf32> -> vector<8x16xf32>
    %cst_101 = arith.constant dense<0xFF800000> : vector<8xf32>
    %243 = vector.multi_reduction <maximumf>, %242, %cst_101 [1] : vector<8x16xf32> to vector<8xf32>
    %244 = vector.shape_cast %243 : vector<8xf32> to vector<8x1xf32>
    %245 = vector.broadcast %244 : vector<8x1xf32> to vector<8x16xf32>
    %246 = arith.subf %242, %245 : vector<8x16xf32>
    %247 = math.exp %246 : vector<8x16xf32>
    %cst_102 = arith.constant dense<0.000000e+00> : vector<8xf32>
    %248 = vector.multi_reduction <add>, %247, %cst_102 [1] : vector<8x16xf32> to vector<8xf32>
    %249 = vector.shape_cast %248 : vector<8xf32> to vector<8x1xf32>
    %250 = arith.truncf %247 : vector<8x16xf32> to vector<8x16xbf16>
    %cst_103 = arith.constant dense<0.000000e+00> : vector<8x8xf32>
    %251 = tpu.matmul %250, %241, %cst_103 {dimension_numbers = #tpu.dot_dimension_numbers<[1], [0], [0], [1], [0, 0, 1, 1], [], []>} : vector<8x16xbf16>, vector<16x8xbf16>, vector<8x8xf32> -> vector<8x8xf32>
    %252 = tpu.reciprocal %249 {approx = true} : vector<8x1xf32> -> vector<8x1xf32>
    %253 = vector.broadcast %252 : vector<8x1xf32> to vector<8x8xf32>
    %254 = arith.mulf %251, %253 : vector<8x8xf32>
    %255 = arith.truncf %254 : vector<8x8xf32> to vector<8x8xbf16>
    %256 = vector.extract_strided_slice %3 {offsets = [8, 0], sizes = [8, 32], strides = [1, 1]} : vector<32x32xbf16> to vector<8x32xbf16>
    %cst_104 = arith.constant dense<0.000000e+00> : vector<8x32xf32>
    %257 = tpu.matmul %255, %256, %cst_104 {dimension_numbers = #tpu.dot_dimension_numbers<[1], [0], [0], [1], [0, 0, 1, 1], [], []>} : vector<8x8xbf16>, vector<8x32xbf16>, vector<8x32xf32> -> vector<8x32xf32>
    %258 = arith.addf %235, %257 : vector<8x32xf32>
    %259 = vector.extract_strided_slice %206 {offsets = [0, 16], sizes = [8, 8], strides = [1, 1]} : vector<8x32xf32> to vector<8x8xf32>
    %260 = arith.truncf %259 : vector<8x8xf32> to vector<8x8xbf16>
    %261 = vector.extract_strided_slice %209 {offsets = [0, 16], sizes = [16, 8], strides = [1, 1]} : vector<16x32xf32> to vector<16x8xf32>
    %262 = arith.truncf %261 : vector<16x8xf32> to vector<16x8xbf16>
    %263 = vector.extract_strided_slice %212 {offsets = [0, 16], sizes = [16, 8], strides = [1, 1]} : vector<16x32xf32> to vector<16x8xf32>
    %264 = arith.truncf %263 : vector<16x8xf32> to vector<16x8xbf16>
    %cst_105 = arith.constant dense<0.000000e+00> : vector<8x16xf32>
    %265 = tpu.matmul %260, %262, %cst_105 {dimension_numbers = #tpu.dot_dimension_numbers<[1], [1], [0], [0], [0, 0, 1, 0], [], []>} : vector<8x8xbf16>, vector<16x8xbf16>, vector<8x16xf32> -> vector<8x16xf32>
    %cst_106 = arith.constant dense<0xFF800000> : vector<8xf32>
    %266 = vector.multi_reduction <maximumf>, %265, %cst_106 [1] : vector<8x16xf32> to vector<8xf32>
    %267 = vector.shape_cast %266 : vector<8xf32> to vector<8x1xf32>
    %268 = vector.broadcast %267 : vector<8x1xf32> to vector<8x16xf32>
    %269 = arith.subf %265, %268 : vector<8x16xf32>
    %270 = math.exp %269 : vector<8x16xf32>
    %cst_107 = arith.constant dense<0.000000e+00> : vector<8xf32>
    %271 = vector.multi_reduction <add>, %270, %cst_107 [1] : vector<8x16xf32> to vector<8xf32>
    %272 = vector.shape_cast %271 : vector<8xf32> to vector<8x1xf32>
    %273 = arith.truncf %270 : vector<8x16xf32> to vector<8x16xbf16>
    %cst_108 = arith.constant dense<0.000000e+00> : vector<8x8xf32>
    %274 = tpu.matmul %273, %264, %cst_108 {dimension_numbers = #tpu.dot_dimension_numbers<[1], [0], [0], [1], [0, 0, 1, 1], [], []>} : vector<8x16xbf16>, vector<16x8xbf16>, vector<8x8xf32> -> vector<8x8xf32>
    %275 = tpu.reciprocal %272 {approx = true} : vector<8x1xf32> -> vector<8x1xf32>
    %276 = vector.broadcast %275 : vector<8x1xf32> to vector<8x8xf32>
    %277 = arith.mulf %274, %276 : vector<8x8xf32>
    %278 = arith.truncf %277 : vector<8x8xf32> to vector<8x8xbf16>
    %279 = vector.extract_strided_slice %3 {offsets = [16, 0], sizes = [8, 32], strides = [1, 1]} : vector<32x32xbf16> to vector<8x32xbf16>
    %cst_109 = arith.constant dense<0.000000e+00> : vector<8x32xf32>
    %280 = tpu.matmul %278, %279, %cst_109 {dimension_numbers = #tpu.dot_dimension_numbers<[1], [0], [0], [1], [0, 0, 1, 1], [], []>} : vector<8x8xbf16>, vector<8x32xbf16>, vector<8x32xf32> -> vector<8x32xf32>
    %281 = arith.addf %258, %280 : vector<8x32xf32>
    %282 = vector.extract_strided_slice %206 {offsets = [0, 24], sizes = [8, 8], strides = [1, 1]} : vector<8x32xf32> to vector<8x8xf32>
    %283 = arith.truncf %282 : vector<8x8xf32> to vector<8x8xbf16>
    %284 = vector.extract_strided_slice %209 {offsets = [0, 24], sizes = [16, 8], strides = [1, 1]} : vector<16x32xf32> to vector<16x8xf32>
    %285 = arith.truncf %284 : vector<16x8xf32> to vector<16x8xbf16>
    %286 = vector.extract_strided_slice %212 {offsets = [0, 24], sizes = [16, 8], strides = [1, 1]} : vector<16x32xf32> to vector<16x8xf32>
    %287 = arith.truncf %286 : vector<16x8xf32> to vector<16x8xbf16>
    %cst_110 = arith.constant dense<0.000000e+00> : vector<8x16xf32>
    %288 = tpu.matmul %283, %285, %cst_110 {dimension_numbers = #tpu.dot_dimension_numbers<[1], [1], [0], [0], [0, 0, 1, 0], [], []>} : vector<8x8xbf16>, vector<16x8xbf16>, vector<8x16xf32> -> vector<8x16xf32>
    %cst_111 = arith.constant dense<0xFF800000> : vector<8xf32>
    %289 = vector.multi_reduction <maximumf>, %288, %cst_111 [1] : vector<8x16xf32> to vector<8xf32>
    %290 = vector.shape_cast %289 : vector<8xf32> to vector<8x1xf32>
    %291 = vector.broadcast %290 : vector<8x1xf32> to vector<8x16xf32>
    %292 = arith.subf %288, %291 : vector<8x16xf32>
    %293 = math.exp %292 : vector<8x16xf32>
    %cst_112 = arith.constant dense<0.000000e+00> : vector<8xf32>
    %294 = vector.multi_reduction <add>, %293, %cst_112 [1] : vector<8x16xf32> to vector<8xf32>
    %295 = vector.shape_cast %294 : vector<8xf32> to vector<8x1xf32>
    %296 = arith.truncf %293 : vector<8x16xf32> to vector<8x16xbf16>
    %cst_113 = arith.constant dense<0.000000e+00> : vector<8x8xf32>
    %297 = tpu.matmul %296, %287, %cst_113 {dimension_numbers = #tpu.dot_dimension_numbers<[1], [0], [0], [1], [0, 0, 1, 1], [], []>} : vector<8x16xbf16>, vector<16x8xbf16>, vector<8x8xf32> -> vector<8x8xf32>
    %298 = tpu.reciprocal %295 {approx = true} : vector<8x1xf32> -> vector<8x1xf32>
    %299 = vector.broadcast %298 : vector<8x1xf32> to vector<8x8xf32>
    %300 = arith.mulf %297, %299 : vector<8x8xf32>
    %301 = arith.truncf %300 : vector<8x8xf32> to vector<8x8xbf16>
    %302 = vector.extract_strided_slice %3 {offsets = [24, 0], sizes = [8, 32], strides = [1, 1]} : vector<32x32xbf16> to vector<8x32xbf16>
    %cst_114 = arith.constant dense<0.000000e+00> : vector<8x32xf32>
    %303 = tpu.matmul %301, %302, %cst_114 {dimension_numbers = #tpu.dot_dimension_numbers<[1], [0], [0], [1], [0, 0, 1, 1], [], []>} : vector<8x8xbf16>, vector<8x32xbf16>, vector<8x32xf32> -> vector<8x32xf32>
    %304 = arith.addf %281, %303 : vector<8x32xf32>
    %305 = arith.addf %192, %304 : vector<8x32xf32>
    %cst_115 = arith.constant dense<0.000000e+00> : vector<8xf32>
    %306 = vector.multi_reduction <add>, %305, %cst_115 [1] : vector<8x32xf32> to vector<8xf32>
    %307 = vector.shape_cast %306 : vector<8xf32> to vector<8x1xf32>
    %cst_116 = arith.constant 3.200000e+01 : f32
    %308 = vector.broadcast %cst_116 : f32 to vector<8x1xf32>
    %309 = arith.divf %307, %308 : vector<8x1xf32>
    %310 = vector.broadcast %309 : vector<8x1xf32> to vector<8x32xf32>
    %311 = arith.subf %305, %310 : vector<8x32xf32>
    %312 = arith.mulf %311, %311 : vector<8x32xf32>
    %cst_117 = arith.constant dense<0.000000e+00> : vector<8xf32>
    %313 = vector.multi_reduction <add>, %312, %cst_117 [1] : vector<8x32xf32> to vector<8xf32>
    %314 = vector.shape_cast %313 : vector<8xf32> to vector<8x1xf32>
    %cst_118 = arith.constant 3.200000e+01 : f32
    %315 = vector.broadcast %cst_118 : f32 to vector<8x1xf32>
    %316 = arith.divf %314, %315 : vector<8x1xf32>
    %cst_119 = arith.constant 9.99999974E-6 : f32
    %317 = vector.broadcast %cst_119 : f32 to vector<8x1xf32>
    %318 = arith.addf %316, %317 : vector<8x1xf32>
    %319 = math.rsqrt %318 : vector<8x1xf32>
    %320 = vector.broadcast %309 : vector<8x1xf32> to vector<8x32xf32>
    %321 = arith.subf %305, %320 : vector<8x32xf32>
    %322 = vector.broadcast %319 : vector<8x1xf32> to vector<8x32xf32>
    %323 = arith.mulf %321, %322 : vector<8x32xf32>
    %324 = vector.broadcast %11 : vector<1x32xf32> to vector<8x32xf32>
    %325 = arith.mulf %323, %324 : vector<8x32xf32>
    %326 = vector.broadcast %12 : vector<1x32xf32> to vector<8x32xf32>
    %327 = arith.addf %325, %326 : vector<8x32xf32>
    %328 = arith.truncf %327 : vector<8x32xf32> to vector<8x32xbf16>
    %cst_120 = arith.constant dense<0.000000e+00> : vector<8x64xf32>
    %329 = tpu.matmul %328, %4, %cst_120 {dimension_numbers = #tpu.dot_dimension_numbers<[1], [0], [0], [1], [0, 0, 1, 1], [], []>} : vector<8x32xbf16>, vector<32x64xbf16>, vector<8x64xf32> -> vector<8x64xf32>
    %330 = vector.broadcast %9 : vector<1x64xf32> to vector<8x64xf32>
    %331 = arith.addf %329, %330 : vector<8x64xf32>
    %cst_121 = arith.constant 0.000000e+00 : f32
    %332 = vector.broadcast %cst_121 : f32 to vector<8x64xf32>
    %333 = arith.maximumf %331, %332 : vector<8x64xf32>
    %334 = arith.truncf %333 : vector<8x64xf32> to vector<8x64xbf16>
    %cst_122 = arith.constant dense<0.000000e+00> : vector<8x32xf32>
    %335 = tpu.matmul %334, %5, %cst_122 {dimension_numbers = #tpu.dot_dimension_numbers<[1], [0], [0], [1], [0, 0, 1, 1], [], []>} : vector<8x64xbf16>, vector<64x32xbf16>, vector<8x32xf32> -> vector<8x32xf32>
    %336 = vector.broadcast %10 : vector<1x32xf32> to vector<8x32xf32>
    %337 = arith.addf %335, %336 : vector<8x32xf32>
    %338 = arith.addf %327, %337 : vector<8x32xf32>
    %cst_123 = arith.constant dense<0.000000e+00> : vector<8xf32>
    %339 = vector.multi_reduction <add>, %338, %cst_123 [1] : vector<8x32xf32> to vector<8xf32>
    %340 = vector.shape_cast %339 : vector<8xf32> to vector<8x1xf32>
    %cst_124 = arith.constant 3.200000e+01 : f32
    %341 = vector.broadcast %cst_124 : f32 to vector<8x1xf32>
    %342 = arith.divf %340, %341 : vector<8x1xf32>
    %343 = vector.broadcast %342 : vector<8x1xf32> to vector<8x32xf32>
    %344 = arith.subf %338, %343 : vector<8x32xf32>
    %345 = arith.mulf %344, %344 : vector<8x32xf32>
    %cst_125 = arith.constant dense<0.000000e+00> : vector<8xf32>
    %346 = vector.multi_reduction <add>, %345, %cst_125 [1] : vector<8x32xf32> to vector<8xf32>
    %347 = vector.shape_cast %346 : vector<8xf32> to vector<8x1xf32>
    %cst_126 = arith.constant 3.200000e+01 : f32
    %348 = vector.broadcast %cst_126 : f32 to vector<8x1xf32>
    %349 = arith.divf %347, %348 : vector<8x1xf32>
    %cst_127 = arith.constant 9.99999974E-6 : f32
    %350 = vector.broadcast %cst_127 : f32 to vector<8x1xf32>
    %351 = arith.addf %349, %350 : vector<8x1xf32>
    %352 = math.rsqrt %351 : vector<8x1xf32>
    %353 = vector.broadcast %342 : vector<8x1xf32> to vector<8x32xf32>
    %354 = arith.subf %338, %353 : vector<8x32xf32>
    %355 = vector.broadcast %352 : vector<8x1xf32> to vector<8x32xf32>
    %356 = arith.mulf %354, %355 : vector<8x32xf32>
    %357 = vector.broadcast %13 : vector<1x32xf32> to vector<8x32xf32>
    %358 = arith.mulf %356, %357 : vector<8x32xf32>
    %359 = vector.broadcast %14 : vector<1x32xf32> to vector<8x32xf32>
    %360 = arith.addf %358, %359 : vector<8x32xf32>
    %c0_128 = arith.constant 0 : index
    %c1_129 = arith.constant 1 : index
    %c0_130 = arith.constant 0 : index
    %361 = vector.load %arg21[%c0_128, %c1_129, %c0_130] : memref<8x2x32xf32, #tpu.memory_space<vmem>>, vector<8x1x32xf32>
    %362 = vector.shape_cast %361 : vector<8x1x32xf32> to vector<8x32xf32>
    %363 = vector.shape_cast %360 : vector<8x32xf32> to vector<8x1x32xf32>
    tpu.vector_store %arg21[%c0_128, %c1_129, %c0_130], %363 {strides = array<i32>} : memref<8x2x32xf32, #tpu.memory_space<vmem>>, vector<8x1x32xf32>,
    return
  }
  func.func @transform_0(%arg0: i32) -> (i32, i32, i32) {
    %c0_i32 = arith.constant 0 : i32
    %c0_i32_0 = arith.constant 0 : i32
    %c0_i32_1 = arith.constant 0 : i32
    return %arg0, %c0_i32, %c0_i32_0 : i32, i32, i32
  }
  func.func @transform_1(%arg0: i32) -> (i32, i32, i32) {
    %c0_i32 = arith.constant 0 : i32
    %c0_i32_0 = arith.constant 0 : i32
    %c0_i32_1 = arith.constant 0 : i32
    return %arg0, %c0_i32, %c0_i32_0 : i32, i32, i32
  }
  func.func @transform_2(%arg0: i32) -> (i32, i32, i32) {
    %c0_i32 = arith.constant 0 : i32
    %c0_i32_0 = arith.constant 0 : i32
    %c0_i32_1 = arith.constant 0 : i32
    %c0_i32_2 = arith.constant 0 : i32
    return %c0_i32, %c0_i32_0, %c0_i32_1 : i32, i32, i32
  }
  func.func @transform_3(%arg0: i32) -> (i32, i32, i32) {
    %c0_i32 = arith.constant 0 : i32
    %c0_i32_0 = arith.constant 0 : i32
    %c0_i32_1 = arith.constant 0 : i32
    %c0_i32_2 = arith.constant 0 : i32
    return %c0_i32, %c0_i32_0, %c0_i32_1 : i32, i32, i32
  }
  func.func @transform_4(%arg0: i32) -> (i32, i32) {
    %c0_i32 = arith.constant 0 : i32
    %c0_i32_0 = arith.constant 0 : i32
    %c0_i32_1 = arith.constant 0 : i32
    return %c0_i32, %c0_i32_0 : i32, i32
  }
  func.func @transform_5(%arg0: i32) -> (i32, i32) {
    %c0_i32 = arith.constant 0 : i32
    %c0_i32_0 = arith.constant 0 : i32
    %c0_i32_1 = arith.constant 0 : i32
    return %c0_i32, %c0_i32_0 : i32, i32
  }
  func.func @transform_6(%arg0: i32) -> (i32, i32) {
    %c0_i32 = arith.constant 0 : i32
    %c0_i32_0 = arith.constant 0 : i32
    %c0_i32_1 = arith.constant 0 : i32
    return %c0_i32, %c0_i32_0 : i32, i32
  }
  func.func @transform_7(%arg0: i32) -> (i32, i32) {
    %c0_i32 = arith.constant 0 : i32
    %c0_i32_0 = arith.constant 0 : i32
    %c0_i32_1 = arith.constant 0 : i32
    return %c0_i32, %c0_i32_0 : i32, i32
  }
  func.func @transform_8(%arg0: i32) -> (i32, i32) {
    %c0_i32 = arith.constant 0 : i32
    %c0_i32_0 = arith.constant 0 : i32
    %c0_i32_1 = arith.constant 0 : i32
    return %c0_i32, %c0_i32_0 : i32, i32
  }
  func.func @transform_9(%arg0: i32) -> (i32, i32) {
    %c0_i32 = arith.constant 0 : i32
    %c0_i32_0 = arith.constant 0 : i32
    %c0_i32_1 = arith.constant 0 : i32
    return %c0_i32, %c0_i32_0 : i32, i32
  }
  func.func @transform_10(%arg0: i32) -> (i32, i32) {
    %c0_i32 = arith.constant 0 : i32
    %c0_i32_0 = arith.constant 0 : i32
    %c0_i32_1 = arith.constant 0 : i32
    return %c0_i32, %c0_i32_0 : i32, i32
  }
  func.func @transform_11(%arg0: i32) -> (i32, i32) {
    %c0_i32 = arith.constant 0 : i32
    %c0_i32_0 = arith.constant 0 : i32
    %c0_i32_1 = arith.constant 0 : i32
    return %c0_i32, %c0_i32_0 : i32, i32
  }
  func.func @transform_12(%arg0: i32) -> (i32, i32) {
    %c0_i32 = arith.constant 0 : i32
    %c0_i32_0 = arith.constant 0 : i32
    %c0_i32_1 = arith.constant 0 : i32
    return %c0_i32, %c0_i32_0 : i32, i32
  }
  func.func @transform_13(%arg0: i32) -> (i32, i32) {
    %c0_i32 = arith.constant 0 : i32
    %c0_i32_0 = arith.constant 0 : i32
    %c0_i32_1 = arith.constant 0 : i32
    return %c0_i32, %c0_i32_0 : i32, i32
  }
  func.func @transform_14(%arg0: i32) -> (i32, i32) {
    %c0_i32 = arith.constant 0 : i32
    %c0_i32_0 = arith.constant 0 : i32
    %c0_i32_1 = arith.constant 0 : i32
    return %c0_i32, %c0_i32_0 : i32, i32
  }
  func.func @transform_15(%arg0: i32) -> (i32, i32) {
    %c0_i32 = arith.constant 0 : i32
    %c0_i32_0 = arith.constant 0 : i32
    %c0_i32_1 = arith.constant 0 : i32
    return %c0_i32, %c0_i32_0 : i32, i32
  }
  func.func @transform_16(%arg0: i32) -> (i32, i32) {
    %c0_i32 = arith.constant 0 : i32
    %c0_i32_0 = arith.constant 0 : i32
    %c0_i32_1 = arith.constant 0 : i32
    return %c0_i32, %c0_i32_0 : i32, i32
  }
  func.func @transform_17(%arg0: i32) -> (i32, i32) {
    %c0_i32 = arith.constant 0 : i32
    %c0_i32_0 = arith.constant 0 : i32
    %c0_i32_1 = arith.constant 0 : i32
    return %c0_i32, %c0_i32_0 : i32, i32
  }
  func.func @transform_18(%arg0: i32) -> (i32, i32) {
    %c0_i32 = arith.constant 0 : i32
    %c0_i32_0 = arith.constant 0 : i32
    %c0_i32_1 = arith.constant 0 : i32
    return %c0_i32, %c0_i32_0 : i32, i32
  }
  func.func @transform_19(%arg0: i32) -> (i32, i32) {
    %c0_i32 = arith.constant 0 : i32
    %c0_i32_0 = arith.constant 0 : i32
    %c0_i32_1 = arith.constant 0 : i32
    return %c0_i32, %c0_i32_0 : i32, i32
  }
  func.func @transform_20(%arg0: i32) -> (i32, i32, i32) {
    %c0_i32 = arith.constant 0 : i32
    %c0_i32_0 = arith.constant 0 : i32
    %c0_i32_1 = arith.constant 0 : i32
    return %arg0, %c0_i32, %c0_i32_0 : i32, i32, i32
  }
}

</mosaic_0001>

<llo_original>
// kernel: transformer_decoder_layer.1
$region0: #{transformer_decoder_layer.1}
  #allocation0 [shape = 'u32[]', space=smem, size = 0x4, offset = 0x4, fixed_abs, tag = 'smem constant byte address 0x4 - core index']
  #allocation1 [shape = 'u32[72,128]{1,0:T(1,128)}', space=vmem, size = 0x9000, scoped, tag = 'internal scratch']
  %s0 = inlined_call_operand.vmem [shape: f32[8,2,32], index: 0, kind: input, shape index: {}]
  %s1 = inlined_call_operand.hbm [shape: f32[8,2,32], index: 1, kind: input, shape index: {}]
  %s2 = inlined_call_operand.vmem [shape: f32[16,2,32], index: 2, kind: input, shape index: {}]
  %s3 = inlined_call_operand.hbm [shape: f32[16,2,32], index: 3, kind: input, shape index: {}]
  %s4 = inlined_call_operand.vmem [shape: bf16[32,32], index: 4, kind: input, shape index: {}]
  %s5 = inlined_call_operand.hbm [shape: f32[1,32], index: 5, kind: input, shape index: {}]
  %s6 = inlined_call_operand.hbm [shape: bf16[32,32], index: 6, kind: input, shape index: {}]
  %s7 = inlined_call_operand.hbm [shape: f32[1,32], index: 7, kind: input, shape index: {}]
  %s8 = inlined_call_operand.hbm [shape: bf16[32,32], index: 8, kind: input, shape index: {}]
  %s9 = inlined_call_operand.hbm [shape: f32[1,32], index: 9, kind: input, shape index: {}]
  %s10 = inlined_call_operand.hbm [shape: bf16[32,32], index: 10, kind: input, shape index: {}]
  %s11 = inlined_call_operand.hbm [shape: f32[1,32], index: 11, kind: input, shape index: {}]
  %s12 = inlined_call_operand.hbm [shape: bf16[32,64], index: 12, kind: input, shape index: {}]
  %s13 = inlined_call_operand.hbm [shape: f32[1,64], index: 13, kind: input, shape index: {}]
  %s14 = inlined_call_operand.vmem [shape: bf16[64,32], index: 14, kind: input, shape index: {}]
  %s15 = inlined_call_operand.hbm [shape: f32[1,32], index: 15, kind: input, shape index: {}]
  %s16 = inlined_call_operand.hbm [shape: f32[1,32], index: 16, kind: input, shape index: {}]
  %s17 = inlined_call_operand.hbm [shape: f32[1,32], index: 17, kind: input, shape index: {}]
  %s18 = inlined_call_operand.hbm [shape: f32[1,32], index: 18, kind: input, shape index: {}]
  %s19 = inlined_call_operand.hbm [shape: f32[1,32], index: 19, kind: input, shape index: {}]
  %s20 = inlined_call_operand.hbm [shape: f32[8,2,32], index: 20, kind: output, shape index: {}]
  %s21 = sld [smem:[#allocation0]]
  $region154: #{transformer_decoder_layer.1} parent=0
    _
  %s23 = ssub.s32 1, %s21
  %s24 = scalar_select 0, %s23, %s21
  $region1: #{transformer_decoder_layer.1} parent=0
    #allocation2 [shape = 'u8[8192]{0}', space=vmem, size = 0x2000, scoped, tag = 'input window, operand 1, single buffered']
    #allocation3 [shape = 's32[1]{0}', space=sflag, size = 0x4, scoped, tag = 'scoped memory for transformer_decoder_layer.1']
    #allocation4 [shape = 's32[1]{0}', space=sflag, size = 0x4, scoped, tag = 'scoped memory for transformer_decoder_layer.1']
    #allocation5 [shape = 'u8[16384]{0}', space=vmem, size = 0x4000, scoped, tag = 'input window, operand 3, single buffered']
    #allocation6 [shape = 's32[1]{0}', space=sflag, size = 0x4, scoped, tag = 'scoped memory for transformer_decoder_layer.1']
    #allocation7 [shape = 'u8[512]{0}', space=vmem, size = 0x400, scoped, tag = 'input window, operand 5, single buffered']
    #allocation8 [shape = 'u8[8192]{0}', space=vmem, size = 0x2000, scoped, tag = 'input window, operand 6, single buffered']
    #allocation9 [shape = 's32[1]{0}', space=sflag, size = 0x4, scoped, tag = 'scoped memory for transformer_decoder_layer.1']
    #allocation10 [shape = 'u8[512]{0}', space=vmem, size = 0x400, scoped, tag = 'input window, operand 7, single buffered']
    #allocation11 [shape = 'u8[8192]{0}', space=vmem, size = 0x2000, scoped, tag = 'input window, operand 8, single buffered']
    #allocation12 [shape = 's32[1]{0}', space=sflag, size = 0x4, scoped, tag = 'scoped memory for transformer_decoder_layer.1']
    #allocation13 [shape = 'u8[512]{0}', space=vmem, size = 0x400, scoped, tag = 'input window, operand 9, single buffered']
    #allocation14 [shape = 'u8[8192]{0}', space=vmem, size = 0x2000, scoped, tag = 'input window, operand 10, single buffered']
    #allocation15 [shape = 's32[1]{0}', space=sflag, size = 0x4, scoped, tag = 'scoped memory for transformer_decoder_layer.1']
    #allocation16 [shape = 'u8[512]{0}', space=vmem, size = 0x400, scoped, tag = 'input window, operand 11, single buffered']
    #allocation17 [shape = 'u8[8192]{0}', space=vmem, size = 0x2000, scoped, tag = 'input window, operand 12, single buffered']
    #allocation18 [shape = 's32[1]{0}', space=sflag, size = 0x4, scoped, tag = 'scoped memory for transformer_decoder_layer.1']
    #allocation19 [shape = 'u8[512]{0}', space=vmem, size = 0x400, scoped, tag = 'input window, operand 13, single buffered']
    #allocation20 [shape = 'u8[512]{0}', space=vmem, size = 0x400, scoped, tag = 'input window, operand 15, single buffered']
    #allocation21 [shape = 's32[1]{0}', space=sflag, size = 0x4, scoped, tag = 'scoped memory for transformer_decoder_layer.1']
    #allocation22 [shape = 'u8[512]{0}', space=vmem, size = 0x400, scoped, tag = 'input window, operand 16, single buffered']
    #allocation23 [shape = 'u8[512]{0}', space=vmem, size = 0x400, scoped, tag = 'input window, operand 17, single buffered']
    #allocation24 [shape = 's32[1]{0}', space=sflag, size = 0x4, scoped, tag = 'scoped memory for transformer_decoder_layer.1']
    #allocation25 [shape = 'u8[512]{0}', space=vmem, size = 0x400, scoped, tag = 'input window, operand 18, single buffered']
    #allocation26 [shape = 'u8[512]{0}', space=vmem, size = 0x400, scoped, tag = 'input window, operand 19, single buffered']
    #allocation27 [shape = 's32[1]{0}', space=sflag, size = 0x4, scoped, tag = 'scoped memory for transformer_decoder_layer.1']
    #allocation28 [shape = 'u8[8192]{0}', space=vmem, size = 0x2000, scoped, tag = 'output window, operand 0, single buffered']
    %25 = vsyncpa [#allocation3], 0
    %26 = vsyncpa [#allocation6], 0
    %27 = vsyncpa [#allocation9], 0
    %28 = vsyncpa [#allocation12], 0
    %29 = vsyncpa [#allocation15], 0
    %30 = vsyncpa [#allocation18], 0
    %31 = vsyncpa [#allocation21], 0
    %32 = vsyncpa [#allocation24], 0
    %33 = vsyncpa [#allocation27], 0
    %34 = vsyncpa [#allocation4], 0
    // Predicated region
    $region2: #{transformer_decoder_layer.1} parent=1 // pred_check
      _
    $region3: #{transformer_decoder_layer.1} parent=1 // pred_check_branch
      %36 = sbr.rel (0) target = $region5
    $region4: #{transformer_decoder_layer.1} parent=1 // pred_region
      _
    $region5: #{transformer_decoder_layer.1} parent=1 // pred_fallthru
      _
    // Predicated region
    $region6: #{transformer_decoder_layer.1} parent=1 // pred_check
      _
    $region7: #{transformer_decoder_layer.1} parent=1 // pred_check_branch
      %38 = sbr.rel (0) target = $region9
    $region8: #{transformer_decoder_layer.1} parent=1 // pred_region
      %40 = vsyncadd [#allocation3], 0
      %s41 = sshll.u32 %s1, 4
      %s42 = int_to_ptr.hbm [resolvable:$true] %s41
      %s43 = sshll.u32 [#allocation2], 4
      %s44 = int_to_ptr.vmem [resolvable:$true] %s43
      %49 = dma.hbm_to_vmem [thread:$0]  %s42, 256, %s44, [#allocation3], 32, 32, 2
    $region9: #{transformer_decoder_layer.1} parent=1 // pred_fallthru
      _
    // Predicated region
    $region10: #{transformer_decoder_layer.1} parent=1 // pred_check
      _
    $region11: #{transformer_decoder_layer.1} parent=1 // pred_check_branch
      %51 = sbr.rel (0) target = $region13
    $region12: #{transformer_decoder_layer.1} parent=1 // pred_region
      _
    $region13: #{transformer_decoder_layer.1} parent=1 // pred_fallthru
      _
    // Predicated region
    $region14: #{transformer_decoder_layer.1} parent=1 // pred_check
      _
    $region15: #{transformer_decoder_layer.1} parent=1 // pred_check_branch
      %53 = sbr.rel (0) target = $region17
    $region16: #{transformer_decoder_layer.1} parent=1 // pred_region
      %55 = vsyncadd [#allocation6], 0
      %s56 = sshll.u32 %s3, 4
      %s57 = int_to_ptr.hbm [resolvable:$true] %s56
      %s58 = sshll.u32 [#allocation5], 4
      %s59 = int_to_ptr.vmem [resolvable:$true] %s58
      %64 = dma.hbm_to_vmem [thread:$0]  %s57, 512, %s59, [#allocation6], 32, 32, 2
    $region17: #{transformer_decoder_layer.1} parent=1 // pred_fallthru
      _
    // Predicated region
    $region18: #{transformer_decoder_layer.1} parent=1 // pred_check
      _
    $region19: #{transformer_decoder_layer.1} parent=1 // pred_check_branch
      %66 = sbr.rel (0) target = $region21
    $region20: #{transformer_decoder_layer.1} parent=1 // pred_region
      _
    $region21: #{transformer_decoder_layer.1} parent=1 // pred_fallthru
      _
    // Predicated region
    $region22: #{transformer_decoder_layer.1} parent=1 // pred_check
      _
    $region23: #{transformer_decoder_layer.1} parent=1 // pred_check_branch
      %68 = sbr.rel (0) target = $region25
    $region24: #{transformer_decoder_layer.1} parent=1 // pred_region
      %70 = vsyncadd [#allocation6], 0
      %s72 = sshll.u32 %s5, 4
      %s73 = int_to_ptr.hbm [resolvable:$true] %s72
      %s74 = sshll.u32 [#allocation7], 4
      %s75 = int_to_ptr.vmem [resolvable:$true] %s74
      %77 = dma.hbm_to_vmem [thread:$0]  %s73, 16, %s75, [#allocation6]
    $region25: #{transformer_decoder_layer.1} parent=1 // pred_fallthru
      _
    // Predicated region
    $region26: #{transformer_decoder_layer.1} parent=1 // pred_check
      _
    $region27: #{transformer_decoder_layer.1} parent=1 // pred_check_branch
      %79 = sbr.rel (0) target = $region29
    $region28: #{transformer_decoder_layer.1} parent=1 // pred_region
      %81 = vsyncadd [#allocation9], 0
      %s82 = sshll.u32 %s6, 4
      %s83 = int_to_ptr.hbm [resolvable:$true] %s82
      %s84 = sshll.u32 [#allocation8], 4
      %s85 = int_to_ptr.vmem [resolvable:$true] %s84
      %90 = dma.hbm_to_vmem [thread:$0]  %s83, 256, %s85, [#allocation9], 64, 64, 4
    $region29: #{transformer_decoder_layer.1} parent=1 // pred_fallthru
      _
    // Predicated region
    $region30: #{transformer_decoder_layer.1} parent=1 // pred_check
      _
    $region31: #{transformer_decoder_layer.1} parent=1 // pred_check_branch
      %92 = sbr.rel (0) target = $region33
    $region32: #{transformer_decoder_layer.1} parent=1 // pred_region
      %94 = vsyncadd [#allocation9], 0
      %s96 = sshll.u32 %s7, 4
      %s97 = int_to_ptr.hbm [resolvable:$true] %s96
      %s98 = sshll.u32 [#allocation10], 4
      %s99 = int_to_ptr.vmem [resolvable:$true] %s98
      %101 = dma.hbm_to_vmem [thread:$0]  %s97, 16, %s99, [#allocation9]
    $region33: #{transformer_decoder_layer.1} parent=1 // pred_fallthru
      _
    // Predicated region
    $region34: #{transformer_decoder_layer.1} parent=1 // pred_check
      _
    $region35: #{transformer_decoder_layer.1} parent=1 // pred_check_branch
      %103 = sbr.rel (0) target = $region37
    $region36: #{transformer_decoder_layer.1} parent=1 // pred_region
      %105 = vsyncadd [#allocation12], 0
      %s106 = sshll.u32 %s8, 4
      %s107 = int_to_ptr.hbm [resolvable:$true] %s106
      %s108 = sshll.u32 [#allocation11], 4
      %s109 = int_to_ptr.vmem [resolvable:$true] %s108
      %114 = dma.hbm_to_vmem [thread:$0]  %s107, 256, %s109, [#allocation12], 64, 64, 4
    $region37: #{transformer_decoder_layer.1} parent=1 // pred_fallthru
      _
    // Predicated region
    $region38: #{transformer_decoder_layer.1} parent=1 // pred_check
      _
    $region39: #{transformer_decoder_layer.1} parent=1 // pred_check_branch
      %116 = sbr.rel (0) target = $region41
    $region40: #{transformer_decoder_layer.1} parent=1 // pred_region
      %118 = vsyncadd [#allocation12], 0
      %s120 = sshll.u32 %s9, 4
      %s121 = int_to_ptr.hbm [resolvable:$true] %s120
      %s122 = sshll.u32 [#allocation13], 4
      %s123 = int_to_ptr.vmem [resolvable:$true] %s122
      %125 = dma.hbm_to_vmem [thread:$0]  %s121, 16, %s123, [#allocation12]
    $region41: #{transformer_decoder_layer.1} parent=1 // pred_fallthru
      _
    // Predicated region
    $region42: #{transformer_decoder_layer.1} parent=1 // pred_check
      _
    $region43: #{transformer_decoder_layer.1} parent=1 // pred_check_branch
      %127 = sbr.rel (0) target = $region45
    $region44: #{transformer_decoder_layer.1} parent=1 // pred_region
      %129 = vsyncadd [#allocation15], 0
      %s130 = sshll.u32 %s10, 4
      %s131 = int_to_ptr.hbm [resolvable:$true] %s130
      %s132 = sshll.u32 [#allocation14], 4
      %s133 = int_to_ptr.vmem [resolvable:$true] %s132
      %138 = dma.hbm_to_vmem [thread:$0]  %s131, 256, %s133, [#allocation15], 64, 64, 4
    $region45: #{transformer_decoder_layer.1} parent=1 // pred_fallthru
      _
    // Predicated region
    $region46: #{transformer_decoder_layer.1} parent=1 // pred_check
      _
    $region47: #{transformer_decoder_layer.1} parent=1 // pred_check_branch
      %140 = sbr.rel (0) target = $region49
    $region48: #{transformer_decoder_layer.1} parent=1 // pred_region
      %142 = vsyncadd [#allocation15], 0
      %s144 = sshll.u32 %s11, 4
      %s145 = int_to_ptr.hbm [resolvable:$true] %s144
      %s146 = sshll.u32 [#allocation16], 4
      %s147 = int_to_ptr.vmem [resolvable:$true] %s146
      %149 = dma.hbm_to_vmem [thread:$0]  %s145, 16, %s147, [#allocation15]
    $region49: #{transformer_decoder_layer.1} parent=1 // pred_fallthru
      _
    // Predicated region
    $region50: #{transformer_decoder_layer.1} parent=1 // pred_check
      _
    $region51: #{transformer_decoder_layer.1} parent=1 // pred_check_branch
      %151 = sbr.rel (0) target = $region53
    $region52: #{transformer_decoder_layer.1} parent=1 // pred_region
      %153 = vsyncadd [#allocation18], 0
      %s154 = sshll.u32 %s12, 4
      %s155 = int_to_ptr.hbm [resolvable:$true] %s154
      %s156 = sshll.u32 [#allocation17], 4
      %s157 = int_to_ptr.vmem [resolvable:$true] %s156
      %162 = dma.hbm_to_vmem [thread:$0]  %s155, 256, %s157, [#allocation18], 64, 64, 4
    $region53: #{transformer_decoder_layer.1} parent=1 // pred_fallthru
      _
    // Predicated region
    $region54: #{transformer_decoder_layer.1} parent=1 // pred_check
      _
    $region55: #{transformer_decoder_layer.1} parent=1 // pred_check_branch
      %164 = sbr.rel (0) target = $region57
    $region56: #{transformer_decoder_layer.1} parent=1 // pred_region
      %166 = vsyncadd [#allocation18], 0
      %s168 = sshll.u32 %s13, 4
      %s169 = int_to_ptr.hbm [resolvable:$true] %s168
      %s170 = sshll.u32 [#allocation19], 4
      %s171 = int_to_ptr.vmem [resolvable:$true] %s170
      %173 = dma.hbm_to_vmem [thread:$0]  %s169, 16, %s171, [#allocation18]
    $region57: #{transformer_decoder_layer.1} parent=1 // pred_fallthru
      _
    // Predicated region
    $region58: #{transformer_decoder_layer.1} parent=1 // pred_check
      _
    $region59: #{transformer_decoder_layer.1} parent=1 // pred_check_branch
      %175 = sbr.rel (0) target = $region61
    $region60: #{transformer_decoder_layer.1} parent=1 // pred_region
      _
    $region61: #{transformer_decoder_layer.1} parent=1 // pred_fallthru
      _
    // Predicated region
    $region62: #{transformer_decoder_layer.1} parent=1 // pred_check
      _
    $region63: #{transformer_decoder_layer.1} parent=1 // pred_check_branch
      %177 = sbr.rel (0) target = $region65
    $region64: #{transformer_decoder_layer.1} parent=1 // pred_region
      %179 = vsyncadd [#allocation21], 0
      %s181 = sshll.u32 %s15, 4
      %s182 = int_to_ptr.hbm [resolvable:$true] %s181
      %s183 = sshll.u32 [#allocation20], 4
      %s184 = int_to_ptr.vmem [resolvable:$true] %s183
      %186 = dma.hbm_to_vmem [thread:$0]  %s182, 16, %s184, [#allocation21]
    $region65: #{transformer_decoder_layer.1} parent=1 // pred_fallthru
      _
    // Predicated region
    $region66: #{transformer_decoder_layer.1} parent=1 // pred_check
      _
    $region67: #{transformer_decoder_layer.1} parent=1 // pred_check_branch
      %188 = sbr.rel (0) target = $region69
    $region68: #{transformer_decoder_layer.1} parent=1 // pred_region
      %190 = vsyncadd [#allocation21], 0
      %s192 = sshll.u32 %s16, 4
      %s193 = int_to_ptr.hbm [resolvable:$true] %s192
      %s194 = sshll.u32 [#allocation22], 4
      %s195 = int_to_ptr.vmem [resolvable:$true] %s194
      %197 = dma.hbm_to_vmem [thread:$0]  %s193, 16, %s195, [#allocation21]
    $region69: #{transformer_decoder_layer.1} parent=1 // pred_fallthru
      _
    // Predicated region
    $region70: #{transformer_decoder_layer.1} parent=1 // pred_check
      _
    $region71: #{transformer_decoder_layer.1} parent=1 // pred_check_branch
      %199 = sbr.rel (0) target = $region73
    $region72: #{transformer_decoder_layer.1} parent=1 // pred_region
      %201 = vsyncadd [#allocation24], 0
      %s203 = sshll.u32 %s17, 4
      %s204 = int_to_ptr.hbm [resolvable:$true] %s203
      %s205 = sshll.u32 [#allocation23], 4
      %s206 = int_to_ptr.vmem [resolvable:$true] %s205
      %208 = dma.hbm_to_vmem [thread:$0]  %s204, 16, %s206, [#allocation24]
    $region73: #{transformer_decoder_layer.1} parent=1 // pred_fallthru
      _
    // Predicated region
    $region74: #{transformer_decoder_layer.1} parent=1 // pred_check
      _
    $region75: #{transformer_decoder_layer.1} parent=1 // pred_check_branch
      %210 = sbr.rel (0) target = $region77
    $region76: #{transformer_decoder_layer.1} parent=1 // pred_region
      %212 = vsyncadd [#allocation24], 0
      %s214 = sshll.u32 %s18, 4
      %s215 = int_to_ptr.hbm [resolvable:$true] %s214
      %s216 = sshll.u32 [#allocation25], 4
      %s217 = int_to_ptr.vmem [resolvable:$true] %s216
      %219 = dma.hbm_to_vmem [thread:$0]  %s215, 16, %s217, [#allocation24]
    $region77: #{transformer_decoder_layer.1} parent=1 // pred_fallthru
      _
    // Predicated region
    $region78: #{transformer_decoder_layer.1} parent=1 // pred_check
      _
    $region79: #{transformer_decoder_layer.1} parent=1 // pred_check_branch
      %221 = sbr.rel (0) target = $region81
    $region80: #{transformer_decoder_layer.1} parent=1 // pred_region
      %223 = vsyncadd [#allocation27], 0
      %s225 = sshll.u32 %s19, 4
      %s226 = int_to_ptr.hbm [resolvable:$true] %s225
      %s227 = sshll.u32 [#allocation26], 4
      %s228 = int_to_ptr.vmem [resolvable:$true] %s227
      %230 = dma.hbm_to_vmem [thread:$0]  %s226, 16, %s228, [#allocation27]
    $region81: #{transformer_decoder_layer.1} parent=1 // pred_fallthru
      _
    // Predicated region
    $region82: #{transformer_decoder_layer.1} parent=1 // pred_check
      _
    $region83: #{transformer_decoder_layer.1} parent=1 // pred_check_branch
      %232 = sbr.rel (0) target = $region85
    $region84: #{transformer_decoder_layer.1} parent=1 // pred_region
      %234 = dma.done [#allocation3], 256
    $region85: #{transformer_decoder_layer.1} parent=1 // pred_fallthru
      _
    // Predicated region
    $region86: #{transformer_decoder_layer.1} parent=1 // pred_check
      _
    $region87: #{transformer_decoder_layer.1} parent=1 // pred_check_branch
      %236 = sbr.rel (0) target = $region89
    $region88: #{transformer_decoder_layer.1} parent=1 // pred_region
      %238 = dma.done [#allocation6], 512
    $region89: #{transformer_decoder_layer.1} parent=1 // pred_fallthru
      _
    // Predicated region
    $region90: #{transformer_decoder_layer.1} parent=1 // pred_check
      _
    $region91: #{transformer_decoder_layer.1} parent=1 // pred_check_branch
      %240 = sbr.rel (0) target = $region93
    $region92: #{transformer_decoder_layer.1} parent=1 // pred_region
      %242 = dma.done [#allocation6], 16
    $region93: #{transformer_decoder_layer.1} parent=1 // pred_fallthru
      _
    // Predicated region
    $region94: #{transformer_decoder_layer.1} parent=1 // pred_check
      _
    $region95: #{transformer_decoder_layer.1} parent=1 // pred_check_branch
      %244 = sbr.rel (0) target = $region97
    $region96: #{transformer_decoder_layer.1} parent=1 // pred_region
      %246 = dma.done [#allocation9], 256
    $region97: #{transformer_decoder_layer.1} parent=1 // pred_fallthru
      _
    // Predicated region
    $region98: #{transformer_decoder_layer.1} parent=1 // pred_check
      _
    $region99: #{transformer_decoder_layer.1} parent=1 // pred_check_branch
      %248 = sbr.rel (0) target = $region101
    $region100: #{transformer_decoder_layer.1} parent=1 // pred_region
      %250 = dma.done [#allocation9], 16
    $region101: #{transformer_decoder_layer.1} parent=1 // pred_fallthru
      _
    // Predicated region
    $region102: #{transformer_decoder_layer.1} parent=1 // pred_check
      _
    $region103: #{transformer_decoder_layer.1} parent=1 // pred_check_branch
      %252 = sbr.rel (0) target = $region105
    $region104: #{transformer_decoder_layer.1} parent=1 // pred_region
      %254 = dma.done [#allocation12], 256
    $region105: #{transformer_decoder_layer.1} parent=1 // pred_fallthru
      _
    // Predicated region
    $region106: #{transformer_decoder_layer.1} parent=1 // pred_check
      _
    $region107: #{transformer_decoder_layer.1} parent=1 // pred_check_branch
      %256 = sbr.rel (0) target = $region109
    $region108: #{transformer_decoder_layer.1} parent=1 // pred_region
      %258 = dma.done [#allocation12], 16
    $region109: #{transformer_decoder_layer.1} parent=1 // pred_fallthru
      _
    // Predicated region
    $region110: #{transformer_decoder_layer.1} parent=1 // pred_check
      _
    $region111: #{transformer_decoder_layer.1} parent=1 // pred_check_branch
      %260 = sbr.rel (0) target = $region113
    $region112: #{transformer_decoder_layer.1} parent=1 // pred_region
      %262 = dma.done [#allocation15], 256
    $region113: #{transformer_decoder_layer.1} parent=1 // pred_fallthru
      _
    // Predicated region
    $region114: #{transformer_decoder_layer.1} parent=1 // pred_check
      _
    $region115: #{transformer_decoder_layer.1} parent=1 // pred_check_branch
      %264 = sbr.rel (0) target = $region117
    $region116: #{transformer_decoder_layer.1} parent=1 // pred_region
      %266 = dma.done [#allocation15], 16
    $region117: #{transformer_decoder_layer.1} parent=1 // pred_fallthru
      _
    // Predicated region
    $region118: #{transformer_decoder_layer.1} parent=1 // pred_check
      _
    $region119: #{transformer_decoder_layer.1} parent=1 // pred_check_branch
      %268 = sbr.rel (0) target = $region121
    $region120: #{transformer_decoder_layer.1} parent=1 // pred_region
      %270 = dma.done [#allocation18], 256
    $region121: #{transformer_decoder_layer.1} parent=1 // pred_fallthru
      _
    // Predicated region
    $region122: #{transformer_decoder_layer.1} parent=1 // pred_check
      _
    $region123: #{transformer_decoder_layer.1} parent=1 // pred_check_branch
      %272 = sbr.rel (0) target = $region125
    $region124: #{transformer_decoder_layer.1} parent=1 // pred_region
      %274 = dma.done [#allocation18], 16
    $region125: #{transformer_decoder_layer.1} parent=1 // pred_fallthru
      _
    // Predicated region
    $region126: #{transformer_decoder_layer.1} parent=1 // pred_check
      _
    $region127: #{transformer_decoder_layer.1} parent=1 // pred_check_branch
      %276 = sbr.rel (0) target = $region129
    $region128: #{transformer_decoder_layer.1} parent=1 // pred_region
      %278 = dma.done [#allocation21], 16
    $region129: #{transformer_decoder_layer.1} parent=1 // pred_fallthru
      _
    // Predicated region
    $region130: #{transformer_decoder_layer.1} parent=1 // pred_check
      _
    $region131: #{transformer_decoder_layer.1} parent=1 // pred_check_branch
      %280 = sbr.rel (0) target = $region133
    $region132: #{transformer_decoder_layer.1} parent=1 // pred_region
      %282 = dma.done [#allocation21], 16
    $region133: #{transformer_decoder_layer.1} parent=1 // pred_fallthru
      _
    // Predicated region
    $region134: #{transformer_decoder_layer.1} parent=1 // pred_check
      _
    $region135: #{transformer_decoder_layer.1} parent=1 // pred_check_branch
      %284 = sbr.rel (0) target = $region137
    $region136: #{transformer_decoder_layer.1} parent=1 // pred_region
      %286 = dma.done [#allocation24], 16
    $region137: #{transformer_decoder_layer.1} parent=1 // pred_fallthru
      _
    // Predicated region
    $region138: #{transformer_decoder_layer.1} parent=1 // pred_check
      _
    $region139: #{transformer_decoder_layer.1} parent=1 // pred_check_branch
      %288 = sbr.rel (0) target = $region141
    $region140: #{transformer_decoder_layer.1} parent=1 // pred_region
      %290 = dma.done [#allocation24], 16
    $region141: #{transformer_decoder_layer.1} parent=1 // pred_fallthru
      _
    // Predicated region
    $region142: #{transformer_decoder_layer.1} parent=1 // pred_check
      _
    $region143: #{transformer_decoder_layer.1} parent=1 // pred_check_branch
      %292 = sbr.rel (0) target = $region145
    $region144: #{transformer_decoder_layer.1} parent=1 // pred_region
      %294 = dma.done [#allocation27], 16
    $region145: #{transformer_decoder_layer.1} parent=1 // pred_fallthru
      _
    %v296 = vld [vmem:[%s4] sm:$0xf]
    %v297 = vld [vmem:[%s4 + $0x4] sm:$0xf]
    %v298 = vld [vmem:[%s4 + $0x8] sm:$0xf]
    %v299 = vld [vmem:[%s4 + $0xc] sm:$0xf]
    %v300 = vld [vmem:[#allocation8] sm:$0xf]
    %v301 = vld [vmem:[#allocation8 + $0x4] sm:$0xf]
    %v302 = vld [vmem:[#allocation8 + $0x8] sm:$0xf]
    %v303 = vld [vmem:[#allocation8 + $0xc] sm:$0xf]
    %v304 = vld [vmem:[#allocation11] sm:$0xf]
    %v305 = vld [vmem:[#allocation11 + $0x4] sm:$0xf]
    %v306 = vld [vmem:[#allocation11 + $0x8] sm:$0xf]
    %v307 = vld [vmem:[#allocation11 + $0xc] sm:$0xf]
    %v308 = vld [vmem:[#allocation14] sm:$0xf]
    %v309 = vld [vmem:[#allocation14 + $0x4] sm:$0xf]
    %v310 = vld [vmem:[#allocation14 + $0x8] sm:$0xf]
    %v311 = vld [vmem:[#allocation14 + $0xc] sm:$0xf]
    %v312 = vld [vmem:[#allocation17] sm:$0xf]
    %v313 = vld [vmem:[#allocation17 + $0x4] sm:$0xf]
    %v314 = vld [vmem:[#allocation17 + $0x8] sm:$0xf]
    %v315 = vld [vmem:[#allocation17 + $0xc] sm:$0xf]
    %v316 = vld [vmem:[%s14] sm:$0xf]
    %v317 = vld [vmem:[%s14 + $0x4] sm:$0xf]
    %v318 = vld [vmem:[%s14 + $0x8] sm:$0xf]
    %v319 = vld [vmem:[%s14 + $0xc] sm:$0xf]
    %v320 = vld [vmem:[%s14 + $0x10] sm:$0xf]
    %v321 = vld [vmem:[%s14 + $0x14] sm:$0xf]
    %v322 = vld [vmem:[%s14 + $0x18] sm:$0xf]
    %v323 = vld [vmem:[%s14 + $0x1c] sm:$0xf]
    %v324 = vld [vmem:[#allocation7] sm:$0x1]
    %v325 = vld [vmem:[#allocation10] sm:$0x1]
    %v326 = vld [vmem:[#allocation13] sm:$0x1]
    %v327 = vld [vmem:[#allocation19] sm:$0x1]
    %v328 = vld [vmem:[#allocation20] sm:$0x1]
    %v329 = vld [vmem:[#allocation22] sm:$0x1]
    %v330 = vld [vmem:[#allocation23] sm:$0x1]
    %v331 = vld [vmem:[#allocation25] sm:$0x1]
    %v332 = vld [vmem:[#allocation26] sm:$0x1]
    %v333 = vld [vmem:[#allocation16] sm:$0x1]
    %v335 = vperm.slane %v333, 0
    %v337 = vld [vmem:[%s0] sm:$0x1]
    %v338 = vld [vmem:[%s0 + $0x2] sm:$0x1]
    %v339 = vld [vmem:[%s0 + $0x4] sm:$0x1]
    %v340 = vld [vmem:[%s0 + $0x6] sm:$0x1]
    %v341 = vld [vmem:[%s0 + $0x8] sm:$0x1]
    %v342 = vld [vmem:[%s0 + $0xa] sm:$0x1]
    %v343 = vld [vmem:[%s0 + $0xc] sm:$0x1]
    %v344 = vld [vmem:[%s0 + $0xe] sm:$0x1]
    %v345 = vld [vmem:[#allocation2] sm:$0x1]
    %v346 = vld [vmem:[#allocation2 + $0x2] sm:$0x1]
    %v347 = vld [vmem:[#allocation2 + $0x4] sm:$0x1]
    %v348 = vld [vmem:[#allocation2 + $0x6] sm:$0x1]
    %v349 = vld [vmem:[#allocation2 + $0x8] sm:$0x1]
    %v350 = vld [vmem:[#allocation2 + $0xa] sm:$0x1]
    %v351 = vld [vmem:[#allocation2 + $0xc] sm:$0x1]
    %v352 = vld [vmem:[#allocation2 + $0xe] sm:$0x1]
    %v353 = vadd.f32 %v337, %v345
    %v354 = vadd.f32 %v338, %v346
    %v355 = vadd.f32 %v339, %v347
    %v356 = vadd.f32 %v340, %v348
    %v357 = vadd.f32 %v341, %v349
    %v358 = vadd.f32 %v342, %v350
    %v359 = vadd.f32 %v343, %v351
    %v360 = vadd.f32 %v344, %v352
    %v361 = vpack.c.bf16 %v353, %v353
    %v362 = vpack.c.bf16 %v354, %v354
    %v363 = vpack.c.bf16 %v355, %v355
    %v364 = vpack.c.bf16 %v356, %v356
    %v365 = vpack.c.bf16 %v357, %v357
    %v366 = vpack.c.bf16 %v358, %v358
    %v367 = vpack.c.bf16 %v359, %v359
    %v368 = vpack.c.bf16 %v360, %v360
    %v369 = vld [vmem:[%s2] sm:$0x1]
    %v370 = vld [vmem:[%s2 + $0x2] sm:$0x1]
    %v371 = vld [vmem:[%s2 + $0x4] sm:$0x1]
    %v372 = vld [vmem:[%s2 + $0x6] sm:$0x1]
    %v373 = vld [vmem:[%s2 + $0x8] sm:$0x1]
    %v374 = vld [vmem:[%s2 + $0xa] sm:$0x1]
    %v375 = vld [vmem:[%s2 + $0xc] sm:$0x1]
    %v376 = vld [vmem:[%s2 + $0xe] sm:$0x1]
    %v377 = vld [vmem:[%s2 + $0x10] sm:$0x1]
    %v378 = vld [vmem:[%s2 + $0x12] sm:$0x1]
    %v379 = vld [vmem:[%s2 + $0x14] sm:$0x1]
    %v380 = vld [vmem:[%s2 + $0x16] sm:$0x1]
    %v381 = vld [vmem:[%s2 + $0x18] sm:$0x1]
    %v382 = vld [vmem:[%s2 + $0x1a] sm:$0x1]
    %v383 = vld [vmem:[%s2 + $0x1c] sm:$0x1]
    %v384 = vld [vmem:[%s2 + $0x1e] sm:$0x1]
    %v385 = vld [vmem:[#allocation5] sm:$0x1]
    %v386 = vld [vmem:[#allocation5 + $0x2] sm:$0x1]
    %v387 = vld [vmem:[#allocation5 + $0x4] sm:$0x1]
    %v388 = vld [vmem:[#allocation5 + $0x6] sm:$0x1]
    %v389 = vld [vmem:[#allocation5 + $0x8] sm:$0x1]
    %v390 = vld [vmem:[#allocation5 + $0xa] sm:$0x1]
    %v391 = vld [vmem:[#allocation5 + $0xc] sm:$0x1]
    %v392 = vld [vmem:[#allocation5 + $0xe] sm:$0x1]
    %v393 = vld [vmem:[#allocation5 + $0x10] sm:$0x1]
    %v394 = vld [vmem:[#allocation5 + $0x12] sm:$0x1]
    %v395 = vld [vmem:[#allocation5 + $0x14] sm:$0x1]
    %v396 = vld [vmem:[#allocation5 + $0x16] sm:$0x1]
    %v397 = vld [vmem:[#allocation5 + $0x18] sm:$0x1]
    %v398 = vld [vmem:[#allocation5 + $0x1a] sm:$0x1]
    %v399 = vld [vmem:[#allocation5 + $0x1c] sm:$0x1]
    %v400 = vld [vmem:[#allocation5 + $0x1e] sm:$0x1]
    %v401 = vadd.f32 %v369, %v385
    %v402 = vadd.f32 %v370, %v386
    %v403 = vadd.f32 %v371, %v387
    %v404 = vadd.f32 %v372, %v388
    %v405 = vadd.f32 %v373, %v389
    %v406 = vadd.f32 %v374, %v390
    %v407 = vadd.f32 %v375, %v391
    %v408 = vadd.f32 %v376, %v392
    %v409 = vadd.f32 %v377, %v393
    %v410 = vadd.f32 %v378, %v394
    %v411 = vadd.f32 %v379, %v395
    %v412 = vadd.f32 %v380, %v396
    %v413 = vadd.f32 %v381, %v397
    %v414 = vadd.f32 %v382, %v398
    %v415 = vadd.f32 %v383, %v399
    %v416 = vadd.f32 %v384, %v400
    %v417 = vpack.c.bf16 %v401, %v401
    %v418 = vpack.c.bf16 %v402, %v402
    %v419 = vpack.c.bf16 %v403, %v403
    %v420 = vpack.c.bf16 %v404, %v404
    %v421 = vpack.c.bf16 %v405, %v405
    %v422 = vpack.c.bf16 %v406, %v406
    %v423 = vpack.c.bf16 %v407, %v407
    %v424 = vpack.c.bf16 %v408, %v408
    %v425 = vpack.c.bf16 %v409, %v409
    %v426 = vpack.c.bf16 %v410, %v410
    %v427 = vpack.c.bf16 %v411, %v411
    %v428 = vpack.c.bf16 %v412, %v412
    %v429 = vpack.c.bf16 %v413, %v413
    %v430 = vpack.c.bf16 %v414, %v414
    %v431 = vpack.c.bf16 %v415, %v415
    %v432 = vpack.c.bf16 %v416, %v416
    %v433 = vpack.c.bf16 %v369, %v369
    %v434 = vpack.c.bf16 %v370, %v370
    %v435 = vpack.c.bf16 %v371, %v371
    %v436 = vpack.c.bf16 %v372, %v372
    %v437 = vpack.c.bf16 %v373, %v373
    %v438 = vpack.c.bf16 %v374, %v374
    %v439 = vpack.c.bf16 %v375, %v375
    %v440 = vpack.c.bf16 %v376, %v376
    %v441 = vpack.c.bf16 %v377, %v377
    %v442 = vpack.c.bf16 %v378, %v378
    %v443 = vpack.c.bf16 %v379, %v379
    %v444 = vpack.c.bf16 %v380, %v380
    %v445 = vpack.c.bf16 %v381, %v381
    %v446 = vpack.c.bf16 %v382, %v382
    %v447 = vpack.c.bf16 %v383, %v383
    %v448 = vpack.c.bf16 %v384, %v384
    %v450 = vperm.slane %v324, 0
    %v460 = vunpack.c.l.b16 %v361
    %v461 = vunpack.c.l.b16 %v362
    %v462 = vunpack.c.l.b16 %v363
    %v463 = vunpack.c.l.b16 %v364
    %v464 = vunpack.c.l.b16 %v365
    %v465 = vunpack.c.l.b16 %v366
    %v466 = vunpack.c.l.b16 %v367
    %v467 = vunpack.c.l.b16 %v368
    %v468 = vrot.slane %v461, 7
    %vm469 = vcmask 1041409
    %v470 = vsel %vm469, %v468, %v460
    %v471 = vrot.slane %v462, 6
    %vm472 = vcmask 1042434
    %v473 = vsel %vm472, %v471, %v470
    %v474 = vrot.slane %v463, 5
    %vm475 = vcmask 1043459
    %v476 = vsel %vm475, %v474, %v473
    %v477 = vrot.slane %v464, 4
    %vm478 = vcmask 1044484
    %v479 = vsel %vm478, %v477, %v476
    %v480 = vrot.slane %v465, 3
    %vm481 = vcmask 1045509
    %v482 = vsel %vm481, %v480, %v479
    %v483 = vrot.slane %v466, 2
    %vm484 = vcmask 1046534
    %v485 = vsel %vm484, %v483, %v482
    %v486 = vrot.slane %v467, 1
    %vm487 = vcmask 1047559
    %v488 = vsel %vm487, %v486, %v485
    %v489 = vpack.c.b16 %v488, %v488
    %v494 = vunpack.c.l.b16 %v296
    %v495 = vunpack.c.l.b16 %v297
    %v496 = vunpack.c.l.b16 %v298
    %v497 = vunpack.c.l.b16 %v299
    %v498 = vpack.c.b16 %v495, %v494
    %v499 = vpack.c.b16 %v497, %v496
    %vm502 = vcmask 261120
    %v504 = vsel %vm502, %v489, 0
    %506 = vmatpush.bf16.msra.mxu0 0
    %507 = vmatpush.bf16.msra.mxu0 0
    %508 = vmatpush.bf16.msra.mxu0 0
    %509 = vmatpush.bf16.msra.mxu0 0
    %510 = vmatpush.bf16.msra.mxu0 0
    %511 = vmatpush.bf16.msra.mxu0 0
    %512 = vmatpush.bf16.msra.mxu0 %v499
    %513 = vmatpush.bf16.msra.mxu0 %v498
    %514 = vmatmul.bf16.gmra.mxu0 %v504
    %v515 = vpop.f32.mrf.mxu0
    %v516 = vadd.f32 %v450, %v515
    %v517 = vpop.f32.mrf.mxu0
    %518 = vdwg.mxu0
    %v520 = vperm.slane %v325, 0
    %v538 = vunpack.c.l.b16 %v417
    %v539 = vunpack.c.l.b16 %v418
    %v540 = vunpack.c.l.b16 %v419
    %v541 = vunpack.c.l.b16 %v420
    %v542 = vunpack.c.l.b16 %v421
    %v543 = vunpack.c.l.b16 %v422
    %v544 = vunpack.c.l.b16 %v423
    %v545 = vunpack.c.l.b16 %v424
    %v546 = vunpack.c.l.b16 %v425
    %v547 = vunpack.c.l.b16 %v426
    %v548 = vunpack.c.l.b16 %v427
    %v549 = vunpack.c.l.b16 %v428
    %v550 = vunpack.c.l.b16 %v429
    %v551 = vunpack.c.l.b16 %v430
    %v552 = vunpack.c.l.b16 %v431
    %v553 = vunpack.c.l.b16 %v432
    %v554 = vrot.slane %v539, 7
    %v555 = vsel %vm469, %v554, %v538
    %v556 = vrot.slane %v540, 6
    %v557 = vsel %vm472, %v556, %v555
    %v558 = vrot.slane %v541, 5
    %v559 = vsel %vm475, %v558, %v557
    %v560 = vrot.slane %v542, 4
    %v561 = vsel %vm478, %v560, %v559
    %v562 = vrot.slane %v543, 3
    %v563 = vsel %vm481, %v562, %v561
    %v564 = vrot.slane %v544, 2
    %v565 = vsel %vm484, %v564, %v563
    %v566 = vrot.slane %v545, 1
    %v567 = vsel %vm487, %v566, %v565
    %v568 = vrot.slane %v547, 7
    %v569 = vsel %vm469, %v568, %v546
    %v570 = vrot.slane %v548, 6
    %v571 = vsel %vm472, %v570, %v569
    %v572 = vrot.slane %v549, 5
    %v573 = vsel %vm475, %v572, %v571
    %v574 = vrot.slane %v550, 4
    %v575 = vsel %vm478, %v574, %v573
    %v576 = vrot.slane %v551, 3
    %v577 = vsel %vm481, %v576, %v575
    %v578 = vrot.slane %v552, 2
    %v579 = vsel %vm484, %v578, %v577
    %v580 = vrot.slane %v553, 1
    %v581 = vsel %vm487, %v580, %v579
    %v582 = vpack.c.b16 %v581, %v567
    %v587 = vunpack.c.l.b16 %v300
    %v588 = vunpack.c.l.b16 %v301
    %v589 = vunpack.c.l.b16 %v302
    %v590 = vunpack.c.l.b16 %v303
    %v591 = vpack.c.b16 %v588, %v587
    %v592 = vpack.c.b16 %v590, %v589
    %v596 = vsel %vm502, %v582, 0
    %598 = vmatpush.bf16.msra.mxu0 0
    %599 = vmatpush.bf16.msra.mxu0 0
    %600 = vmatpush.bf16.msra.mxu0 0
    %601 = vmatpush.bf16.msra.mxu0 0
    %602 = vmatpush.bf16.msra.mxu0 0
    %603 = vmatpush.bf16.msra.mxu0 0
    %604 = vmatpush.bf16.msra.mxu0 %v592
    %605 = vmatpush.bf16.msra.mxu0 %v591
    %606 = vmatmul.bf16.gmra.mxu0 %v596
    %v607 = vpop.f32.mrf.mxu0
    %v608 = vadd.f32 %v520, %v607
    %v609 = vpop.f32.mrf.mxu0
    %v610 = vadd.f32 %v520, %v609
    %611 = vdwg.mxu0
    %v613 = vperm.slane %v326, 0
    %v631 = vunpack.c.l.b16 %v433
    %v632 = vunpack.c.l.b16 %v434
    %v633 = vunpack.c.l.b16 %v435
    %v634 = vunpack.c.l.b16 %v436
    %v635 = vunpack.c.l.b16 %v437
    %v636 = vunpack.c.l.b16 %v438
    %v637 = vunpack.c.l.b16 %v439
    %v638 = vunpack.c.l.b16 %v440
    %v639 = vunpack.c.l.b16 %v441
    %v640 = vunpack.c.l.b16 %v442
    %v641 = vunpack.c.l.b16 %v443
    %v642 = vunpack.c.l.b16 %v444
    %v643 = vunpack.c.l.b16 %v445
    %v644 = vunpack.c.l.b16 %v446
    %v645 = vunpack.c.l.b16 %v447
    %v646 = vunpack.c.l.b16 %v448
    %v647 = vrot.slane %v632, 7
    %v648 = vsel %vm469, %v647, %v631
    %v649 = vrot.slane %v633, 6
    %v650 = vsel %vm472, %v649, %v648
    %v651 = vrot.slane %v634, 5
    %v652 = vsel %vm475, %v651, %v650
    %v653 = vrot.slane %v635, 4
    %v654 = vsel %vm478, %v653, %v652
    %v655 = vrot.slane %v636, 3
    %v656 = vsel %vm481, %v655, %v654
    %v657 = vrot.slane %v637, 2
    %v658 = vsel %vm484, %v657, %v656
    %v659 = vrot.slane %v638, 1
    %v660 = vsel %vm487, %v659, %v658
    %v661 = vrot.slane %v640, 7
    %v662 = vsel %vm469, %v661, %v639
    %v663 = vrot.slane %v641, 6
    %v664 = vsel %vm472, %v663, %v662
    %v665 = vrot.slane %v642, 5
    %v666 = vsel %vm475, %v665, %v664
    %v667 = vrot.slane %v643, 4
    %v668 = vsel %vm478, %v667, %v666
    %v669 = vrot.slane %v644, 3
    %v670 = vsel %vm481, %v669, %v668
    %v671 = vrot.slane %v645, 2
    %v672 = vsel %vm484, %v671, %v670
    %v673 = vrot.slane %v646, 1
    %v674 = vsel %vm487, %v673, %v672
    %v675 = vpack.c.b16 %v674, %v660
    %v680 = vunpack.c.l.b16 %v304
    %v681 = vunpack.c.l.b16 %v305
    %v682 = vunpack.c.l.b16 %v306
    %v683 = vunpack.c.l.b16 %v307
    %v684 = vpack.c.b16 %v681, %v680
    %v685 = vpack.c.b16 %v683, %v682
    %v689 = vsel %vm502, %v675, 0
    %691 = vmatpush.bf16.msra.mxu0 0
    %692 = vmatpush.bf16.msra.mxu0 0
    %693 = vmatpush.bf16.msra.mxu0 0
    %694 = vmatpush.bf16.msra.mxu0 0
    %695 = vmatpush.bf16.msra.mxu0 0
    %696 = vmatpush.bf16.msra.mxu0 0
    %697 = vmatpush.bf16.msra.mxu0 %v685
    %698 = vmatpush.bf16.msra.mxu0 %v684
    %699 = vmatmul.bf16.gmra.mxu0 %v689
    %v700 = vpop.f32.mrf.mxu0
    %v701 = vadd.f32 %v613, %v700
    %v702 = vpop.f32.mrf.mxu0
    %v703 = vadd.f32 %v613, %v702
    %704 = vdwg.mxu0
    %v705 = vpack.c.bf16 %v516, %v516
    %v706 = vpack.c.bf16 %v610, %v608
    %v707 = vpack.c.bf16 %v703, %v701
    %vm708 = vcmask 64512
    %v710 = vsel %vm708, %v705, 0
    %v713 = vsel %vm708, %v706, 0
    %715 = vmatpush.bf16.xpose.msra.mxu0 0
    %716 = vmatpush.bf16.xpose.msra.mxu0 0
    %717 = vmatpush.bf16.xpose.msra.mxu0 0
    %718 = vmatpush.bf16.xpose.msra.mxu0 0
    %719 = vmatpush.bf16.xpose.msra.mxu0 0
    %720 = vmatpush.bf16.xpose.msra.mxu0 0
    %721 = vmatpush.bf16.xpose.msra.mxu0 0
    %722 = vmatpush.bf16.xpose.msra.mxu0 %v713
    %723 = vmatmul.bf16.gmra.mxu0 %v710
    %v724 = vpop.f32.mrf.mxu0
    %v725 = vadd.f32 0.0, %v724
    %v726 = vpop.f32.mrf.mxu0
    %727 = vdwg.mxu0
    %vm728 = vcmask 130048
    %v729 = vsel %vm728, %v725, -inf
    %730 = vmax.xlane.f32.xlu0 %v729
    %v731 = vpop.xlane.xlu0 %730
    %v732 = vsub.f32 %v725, %v731
    %v733 = vmul.f32 %v732, 1.442695
    %v734 = vpow.pop %v733
    %v735 = vsel %vm728, %v734, 0.0
    %736 = vadd.xlane.f32.xlu0 %v735
    %v737 = vpop.xlane.xlu0 %736
    %v738 = vpack.c.bf16 %v734, %v734
    %v740 = vsel %vm728, %v738, 0
    %742 = vmatpush.bf16.msra.mxu0 0
    %743 = vmatpush.bf16.msra.mxu0 0
    %744 = vmatpush.bf16.msra.mxu0 0
    %745 = vmatpush.bf16.msra.mxu0 0
    %746 = vmatpush.bf16.msra.mxu0 0
    %747 = vmatpush.bf16.msra.mxu0 0
    %748 = vmatpush.bf16.msra.mxu0 0
    %749 = vmatpush.bf16.msra.mxu0 %v707
    %750 = vmatmul.bf16.gmra.mxu0 %v740
    %v751 = vpop.f32.mrf.mxu0
    %v752 = vadd.f32 0.0, %v751
    %v753 = vpop.f32.mrf.mxu0
    %754 = vdwg.mxu0
    %v755 = vrcp.pop %v737
    %v756 = vmul.f32 %v752, %v755
    %v757 = vpack.c.bf16 %v756, %v756
    %v759 = vsel %vm708, %v757, 0
    %vm761 = vcmask 1043456
    %v763 = vsel %vm761, %v308, 0
    %765 = vmatpush.bf16.msra.mxu0 0
    %766 = vmatpush.bf16.msra.mxu0 0
    %767 = vmatpush.bf16.msra.mxu0 0
    %768 = vmatpush.bf16.msra.mxu0 0
    %769 = vmatpush.bf16.msra.mxu0 0
    %770 = vmatpush.bf16.msra.mxu0 0
    %771 = vmatpush.bf16.msra.mxu0 0
    %772 = vmatpush.bf16.msra.mxu0 %v763
    %773 = vmatmul.bf16.gmra.mxu0 %v759
    %v774 = vpop.f32.mrf.mxu0
    %v775 = vadd.f32 0.0, %v774
    %v776 = vpop.f32.mrf.mxu0
    %777 = vdwg.mxu0
    %v778 = vadd.f32 %v335, %v775
    %780 = vrot.lane.b32.xlu0 %v705, 120
    %v781 = vpop.permute.xlu0 %780
    %783 = vrot.lane.b32.xlu0 %v706, 120
    %v784 = vpop.permute.xlu0 %783
    %v786 = vsel %vm708, %v781, 0
    %v789 = vsel %vm708, %v784, 0
    %791 = vmatpush.bf16.xpose.msra.mxu0 0
    %792 = vmatpush.bf16.xpose.msra.mxu0 0
    %793 = vmatpush.bf16.xpose.msra.mxu0 0
    %794 = vmatpush.bf16.xpose.msra.mxu0 0
    %795 = vmatpush.bf16.xpose.msra.mxu0 0
    %796 = vmatpush.bf16.xpose.msra.mxu0 0
    %797 = vmatpush.bf16.xpose.msra.mxu0 0
    %798 = vmatpush.bf16.xpose.msra.mxu0 %v789
    %799 = vmatmul.bf16.gmra.mxu0 %v786
    %v800 = vpop.f32.mrf.mxu0
    %v801 = vadd.f32 0.0, %v800
    %v802 = vpop.f32.mrf.mxu0
    %803 = vdwg.mxu0
    %v804 = vsel %vm728, %v801, -inf
    %805 = vmax.xlane.f32.xlu0 %v804
    %v806 = vpop.xlane.xlu0 %805
    %v807 = vsub.f32 %v801, %v806
    %v808 = vmul.f32 %v807, 1.442695
    %v809 = vpow.pop %v808
    %v810 = vsel %vm728, %v809, 0.0
    %811 = vadd.xlane.f32.xlu0 %v810
    %v812 = vpop.xlane.xlu0 %811
    %v813 = vpack.c.bf16 %v809, %v809
    %815 = vrot.lane.b32.xlu0 %v707, 120
    %v816 = vpop.permute.xlu0 %815
    %v819 = vsel %vm728, %v813, 0
    %821 = vmatpush.bf16.msra.mxu0 0
    %822 = vmatpush.bf16.msra.mxu0 0
    %823 = vmatpush.bf16.msra.mxu0 0
    %824 = vmatpush.bf16.msra.mxu0 0
    %825 = vmatpush.bf16.msra.mxu0 0
    %826 = vmatpush.bf16.msra.mxu0 0
    %827 = vmatpush.bf16.msra.mxu0 0
    %828 = vmatpush.bf16.msra.mxu0 %v816
    %829 = vmatmul.bf16.gmra.mxu0 %v819
    %v830 = vpop.f32.mrf.mxu0
    %v831 = vadd.f32 0.0, %v830
    %v832 = vpop.f32.mrf.mxu0
    %833 = vdwg.mxu0
    %v834 = vrcp.pop %v812
    %v835 = vmul.f32 %v831, %v834
    %v836 = vpack.c.bf16 %v835, %v835
    %v838 = vsel %vm708, %v836, 0
    %v841 = vsel %vm761, %v309, 0
    %843 = vmatpush.bf16.msra.mxu0 0
    %844 = vmatpush.bf16.msra.mxu0 0
    %845 = vmatpush.bf16.msra.mxu0 0
    %846 = vmatpush.bf16.msra.mxu0 0
    %847 = vmatpush.bf16.msra.mxu0 0
    %848 = vmatpush.bf16.msra.mxu0 0
    %849 = vmatpush.bf16.msra.mxu0 0
    %850 = vmatpush.bf16.msra.mxu0 %v841
    %851 = vmatmul.bf16.gmra.mxu0 %v838
    %v852 = vpop.f32.mrf.mxu0
    %v853 = vadd.f32 0.0, %v852
    %v854 = vpop.f32.mrf.mxu0
    %855 = vdwg.mxu0
    %v856 = vadd.f32 %v778, %v853
    %857 = vrot.lane.b32.xlu0 %v705, 112
    %v858 = vpop.permute.xlu0 %857
    %859 = vrot.lane.b32.xlu0 %v706, 112
    %v860 = vpop.permute.xlu0 %859
    %v862 = vsel %vm708, %v858, 0
    %v865 = vsel %vm708, %v860, 0
    %867 = vmatpush.bf16.xpose.msra.mxu0 0
    %868 = vmatpush.bf16.xpose.msra.mxu0 0
    %869 = vmatpush.bf16.xpose.msra.mxu0 0
    %870 = vmatpush.bf16.xpose.msra.mxu0 0
    %871 = vmatpush.bf16.xpose.msra.mxu0 0
    %872 = vmatpush.bf16.xpose.msra.mxu0 0
    %873 = vmatpush.bf16.xpose.msra.mxu0 0
    %874 = vmatpush.bf16.xpose.msra.mxu0 %v865
    %875 = vmatmul.bf16.gmra.mxu0 %v862
    %v876 = vpop.f32.mrf.mxu0
    %v877 = vadd.f32 0.0, %v876
    %v878 = vpop.f32.mrf.mxu0
    %879 = vdwg.mxu0
    %v880 = vsel %vm728, %v877, -inf
    %881 = vmax.xlane.f32.xlu0 %v880
    %v882 = vpop.xlane.xlu0 %881
    %v883 = vsub.f32 %v877, %v882
    %v884 = vmul.f32 %v883, 1.442695
    %v885 = vpow.pop %v884
    %v886 = vsel %vm728, %v885, 0.0
    %887 = vadd.xlane.f32.xlu0 %v886
    %v888 = vpop.xlane.xlu0 %887
    %v889 = vpack.c.bf16 %v885, %v885
    %890 = vrot.lane.b32.xlu0 %v707, 112
    %v891 = vpop.permute.xlu0 %890
    %v894 = vsel %vm728, %v889, 0
    %896 = vmatpush.bf16.msra.mxu0 0
    %897 = vmatpush.bf16.msra.mxu0 0
    %898 = vmatpush.bf16.msra.mxu0 0
    %899 = vmatpush.bf16.msra.mxu0 0
    %900 = vmatpush.bf16.msra.mxu0 0
    %901 = vmatpush.bf16.msra.mxu0 0
    %902 = vmatpush.bf16.msra.mxu0 0
    %903 = vmatpush.bf16.msra.mxu0 %v891
    %904 = vmatmul.bf16.gmra.mxu0 %v894
    %v905 = vpop.f32.mrf.mxu0
    %v906 = vadd.f32 0.0, %v905
    %v907 = vpop.f32.mrf.mxu0
    %908 = vdwg.mxu0
    %v909 = vrcp.pop %v888
    %v910 = vmul.f32 %v906, %v909
    %v911 = vpack.c.bf16 %v910, %v910
    %v913 = vsel %vm708, %v911, 0
    %v916 = vsel %vm761, %v310, 0
    %918 = vmatpush.bf16.msra.mxu0 0
    %919 = vmatpush.bf16.msra.mxu0 0
    %920 = vmatpush.bf16.msra.mxu0 0
    %921 = vmatpush.bf16.msra.mxu0 0
    %922 = vmatpush.bf16.msra.mxu0 0
    %923 = vmatpush.bf16.msra.mxu0 0
    %924 = vmatpush.bf16.msra.mxu0 0
    %925 = vmatpush.bf16.msra.mxu0 %v916
    %926 = vmatmul.bf16.gmra.mxu0 %v913
    %v927 = vpop.f32.mrf.mxu0
    %v928 = vadd.f32 0.0, %v927
    %v929 = vpop.f32.mrf.mxu0
    %930 = vdwg.mxu0
    %v931 = vadd.f32 %v856, %v928
    %932 = vrot.lane.b32.xlu0 %v705, 104
    %v933 = vpop.permute.xlu0 %932
    %934 = vrot.lane.b32.xlu0 %v706, 104
    %v935 = vpop.permute.xlu0 %934
    %v937 = vsel %vm708, %v933, 0
    %v940 = vsel %vm708, %v935, 0
    %942 = vmatpush.bf16.xpose.msra.mxu0 0
    %943 = vmatpush.bf16.xpose.msra.mxu0 0
    %944 = vmatpush.bf16.xpose.msra.mxu0 0
    %945 = vmatpush.bf16.xpose.msra.mxu0 0
    %946 = vmatpush.bf16.xpose.msra.mxu0 0
    %947 = vmatpush.bf16.xpose.msra.mxu0 0
    %948 = vmatpush.bf16.xpose.msra.mxu0 0
    %949 = vmatpush.bf16.xpose.msra.mxu0 %v940
    %950 = vmatmul.bf16.gmra.mxu0 %v937
    %v951 = vpop.f32.mrf.mxu0
    %v952 = vadd.f32 0.0, %v951
    %v953 = vpop.f32.mrf.mxu0
    %954 = vdwg.mxu0
    %v955 = vsel %vm728, %v952, -inf
    %956 = vmax.xlane.f32.xlu0 %v955
    %v957 = vpop.xlane.xlu0 %956
    %v958 = vsub.f32 %v952, %v957
    %v959 = vmul.f32 %v958, 1.442695
    %v960 = vpow.pop %v959
    %v961 = vsel %vm728, %v960, 0.0
    %962 = vadd.xlane.f32.xlu0 %v961
    %v963 = vpop.xlane.xlu0 %962
    %v964 = vpack.c.bf16 %v960, %v960
    %965 = vrot.lane.b32.xlu0 %v707, 104
    %v966 = vpop.permute.xlu0 %965
    %v969 = vsel %vm728, %v964, 0
    %971 = vmatpush.bf16.msra.mxu0 0
    %972 = vmatpush.bf16.msra.mxu0 0
    %973 = vmatpush.bf16.msra.mxu0 0
    %974 = vmatpush.bf16.msra.mxu0 0
    %975 = vmatpush.bf16.msra.mxu0 0
    %976 = vmatpush.bf16.msra.mxu0 0
    %977 = vmatpush.bf16.msra.mxu0 0
    %978 = vmatpush.bf16.msra.mxu0 %v966
    %979 = vmatmul.bf16.gmra.mxu0 %v969
    %v980 = vpop.f32.mrf.mxu0
    %v981 = vadd.f32 0.0, %v980
    %v982 = vpop.f32.mrf.mxu0
    %983 = vdwg.mxu0
    %v984 = vrcp.pop %v963
    %v985 = vmul.f32 %v981, %v984
    %v986 = vpack.c.bf16 %v985, %v985
    %v988 = vsel %vm708, %v986, 0
    %v991 = vsel %vm761, %v311, 0
    %993 = vmatpush.bf16.msra.mxu0 0
    %994 = vmatpush.bf16.msra.mxu0 0
    %995 = vmatpush.bf16.msra.mxu0 0
    %996 = vmatpush.bf16.msra.mxu0 0
    %997 = vmatpush.bf16.msra.mxu0 0
    %998 = vmatpush.bf16.msra.mxu0 0
    %999 = vmatpush.bf16.msra.mxu0 0
    %1000 = vmatpush.bf16.msra.mxu0 %v991
    %1001 = vmatmul.bf16.gmra.mxu0 %v988
    %v1002 = vpop.f32.mrf.mxu0
    %v1003 = vadd.f32 0.0, %v1002
    %v1004 = vpop.f32.mrf.mxu0
    %1005 = vdwg.mxu0
    %v1006 = vadd.f32 %v931, %v1003
    %v1008 = vrot.slane %v1006, 1
    %v1009 = vrot.slane %v1006, 2
    %v1010 = vrot.slane %v1006, 3
    %v1011 = vrot.slane %v1006, 4
    %v1012 = vrot.slane %v1006, 5
    %v1013 = vrot.slane %v1006, 6
    %v1014 = vrot.slane %v1006, 7
    %v1023 = vadd.f32 %v337, %v1006
    %v1024 = vadd.f32 %v338, %v1008
    %v1025 = vadd.f32 %v339, %v1009
    %v1026 = vadd.f32 %v340, %v1010
    %v1027 = vadd.f32 %v341, %v1011
    %v1028 = vadd.f32 %v342, %v1012
    %v1029 = vadd.f32 %v343, %v1013
    %v1030 = vadd.f32 %v344, %v1014
    %v1039 = vrot.slane %v1024, 7
    %v1040 = vsel %vm469, %v1039, %v1023
    %v1041 = vrot.slane %v1025, 6
    %v1042 = vsel %vm472, %v1041, %v1040
    %v1043 = vrot.slane %v1026, 5
    %v1044 = vsel %vm475, %v1043, %v1042
    %v1045 = vrot.slane %v1027, 4
    %v1046 = vsel %vm478, %v1045, %v1044
    %v1047 = vrot.slane %v1028, 3
    %v1048 = vsel %vm481, %v1047, %v1046
    %v1049 = vrot.slane %v1029, 2
    %v1050 = vsel %vm484, %v1049, %v1048
    %v1051 = vrot.slane %v1030, 1
    %v1052 = vsel %vm487, %v1051, %v1050
    %v1054 = vsel %vm502, %v1052, 0.0
    %1055 = vadd.xlane.f32.xlu0 %v1054
    %v1056 = vpop.xlane.xlu0 %1055
    %v1057 = vrcp.pop 32.0
    %v1058 = vmul.f32 32.0, %v1057
    %v1059 = vsub.f32 1.0, %v1058
    %v1060 = vmul.f32 %v1057, %v1059
    %v1061 = vadd.f32 %v1057, %v1060
    %vm1062 = vweird.f32 %v1057
    %v1063 = vsel %vm1062, %v1057, %v1061
    %v1064 = vmul.f32 %v1056, %v1063
    %v1066 = vrot.slane %v1064, 1
    %v1067 = vrot.slane %v1064, 2
    %v1068 = vrot.slane %v1064, 3
    %v1069 = vrot.slane %v1064, 4
    %v1070 = vrot.slane %v1064, 5
    %v1071 = vrot.slane %v1064, 6
    %v1072 = vrot.slane %v1064, 7
    %v1081 = vsub.f32 %v1023, %v1064
    %v1082 = vsub.f32 %v1024, %v1066
    %v1083 = vsub.f32 %v1025, %v1067
    %v1084 = vsub.f32 %v1026, %v1068
    %v1085 = vsub.f32 %v1027, %v1069
    %v1086 = vsub.f32 %v1028, %v1070
    %v1087 = vsub.f32 %v1029, %v1071
    %v1088 = vsub.f32 %v1030, %v1072
    %v1089 = vmul.f32 %v1081, %v1081
    %v1090 = vmul.f32 %v1082, %v1082
    %v1091 = vmul.f32 %v1083, %v1083
    %v1092 = vmul.f32 %v1084, %v1084
    %v1093 = vmul.f32 %v1085, %v1085
    %v1094 = vmul.f32 %v1086, %v1086
    %v1095 = vmul.f32 %v1087, %v1087
    %v1096 = vmul.f32 %v1088, %v1088
    %v1105 = vrot.slane %v1090, 7
    %v1106 = vsel %vm469, %v1105, %v1089
    %v1107 = vrot.slane %v1091, 6
    %v1108 = vsel %vm472, %v1107, %v1106
    %v1109 = vrot.slane %v1092, 5
    %v1110 = vsel %vm475, %v1109, %v1108
    %v1111 = vrot.slane %v1093, 4
    %v1112 = vsel %vm478, %v1111, %v1110
    %v1113 = vrot.slane %v1094, 3
    %v1114 = vsel %vm481, %v1113, %v1112
    %v1115 = vrot.slane %v1095, 2
    %v1116 = vsel %vm484, %v1115, %v1114
    %v1117 = vrot.slane %v1096, 1
    %v1118 = vsel %vm487, %v1117, %v1116
    %v1120 = vsel %vm502, %v1118, 0.0
    %1121 = vadd.xlane.f32.xlu0 %v1120
    %v1122 = vpop.xlane.xlu0 %1121
    %v1123 = vmul.f32 %v1122, %v1063
    %v1124 = vadd.f32 %v1123, 1e-05
    %v1125 = vrsqrt.pop %v1124
    %v1126 = vmul.f32 %v1125, %v1124
    %v1127 = vmul.f32 %v1126, %v1125
    %v1128 = vmul.f32 0.5, %v1127
    %v1129 = vsub.f32 1.5, %v1128
    %v1130 = vmul.f32 %v1125, %v1129
    %vm1131 = vweird.f32 %v1124
    %vm1132 = vweird.f32 %v1125
    %vm1133 = vmor %vm1131, %vm1132
    %v1134 = vsel %vm1133, %v1125, %v1130
    %v1136 = vrot.slane %v1134, 1
    %v1137 = vrot.slane %v1134, 2
    %v1138 = vrot.slane %v1134, 3
    %v1139 = vrot.slane %v1134, 4
    %v1140 = vrot.slane %v1134, 5
    %v1141 = vrot.slane %v1134, 6
    %v1142 = vrot.slane %v1134, 7
    %v1151 = vmul.f32 %v1081, %v1134
    %v1152 = vmul.f32 %v1082, %v1136
    %v1153 = vmul.f32 %v1083, %v1137
    %v1154 = vmul.f32 %v1084, %v1138
    %v1155 = vmul.f32 %v1085, %v1139
    %v1156 = vmul.f32 %v1086, %v1140
    %v1157 = vmul.f32 %v1087, %v1141
    %v1158 = vmul.f32 %v1088, %v1142
    %v1160 = vperm.slane %v329, 0
    %v1162 = vmul.f32 %v1151, %v1160
    %v1163 = vmul.f32 %v1152, %v1160
    %v1164 = vmul.f32 %v1153, %v1160
    %v1165 = vmul.f32 %v1154, %v1160
    %v1166 = vmul.f32 %v1155, %v1160
    %v1167 = vmul.f32 %v1156, %v1160
    %v1168 = vmul.f32 %v1157, %v1160
    %v1169 = vmul.f32 %v1158, %v1160
    %v1171 = vperm.slane %v330, 0
    %v1173 = vadd.f32 %v1162, %v1171
    %v1174 = vadd.f32 %v1163, %v1171
    %v1175 = vadd.f32 %v1164, %v1171
    %v1176 = vadd.f32 %v1165, %v1171
    %v1177 = vadd.f32 %v1166, %v1171
    %v1178 = vadd.f32 %v1167, %v1171
    %v1179 = vadd.f32 %v1168, %v1171
    %v1180 = vadd.f32 %v1169, %v1171
    %v1181 = vpack.c.bf16 %v1173, %v1173
    %v1182 = vpack.c.bf16 %v1174, %v1174
    %v1183 = vpack.c.bf16 %v1175, %v1175
    %v1184 = vpack.c.bf16 %v1176, %v1176
    %v1185 = vpack.c.bf16 %v1177, %v1177
    %v1186 = vpack.c.bf16 %v1178, %v1178
    %v1187 = vpack.c.bf16 %v1179, %v1179
    %v1188 = vpack.c.bf16 %v1180, %v1180
    %v1190 = vperm.slane %v327, 0
    %v1200 = vunpack.c.l.b16 %v1181
    %v1201 = vunpack.c.l.b16 %v1182
    %v1202 = vunpack.c.l.b16 %v1183
    %v1203 = vunpack.c.l.b16 %v1184
    %v1204 = vunpack.c.l.b16 %v1185
    %v1205 = vunpack.c.l.b16 %v1186
    %v1206 = vunpack.c.l.b16 %v1187
    %v1207 = vunpack.c.l.b16 %v1188
    %v1208 = vrot.slane %v1201, 7
    %v1209 = vsel %vm469, %v1208, %v1200
    %v1210 = vrot.slane %v1202, 6
    %v1211 = vsel %vm472, %v1210, %v1209
    %v1212 = vrot.slane %v1203, 5
    %v1213 = vsel %vm475, %v1212, %v1211
    %v1214 = vrot.slane %v1204, 4
    %v1215 = vsel %vm478, %v1214, %v1213
    %v1216 = vrot.slane %v1205, 3
    %v1217 = vsel %vm481, %v1216, %v1215
    %v1218 = vrot.slane %v1206, 2
    %v1219 = vsel %vm484, %v1218, %v1217
    %v1220 = vrot.slane %v1207, 1
    %v1221 = vsel %vm487, %v1220, %v1219
    %v1222 = vpack.c.b16 %v1221, %v1221
    %v1227 = vunpack.c.l.b16 %v312
    %v1228 = vunpack.c.l.b16 %v313
    %v1229 = vunpack.c.l.b16 %v314
    %v1230 = vunpack.c.l.b16 %v315
    %v1231 = vpack.c.b16 %v1228, %v1227
    %v1232 = vpack.c.b16 %v1230, %v1229
    %v1236 = vsel %vm502, %v1222, 0
    %1238 = vmatpush.bf16.msra.mxu0 0
    %1239 = vmatpush.bf16.msra.mxu0 0
    %1240 = vmatpush.bf16.msra.mxu0 0
    %1241 = vmatpush.bf16.msra.mxu0 0
    %1242 = vmatpush.bf16.msra.mxu0 0
    %1243 = vmatpush.bf16.msra.mxu0 0
    %1244 = vmatpush.bf16.msra.mxu0 %v1232
    %1245 = vmatpush.bf16.msra.mxu0 %v1231
    %1246 = vmatmul.bf16.gmra.mxu0 %v1236
    %v1247 = vpop.f32.mrf.mxu0
    %v1248 = vadd.f32 %v1190, %v1247
    %v1249 = vpop.f32.mrf.mxu0
    %1250 = vdwg.mxu0
    %v1251 = vmax.f32 %v1248, 0.0
    %v1252 = vpack.c.bf16 %v1251, %v1251
    %v1254 = vperm.slane %v328, 0
    %v1264 = vunpack.c.l.b16 %v316
    %v1265 = vunpack.c.l.b16 %v317
    %v1266 = vunpack.c.l.b16 %v318
    %v1267 = vunpack.c.l.b16 %v319
    %v1268 = vunpack.c.l.b16 %v320
    %v1269 = vunpack.c.l.b16 %v321
    %v1270 = vunpack.c.l.b16 %v322
    %v1271 = vunpack.c.l.b16 %v323
    %v1272 = vpack.c.b16 %v1265, %v1264
    %v1273 = vpack.c.b16 %v1267, %v1266
    %v1274 = vpack.c.b16 %v1269, %v1268
    %v1275 = vpack.c.b16 %v1271, %v1270
    %vm1280 = vcmask 523264
    %v1282 = vsel %vm1280, %v1252, 0
    %1284 = vmatpush.bf16.msra.mxu0 0
    %1285 = vmatpush.bf16.msra.mxu0 0
    %1286 = vmatpush.bf16.msra.mxu0 0
    %1287 = vmatpush.bf16.msra.mxu0 0
    %1288 = vmatpush.bf16.msra.mxu0 %v1275
    %1289 = vmatpush.bf16.msra.mxu0 %v1274
    %1290 = vmatpush.bf16.msra.mxu0 %v1273
    %1291 = vmatpush.bf16.msra.mxu0 %v1272
    %1292 = vmatmul.bf16.gmra.mxu0 %v1282
    %v1293 = vpop.f32.mrf.mxu0
    %v1294 = vadd.f32 %v1254, %v1293
    %v1295 = vpop.f32.mrf.mxu0
    %1296 = vdwg.mxu0
    %v1298 = vrot.slane %v1294, 1
    %v1299 = vrot.slane %v1294, 2
    %v1300 = vrot.slane %v1294, 3
    %v1301 = vrot.slane %v1294, 4
    %v1302 = vrot.slane %v1294, 5
    %v1303 = vrot.slane %v1294, 6
    %v1304 = vrot.slane %v1294, 7
    %v1313 = vadd.f32 %v1173, %v1294
    %v1314 = vadd.f32 %v1174, %v1298
    %v1315 = vadd.f32 %v1175, %v1299
    %v1316 = vadd.f32 %v1176, %v1300
    %v1317 = vadd.f32 %v1177, %v1301
    %v1318 = vadd.f32 %v1178, %v1302
    %v1319 = vadd.f32 %v1179, %v1303
    %v1320 = vadd.f32 %v1180, %v1304
    %v1329 = vrot.slane %v1314, 7
    %v1330 = vsel %vm469, %v1329, %v1313
    %v1331 = vrot.slane %v1315, 6
    %v1332 = vsel %vm472, %v1331, %v1330
    %v1333 = vrot.slane %v1316, 5
    %v1334 = vsel %vm475, %v1333, %v1332
    %v1335 = vrot.slane %v1317, 4
    %v1336 = vsel %vm478, %v1335, %v1334
    %v1337 = vrot.slane %v1318, 3
    %v1338 = vsel %vm481, %v1337, %v1336
    %v1339 = vrot.slane %v1319, 2
    %v1340 = vsel %vm484, %v1339, %v1338
    %v1341 = vrot.slane %v1320, 1
    %v1342 = vsel %vm487, %v1341, %v1340
    %v1344 = vsel %vm502, %v1342, 0.0
    %1345 = vadd.xlane.f32.xlu0 %v1344
    %v1346 = vpop.xlane.xlu0 %1345
    %v1347 = vmul.f32 %v1346, %v1063
    %v1349 = vrot.slane %v1347, 1
    %v1350 = vrot.slane %v1347, 2
    %v1351 = vrot.slane %v1347, 3
    %v1352 = vrot.slane %v1347, 4
    %v1353 = vrot.slane %v1347, 5
    %v1354 = vrot.slane %v1347, 6
    %v1355 = vrot.slane %v1347, 7
    %v1364 = vsub.f32 %v1313, %v1347
    %v1365 = vsub.f32 %v1314, %v1349
    %v1366 = vsub.f32 %v1315, %v1350
    %v1367 = vsub.f32 %v1316, %v1351
    %v1368 = vsub.f32 %v1317, %v1352
    %v1369 = vsub.f32 %v1318, %v1353
    %v1370 = vsub.f32 %v1319, %v1354
    %v1371 = vsub.f32 %v1320, %v1355
    %v1372 = vmul.f32 %v1364, %v1364
    %v1373 = vmul.f32 %v1365, %v1365
    %v1374 = vmul.f32 %v1366, %v1366
    %v1375 = vmul.f32 %v1367, %v1367
    %v1376 = vmul.f32 %v1368, %v1368
    %v1377 = vmul.f32 %v1369, %v1369
    %v1378 = vmul.f32 %v1370, %v1370
    %v1379 = vmul.f32 %v1371, %v1371
    %v1388 = vrot.slane %v1373, 7
    %v1389 = vsel %vm469, %v1388, %v1372
    %v1390 = vrot.slane %v1374, 6
    %v1391 = vsel %vm472, %v1390, %v1389
    %v1392 = vrot.slane %v1375, 5
    %v1393 = vsel %vm475, %v1392, %v1391
    %v1394 = vrot.slane %v1376, 4
    %v1395 = vsel %vm478, %v1394, %v1393
    %v1396 = vrot.slane %v1377, 3
    %v1397 = vsel %vm481, %v1396, %v1395
    %v1398 = vrot.slane %v1378, 2
    %v1399 = vsel %vm484, %v1398, %v1397
    %v1400 = vrot.slane %v1379, 1
    %v1401 = vsel %vm487, %v1400, %v1399
    %v1403 = vsel %vm502, %v1401, 0.0
    %1404 = vadd.xlane.f32.xlu0 %v1403
    %v1405 = vpop.xlane.xlu0 %1404
    %v1406 = vmul.f32 %v1405, %v1063
    %v1407 = vadd.f32 %v1406, 1e-05
    %v1408 = vrsqrt.pop %v1407
    %v1409 = vmul.f32 %v1408, %v1407
    %v1410 = vmul.f32 %v1409, %v1408
    %v1411 = vmul.f32 0.5, %v1410
    %v1412 = vsub.f32 1.5, %v1411
    %v1413 = vmul.f32 %v1408, %v1412
    %vm1414 = vweird.f32 %v1407
    %vm1415 = vweird.f32 %v1408
    %vm1416 = vmor %vm1414, %vm1415
    %v1417 = vsel %vm1416, %v1408, %v1413
    %v1419 = vrot.slane %v1417, 1
    %v1420 = vrot.slane %v1417, 2
    %v1421 = vrot.slane %v1417, 3
    %v1422 = vrot.slane %v1417, 4
    %v1423 = vrot.slane %v1417, 5
    %v1424 = vrot.slane %v1417, 6
    %v1425 = vrot.slane %v1417, 7
    %v1434 = vmul.f32 %v1364, %v1417
    %v1435 = vmul.f32 %v1365, %v1419
    %v1436 = vmul.f32 %v1366, %v1420
    %v1437 = vmul.f32 %v1367, %v1421
    %v1438 = vmul.f32 %v1368, %v1422
    %v1439 = vmul.f32 %v1369, %v1423
    %v1440 = vmul.f32 %v1370, %v1424
    %v1441 = vmul.f32 %v1371, %v1425
    %v1443 = vperm.slane %v331, 0
    %v1445 = vmul.f32 %v1434, %v1443
    %v1446 = vmul.f32 %v1435, %v1443
    %v1447 = vmul.f32 %v1436, %v1443
    %v1448 = vmul.f32 %v1437, %v1443
    %v1449 = vmul.f32 %v1438, %v1443
    %v1450 = vmul.f32 %v1439, %v1443
    %v1451 = vmul.f32 %v1440, %v1443
    %v1452 = vmul.f32 %v1441, %v1443
    %v1454 = vperm.slane %v332, 0
    %v1456 = vadd.f32 %v1445, %v1454
    %v1457 = vadd.f32 %v1446, %v1454
    %v1458 = vadd.f32 %v1447, %v1454
    %v1459 = vadd.f32 %v1448, %v1454
    %v1460 = vadd.f32 %v1449, %v1454
    %v1461 = vadd.f32 %v1450, %v1454
    %v1462 = vadd.f32 %v1451, %v1454
    %v1463 = vadd.f32 %v1452, %v1454
    %vm1464 = vcmask 253952
    %1465 = vst.msk [vmem:[#allocation28] sm:$0x1] %vm1464, %v1456
    %1466 = vst.msk [vmem:[#allocation28 + $0x2] sm:$0x1] %vm1464, %v1457
    %1467 = vst.msk [vmem:[#allocation28 + $0x4] sm:$0x1] %vm1464, %v1458
    %1468 = vst.msk [vmem:[#allocation28 + $0x6] sm:$0x1] %vm1464, %v1459
    %1469 = vst.msk [vmem:[#allocation28 + $0x8] sm:$0x1] %vm1464, %v1460
    %1470 = vst.msk [vmem:[#allocation28 + $0xa] sm:$0x1] %vm1464, %v1461
    %1471 = vst.msk [vmem:[#allocation28 + $0xc] sm:$0x1] %vm1464, %v1462
    %1472 = vst.msk [vmem:[#allocation28 + $0xe] sm:$0x1] %vm1464, %v1463
    %v1473 = vld [vmem:[%s0 + $0x1] sm:$0x1]
    %v1474 = vld [vmem:[%s0 + $0x3] sm:$0x1]
    %v1475 = vld [vmem:[%s0 + $0x5] sm:$0x1]
    %v1476 = vld [vmem:[%s0 + $0x7] sm:$0x1]
    %v1477 = vld [vmem:[%s0 + $0x9] sm:$0x1]
    %v1478 = vld [vmem:[%s0 + $0xb] sm:$0x1]
    %v1479 = vld [vmem:[%s0 + $0xd] sm:$0x1]
    %v1480 = vld [vmem:[%s0 + $0xf] sm:$0x1]
    %v1481 = vld [vmem:[#allocation2 + $0x1] sm:$0x1]
    %v1482 = vld [vmem:[#allocation2 + $0x3] sm:$0x1]
    %v1483 = vld [vmem:[#allocation2 + $0x5] sm:$0x1]
    %v1484 = vld [vmem:[#allocation2 + $0x7] sm:$0x1]
    %v1485 = vld [vmem:[#allocation2 + $0x9] sm:$0x1]
    %v1486 = vld [vmem:[#allocation2 + $0xb] sm:$0x1]
    %v1487 = vld [vmem:[#allocation2 + $0xd] sm:$0x1]
    %v1488 = vld [vmem:[#allocation2 + $0xf] sm:$0x1]
    %v1489 = vadd.f32 %v1473, %v1481
    %v1490 = vadd.f32 %v1474, %v1482
    %v1491 = vadd.f32 %v1475, %v1483
    %v1492 = vadd.f32 %v1476, %v1484
    %v1493 = vadd.f32 %v1477, %v1485
    %v1494 = vadd.f32 %v1478, %v1486
    %v1495 = vadd.f32 %v1479, %v1487
    %v1496 = vadd.f32 %v1480, %v1488
    %v1497 = vpack.c.bf16 %v1489, %v1489
    %v1498 = vpack.c.bf16 %v1490, %v1490
    %v1499 = vpack.c.bf16 %v1491, %v1491
    %v1500 = vpack.c.bf16 %v1492, %v1492
    %v1501 = vpack.c.bf16 %v1493, %v1493
    %v1502 = vpack.c.bf16 %v1494, %v1494
    %v1503 = vpack.c.bf16 %v1495, %v1495
    %v1504 = vpack.c.bf16 %v1496, %v1496
    %v1505 = vld [vmem:[%s2 + $0x1] sm:$0x1]
    %v1506 = vld [vmem:[%s2 + $0x3] sm:$0x1]
    %v1507 = vld [vmem:[%s2 + $0x5] sm:$0x1]
    %v1508 = vld [vmem:[%s2 + $0x7] sm:$0x1]
    %v1509 = vld [vmem:[%s2 + $0x9] sm:$0x1]
    %v1510 = vld [vmem:[%s2 + $0xb] sm:$0x1]
    %v1511 = vld [vmem:[%s2 + $0xd] sm:$0x1]
    %v1512 = vld [vmem:[%s2 + $0xf] sm:$0x1]
    %v1513 = vld [vmem:[%s2 + $0x11] sm:$0x1]
    %v1514 = vld [vmem:[%s2 + $0x13] sm:$0x1]
    %v1515 = vld [vmem:[%s2 + $0x15] sm:$0x1]
    %v1516 = vld [vmem:[%s2 + $0x17] sm:$0x1]
    %v1517 = vld [vmem:[%s2 + $0x19] sm:$0x1]
    %v1518 = vld [vmem:[%s2 + $0x1b] sm:$0x1]
    %v1519 = vld [vmem:[%s2 + $0x1d] sm:$0x1]
    %v1520 = vld [vmem:[%s2 + $0x1f] sm:$0x1]
    %v1521 = vld [vmem:[#allocation5 + $0x1] sm:$0x1]
    %v1522 = vld [vmem:[#allocation5 + $0x3] sm:$0x1]
    %v1523 = vld [vmem:[#allocation5 + $0x5] sm:$0x1]
    %v1524 = vld [vmem:[#allocation5 + $0x7] sm:$0x1]
    %v1525 = vld [vmem:[#allocation5 + $0x9] sm:$0x1]
    %v1526 = vld [vmem:[#allocation5 + $0xb] sm:$0x1]
    %v1527 = vld [vmem:[#allocation5 + $0xd] sm:$0x1]
    %v1528 = vld [vmem:[#allocation5 + $0xf] sm:$0x1]
    %v1529 = vld [vmem:[#allocation5 + $0x11] sm:$0x1]
    %v1530 = vld [vmem:[#allocation5 + $0x13] sm:$0x1]
    %v1531 = vld [vmem:[#allocation5 + $0x15] sm:$0x1]
    %v1532 = vld [vmem:[#allocation5 + $0x17] sm:$0x1]
    %v1533 = vld [vmem:[#allocation5 + $0x19] sm:$0x1]
    %v1534 = vld [vmem:[#allocation5 + $0x1b] sm:$0x1]
    %v1535 = vld [vmem:[#allocation5 + $0x1d] sm:$0x1]
    %v1536 = vld [vmem:[#allocation5 + $0x1f] sm:$0x1]
    %v1537 = vadd.f32 %v1505, %v1521
    %v1538 = vadd.f32 %v1506, %v1522
    %v1539 = vadd.f32 %v1507, %v1523
    %v1540 = vadd.f32 %v1508, %v1524
    %v1541 = vadd.f32 %v1509, %v1525
    %v1542 = vadd.f32 %v1510, %v1526
    %v1543 = vadd.f32 %v1511, %v1527
    %v1544 = vadd.f32 %v1512, %v1528
    %v1545 = vadd.f32 %v1513, %v1529
    %v1546 = vadd.f32 %v1514, %v1530
    %v1547 = vadd.f32 %v1515, %v1531
    %v1548 = vadd.f32 %v1516, %v1532
    %v1549 = vadd.f32 %v1517, %v1533
    %v1550 = vadd.f32 %v1518, %v1534
    %v1551 = vadd.f32 %v1519, %v1535
    %v1552 = vadd.f32 %v1520, %v1536
    %v1553 = vpack.c.bf16 %v1537, %v1537
    %v1554 = vpack.c.bf16 %v1538, %v1538
    %v1555 = vpack.c.bf16 %v1539, %v1539
    %v1556 = vpack.c.bf16 %v1540, %v1540
    %v1557 = vpack.c.bf16 %v1541, %v1541
    %v1558 = vpack.c.bf16 %v1542, %v1542
    %v1559 = vpack.c.bf16 %v1543, %v1543
    %v1560 = vpack.c.bf16 %v1544, %v1544
    %v1561 = vpack.c.bf16 %v1545, %v1545
    %v1562 = vpack.c.bf16 %v1546, %v1546
    %v1563 = vpack.c.bf16 %v1547, %v1547
    %v1564 = vpack.c.bf16 %v1548, %v1548
    %v1565 = vpack.c.bf16 %v1549, %v1549
    %v1566 = vpack.c.bf16 %v1550, %v1550
    %v1567 = vpack.c.bf16 %v1551, %v1551
    %v1568 = vpack.c.bf16 %v1552, %v1552
    %v1569 = vpack.c.bf16 %v1505, %v1505
    %v1570 = vpack.c.bf16 %v1506, %v1506
    %v1571 = vpack.c.bf16 %v1507, %v1507
    %v1572 = vpack.c.bf16 %v1508, %v1508
    %v1573 = vpack.c.bf16 %v1509, %v1509
    %v1574 = vpack.c.bf16 %v1510, %v1510
    %v1575 = vpack.c.bf16 %v1511, %v1511
    %v1576 = vpack.c.bf16 %v1512, %v1512
    %v1577 = vpack.c.bf16 %v1513, %v1513
    %v1578 = vpack.c.bf16 %v1514, %v1514
    %v1579 = vpack.c.bf16 %v1515, %v1515
    %v1580 = vpack.c.bf16 %v1516, %v1516
    %v1581 = vpack.c.bf16 %v1517, %v1517
    %v1582 = vpack.c.bf16 %v1518, %v1518
    %v1583 = vpack.c.bf16 %v1519, %v1519
    %v1584 = vpack.c.bf16 %v1520, %v1520
    %v1593 = vunpack.c.l.b16 %v1497
    %v1594 = vunpack.c.l.b16 %v1498
    %v1595 = vunpack.c.l.b16 %v1499
    %v1596 = vunpack.c.l.b16 %v1500
    %v1597 = vunpack.c.l.b16 %v1501
    %v1598 = vunpack.c.l.b16 %v1502
    %v1599 = vunpack.c.l.b16 %v1503
    %v1600 = vunpack.c.l.b16 %v1504
    %v1601 = vrot.slane %v1594, 7
    %v1602 = vsel %vm469, %v1601, %v1593
    %v1603 = vrot.slane %v1595, 6
    %v1604 = vsel %vm472, %v1603, %v1602
    %v1605 = vrot.slane %v1596, 5
    %v1606 = vsel %vm475, %v1605, %v1604
    %v1607 = vrot.slane %v1597, 4
    %v1608 = vsel %vm478, %v1607, %v1606
    %v1609 = vrot.slane %v1598, 3
    %v1610 = vsel %vm481, %v1609, %v1608
    %v1611 = vrot.slane %v1599, 2
    %v1612 = vsel %vm484, %v1611, %v1610
    %v1613 = vrot.slane %v1600, 1
    %v1614 = vsel %vm487, %v1613, %v1612
    %v1615 = vpack.c.b16 %v1614, %v1614
    %v1617 = vsel %vm502, %v1615, 0
    %1619 = vmatpush.bf16.msra.mxu0 0
    %1620 = vmatpush.bf16.msra.mxu0 0
    %1621 = vmatpush.bf16.msra.mxu0 0
    %1622 = vmatpush.bf16.msra.mxu0 0
    %1623 = vmatpush.bf16.msra.mxu0 0
    %1624 = vmatpush.bf16.msra.mxu0 0
    %1625 = vmatpush.bf16.msra.mxu0 %v499
    %1626 = vmatpush.bf16.msra.mxu0 %v498
    %1627 = vmatmul.bf16.gmra.mxu0 %v1617
    %v1628 = vpop.f32.mrf.mxu0
    %v1629 = vadd.f32 %v450, %v1628
    %v1630 = vpop.f32.mrf.mxu0
    %1631 = vdwg.mxu0
    %v1648 = vunpack.c.l.b16 %v1553
    %v1649 = vunpack.c.l.b16 %v1554
    %v1650 = vunpack.c.l.b16 %v1555
    %v1651 = vunpack.c.l.b16 %v1556
    %v1652 = vunpack.c.l.b16 %v1557
    %v1653 = vunpack.c.l.b16 %v1558
    %v1654 = vunpack.c.l.b16 %v1559
    %v1655 = vunpack.c.l.b16 %v1560
    %v1656 = vunpack.c.l.b16 %v1561
    %v1657 = vunpack.c.l.b16 %v1562
    %v1658 = vunpack.c.l.b16 %v1563
    %v1659 = vunpack.c.l.b16 %v1564
    %v1660 = vunpack.c.l.b16 %v1565
    %v1661 = vunpack.c.l.b16 %v1566
    %v1662 = vunpack.c.l.b16 %v1567
    %v1663 = vunpack.c.l.b16 %v1568
    %v1664 = vrot.slane %v1649, 7
    %v1665 = vsel %vm469, %v1664, %v1648
    %v1666 = vrot.slane %v1650, 6
    %v1667 = vsel %vm472, %v1666, %v1665
    %v1668 = vrot.slane %v1651, 5
    %v1669 = vsel %vm475, %v1668, %v1667
    %v1670 = vrot.slane %v1652, 4
    %v1671 = vsel %vm478, %v1670, %v1669
    %v1672 = vrot.slane %v1653, 3
    %v1673 = vsel %vm481, %v1672, %v1671
    %v1674 = vrot.slane %v1654, 2
    %v1675 = vsel %vm484, %v1674, %v1673
    %v1676 = vrot.slane %v1655, 1
    %v1677 = vsel %vm487, %v1676, %v1675
    %v1678 = vrot.slane %v1657, 7
    %v1679 = vsel %vm469, %v1678, %v1656
    %v1680 = vrot.slane %v1658, 6
    %v1681 = vsel %vm472, %v1680, %v1679
    %v1682 = vrot.slane %v1659, 5
    %v1683 = vsel %vm475, %v1682, %v1681
    %v1684 = vrot.slane %v1660, 4
    %v1685 = vsel %vm478, %v1684, %v1683
    %v1686 = vrot.slane %v1661, 3
    %v1687 = vsel %vm481, %v1686, %v1685
    %v1688 = vrot.slane %v1662, 2
    %v1689 = vsel %vm484, %v1688, %v1687
    %v1690 = vrot.slane %v1663, 1
    %v1691 = vsel %vm487, %v1690, %v1689
    %v1692 = vpack.c.b16 %v1691, %v1677
    %v1694 = vsel %vm502, %v1692, 0
    %1696 = vmatpush.bf16.msra.mxu0 0
    %1697 = vmatpush.bf16.msra.mxu0 0
    %1698 = vmatpush.bf16.msra.mxu0 0
    %1699 = vmatpush.bf16.msra.mxu0 0
    %1700 = vmatpush.bf16.msra.mxu0 0
    %1701 = vmatpush.bf16.msra.mxu0 0
    %1702 = vmatpush.bf16.msra.mxu0 %v592
    %1703 = vmatpush.bf16.msra.mxu0 %v591
    %1704 = vmatmul.bf16.gmra.mxu0 %v1694
    %v1705 = vpop.f32.mrf.mxu0
    %v1706 = vadd.f32 %v520, %v1705
    %v1707 = vpop.f32.mrf.mxu0
    %v1708 = vadd.f32 %v520, %v1707
    %1709 = vdwg.mxu0
    %v1726 = vunpack.c.l.b16 %v1569
    %v1727 = vunpack.c.l.b16 %v1570
    %v1728 = vunpack.c.l.b16 %v1571
    %v1729 = vunpack.c.l.b16 %v1572
    %v1730 = vunpack.c.l.b16 %v1573
    %v1731 = vunpack.c.l.b16 %v1574
    %v1732 = vunpack.c.l.b16 %v1575
    %v1733 = vunpack.c.l.b16 %v1576
    %v1734 = vunpack.c.l.b16 %v1577
    %v1735 = vunpack.c.l.b16 %v1578
    %v1736 = vunpack.c.l.b16 %v1579
    %v1737 = vunpack.c.l.b16 %v1580
    %v1738 = vunpack.c.l.b16 %v1581
    %v1739 = vunpack.c.l.b16 %v1582
    %v1740 = vunpack.c.l.b16 %v1583
    %v1741 = vunpack.c.l.b16 %v1584
    %v1742 = vrot.slane %v1727, 7
    %v1743 = vsel %vm469, %v1742, %v1726
    %v1744 = vrot.slane %v1728, 6
    %v1745 = vsel %vm472, %v1744, %v1743
    %v1746 = vrot.slane %v1729, 5
    %v1747 = vsel %vm475, %v1746, %v1745
    %v1748 = vrot.slane %v1730, 4
    %v1749 = vsel %vm478, %v1748, %v1747
    %v1750 = vrot.slane %v1731, 3
    %v1751 = vsel %vm481, %v1750, %v1749
    %v1752 = vrot.slane %v1732, 2
    %v1753 = vsel %vm484, %v1752, %v1751
    %v1754 = vrot.slane %v1733, 1
    %v1755 = vsel %vm487, %v1754, %v1753
    %v1756 = vrot.slane %v1735, 7
    %v1757 = vsel %vm469, %v1756, %v1734
    %v1758 = vrot.slane %v1736, 6
    %v1759 = vsel %vm472, %v1758, %v1757
    %v1760 = vrot.slane %v1737, 5
    %v1761 = vsel %vm475, %v1760, %v1759
    %v1762 = vrot.slane %v1738, 4
    %v1763 = vsel %vm478, %v1762, %v1761
    %v1764 = vrot.slane %v1739, 3
    %v1765 = vsel %vm481, %v1764, %v1763
    %v1766 = vrot.slane %v1740, 2
    %v1767 = vsel %vm484, %v1766, %v1765
    %v1768 = vrot.slane %v1741, 1
    %v1769 = vsel %vm487, %v1768, %v1767
    %v1770 = vpack.c.b16 %v1769, %v1755
    %v1772 = vsel %vm502, %v1770, 0
    %1774 = vmatpush.bf16.msra.mxu0 0
    %1775 = vmatpush.bf16.msra.mxu0 0
    %1776 = vmatpush.bf16.msra.mxu0 0
    %1777 = vmatpush.bf16.msra.mxu0 0
    %1778 = vmatpush.bf16.msra.mxu0 0
    %1779 = vmatpush.bf16.msra.mxu0 0
    %1780 = vmatpush.bf16.msra.mxu0 %v685
    %1781 = vmatpush.bf16.msra.mxu0 %v684
    %1782 = vmatmul.bf16.gmra.mxu0 %v1772
    %v1783 = vpop.f32.mrf.mxu0
    %v1784 = vadd.f32 %v613, %v1783
    %v1785 = vpop.f32.mrf.mxu0
    %v1786 = vadd.f32 %v613, %v1785
    %1787 = vdwg.mxu0
    %v1788 = vpack.c.bf16 %v1629, %v1629
    %v1789 = vpack.c.bf16 %v1708, %v1706
    %v1790 = vpack.c.bf16 %v1786, %v1784
    %v1792 = vsel %vm708, %v1788, 0
    %v1795 = vsel %vm708, %v1789, 0
    %1797 = vmatpush.bf16.xpose.msra.mxu0 0
    %1798 = vmatpush.bf16.xpose.msra.mxu0 0
    %1799 = vmatpush.bf16.xpose.msra.mxu0 0
    %1800 = vmatpush.bf16.xpose.msra.mxu0 0
    %1801 = vmatpush.bf16.xpose.msra.mxu0 0
    %1802 = vmatpush.bf16.xpose.msra.mxu0 0
    %1803 = vmatpush.bf16.xpose.msra.mxu0 0
    %1804 = vmatpush.bf16.xpose.msra.mxu0 %v1795
    %1805 = vmatmul.bf16.gmra.mxu0 %v1792
    %v1806 = vpop.f32.mrf.mxu0
    %v1807 = vadd.f32 0.0, %v1806
    %v1808 = vpop.f32.mrf.mxu0
    %1809 = vdwg.mxu0
    %v1810 = vsel %vm728, %v1807, -inf
    %1811 = vmax.xlane.f32.xlu0 %v1810
    %v1812 = vpop.xlane.xlu0 %1811
    %v1813 = vsub.f32 %v1807, %v1812
    %v1814 = vmul.f32 %v1813, 1.442695
    %v1815 = vpow.pop %v1814
    %v1816 = vsel %vm728, %v1815, 0.0
    %1817 = vadd.xlane.f32.xlu0 %v1816
    %v1818 = vpop.xlane.xlu0 %1817
    %v1819 = vpack.c.bf16 %v1815, %v1815
    %v1821 = vsel %vm728, %v1819, 0
    %1823 = vmatpush.bf16.msra.mxu0 0
    %1824 = vmatpush.bf16.msra.mxu0 0
    %1825 = vmatpush.bf16.msra.mxu0 0
    %1826 = vmatpush.bf16.msra.mxu0 0
    %1827 = vmatpush.bf16.msra.mxu0 0
    %1828 = vmatpush.bf16.msra.mxu0 0
    %1829 = vmatpush.bf16.msra.mxu0 0
    %1830 = vmatpush.bf16.msra.mxu0 %v1790
    %1831 = vmatmul.bf16.gmra.mxu0 %v1821
    %v1832 = vpop.f32.mrf.mxu0
    %v1833 = vadd.f32 0.0, %v1832
    %v1834 = vpop.f32.mrf.mxu0
    %1835 = vdwg.mxu0
    %v1836 = vrcp.pop %v1818
    %v1837 = vmul.f32 %v1833, %v1836
    %v1838 = vpack.c.bf16 %v1837, %v1837
    %v1840 = vsel %vm708, %v1838, 0
    %1842 = vmatpush.bf16.msra.mxu0 0
    %1843 = vmatpush.bf16.msra.mxu0 0
    %1844 = vmatpush.bf16.msra.mxu0 0
    %1845 = vmatpush.bf16.msra.mxu0 0
    %1846 = vmatpush.bf16.msra.mxu0 0
    %1847 = vmatpush.bf16.msra.mxu0 0
    %1848 = vmatpush.bf16.msra.mxu0 0
    %1849 = vmatpush.bf16.msra.mxu0 %v763
    %1850 = vmatmul.bf16.gmra.mxu0 %v1840
    %v1851 = vpop.f32.mrf.mxu0
    %v1852 = vadd.f32 0.0, %v1851
    %v1853 = vpop.f32.mrf.mxu0
    %1854 = vdwg.mxu0
    %v1855 = vadd.f32 %v335, %v1852
    %1857 = vrot.lane.b32.xlu0 %v1788, 120
    %v1858 = vpop.permute.xlu0 %1857
    %1860 = vrot.lane.b32.xlu0 %v1789, 120
    %v1861 = vpop.permute.xlu0 %1860
    %v1863 = vsel %vm708, %v1858, 0
    %v1866 = vsel %vm708, %v1861, 0
    %1868 = vmatpush.bf16.xpose.msra.mxu0 0
    %1869 = vmatpush.bf16.xpose.msra.mxu0 0
    %1870 = vmatpush.bf16.xpose.msra.mxu0 0
    %1871 = vmatpush.bf16.xpose.msra.mxu0 0
    %1872 = vmatpush.bf16.xpose.msra.mxu0 0
    %1873 = vmatpush.bf16.xpose.msra.mxu0 0
    %1874 = vmatpush.bf16.xpose.msra.mxu0 0
    %1875 = vmatpush.bf16.xpose.msra.mxu0 %v1866
    %1876 = vmatmul.bf16.gmra.mxu0 %v1863
    %v1877 = vpop.f32.mrf.mxu0
    %v1878 = vadd.f32 0.0, %v1877
    %v1879 = vpop.f32.mrf.mxu0
    %1880 = vdwg.mxu0
    %v1881 = vsel %vm728, %v1878, -inf
    %1882 = vmax.xlane.f32.xlu0 %v1881
    %v1883 = vpop.xlane.xlu0 %1882
    %v1884 = vsub.f32 %v1878, %v1883
    %v1885 = vmul.f32 %v1884, 1.442695
    %v1886 = vpow.pop %v1885
    %v1887 = vsel %vm728, %v1886, 0.0
    %1888 = vadd.xlane.f32.xlu0 %v1887
    %v1889 = vpop.xlane.xlu0 %1888
    %v1890 = vpack.c.bf16 %v1886, %v1886
    %1892 = vrot.lane.b32.xlu0 %v1790, 120
    %v1893 = vpop.permute.xlu0 %1892
    %v1896 = vsel %vm728, %v1890, 0
    %1898 = vmatpush.bf16.msra.mxu0 0
    %1899 = vmatpush.bf16.msra.mxu0 0
    %1900 = vmatpush.bf16.msra.mxu0 0
    %1901 = vmatpush.bf16.msra.mxu0 0
    %1902 = vmatpush.bf16.msra.mxu0 0
    %1903 = vmatpush.bf16.msra.mxu0 0
    %1904 = vmatpush.bf16.msra.mxu0 0
    %1905 = vmatpush.bf16.msra.mxu0 %v1893
    %1906 = vmatmul.bf16.gmra.mxu0 %v1896
    %v1907 = vpop.f32.mrf.mxu0
    %v1908 = vadd.f32 0.0, %v1907
    %v1909 = vpop.f32.mrf.mxu0
    %1910 = vdwg.mxu0
    %v1911 = vrcp.pop %v1889
    %v1912 = vmul.f32 %v1908, %v1911
    %v1913 = vpack.c.bf16 %v1912, %v1912
    %v1915 = vsel %vm708, %v1913, 0
    %1917 = vmatpush.bf16.msra.mxu0 0
    %1918 = vmatpush.bf16.msra.mxu0 0
    %1919 = vmatpush.bf16.msra.mxu0 0
    %1920 = vmatpush.bf16.msra.mxu0 0
    %1921 = vmatpush.bf16.msra.mxu0 0
    %1922 = vmatpush.bf16.msra.mxu0 0
    %1923 = vmatpush.bf16.msra.mxu0 0
    %1924 = vmatpush.bf16.msra.mxu0 %v841
    %1925 = vmatmul.bf16.gmra.mxu0 %v1915
    %v1926 = vpop.f32.mrf.mxu0
    %v1927 = vadd.f32 0.0, %v1926
    %v1928 = vpop.f32.mrf.mxu0
    %1929 = vdwg.mxu0
    %v1930 = vadd.f32 %v1855, %v1927
    %1931 = vrot.lane.b32.xlu0 %v1788, 112
    %v1932 = vpop.permute.xlu0 %1931
    %1933 = vrot.lane.b32.xlu0 %v1789, 112
    %v1934 = vpop.permute.xlu0 %1933
    %v1936 = vsel %vm708, %v1932, 0
    %v1939 = vsel %vm708, %v1934, 0
    %1941 = vmatpush.bf16.xpose.msra.mxu0 0
    %1942 = vmatpush.bf16.xpose.msra.mxu0 0
    %1943 = vmatpush.bf16.xpose.msra.mxu0 0
    %1944 = vmatpush.bf16.xpose.msra.mxu0 0
    %1945 = vmatpush.bf16.xpose.msra.mxu0 0
    %1946 = vmatpush.bf16.xpose.msra.mxu0 0
    %1947 = vmatpush.bf16.xpose.msra.mxu0 0
    %1948 = vmatpush.bf16.xpose.msra.mxu0 %v1939
    %1949 = vmatmul.bf16.gmra.mxu0 %v1936
    %v1950 = vpop.f32.mrf.mxu0
    %v1951 = vadd.f32 0.0, %v1950
    %v1952 = vpop.f32.mrf.mxu0
    %1953 = vdwg.mxu0
    %v1954 = vsel %vm728, %v1951, -inf
    %1955 = vmax.xlane.f32.xlu0 %v1954
    %v1956 = vpop.xlane.xlu0 %1955
    %v1957 = vsub.f32 %v1951, %v1956
    %v1958 = vmul.f32 %v1957, 1.442695
    %v1959 = vpow.pop %v1958
    %v1960 = vsel %vm728, %v1959, 0.0
    %1961 = vadd.xlane.f32.xlu0 %v1960
    %v1962 = vpop.xlane.xlu0 %1961
    %v1963 = vpack.c.bf16 %v1959, %v1959
    %1964 = vrot.lane.b32.xlu0 %v1790, 112
    %v1965 = vpop.permute.xlu0 %1964
    %v1968 = vsel %vm728, %v1963, 0
    %1970 = vmatpush.bf16.msra.mxu0 0
    %1971 = vmatpush.bf16.msra.mxu0 0
    %1972 = vmatpush.bf16.msra.mxu0 0
    %1973 = vmatpush.bf16.msra.mxu0 0
    %1974 = vmatpush.bf16.msra.mxu0 0
    %1975 = vmatpush.bf16.msra.mxu0 0
    %1976 = vmatpush.bf16.msra.mxu0 0
    %1977 = vmatpush.bf16.msra.mxu0 %v1965
    %1978 = vmatmul.bf16.gmra.mxu0 %v1968
    %v1979 = vpop.f32.mrf.mxu0
    %v1980 = vadd.f32 0.0, %v1979
    %v1981 = vpop.f32.mrf.mxu0
    %1982 = vdwg.mxu0
    %v1983 = vrcp.pop %v1962
    %v1984 = vmul.f32 %v1980, %v1983
    %v1985 = vpack.c.bf16 %v1984, %v1984
    %v1987 = vsel %vm708, %v1985, 0
    %1989 = vmatpush.bf16.msra.mxu0 0
    %1990 = vmatpush.bf16.msra.mxu0 0
    %1991 = vmatpush.bf16.msra.mxu0 0
    %1992 = vmatpush.bf16.msra.mxu0 0
    %1993 = vmatpush.bf16.msra.mxu0 0
    %1994 = vmatpush.bf16.msra.mxu0 0
    %1995 = vmatpush.bf16.msra.mxu0 0
    %1996 = vmatpush.bf16.msra.mxu0 %v916
    %1997 = vmatmul.bf16.gmra.mxu0 %v1987
    %v1998 = vpop.f32.mrf.mxu0
    %v1999 = vadd.f32 0.0, %v1998
    %v2000 = vpop.f32.mrf.mxu0
    %2001 = vdwg.mxu0
    %v2002 = vadd.f32 %v1930, %v1999
    %2003 = vrot.lane.b32.xlu0 %v1788, 104
    %v2004 = vpop.permute.xlu0 %2003
    %2005 = vrot.lane.b32.xlu0 %v1789, 104
    %v2006 = vpop.permute.xlu0 %2005
    %v2008 = vsel %vm708, %v2004, 0
    %v2011 = vsel %vm708, %v2006, 0
    %2013 = vmatpush.bf16.xpose.msra.mxu0 0
    %2014 = vmatpush.bf16.xpose.msra.mxu0 0
    %2015 = vmatpush.bf16.xpose.msra.mxu0 0
    %2016 = vmatpush.bf16.xpose.msra.mxu0 0
    %2017 = vmatpush.bf16.xpose.msra.mxu0 0
    %2018 = vmatpush.bf16.xpose.msra.mxu0 0
    %2019 = vmatpush.bf16.xpose.msra.mxu0 0
    %2020 = vmatpush.bf16.xpose.msra.mxu0 %v2011
    %2021 = vmatmul.bf16.gmra.mxu0 %v2008
    %v2022 = vpop.f32.mrf.mxu0
    %v2023 = vadd.f32 0.0, %v2022
    %v2024 = vpop.f32.mrf.mxu0
    %2025 = vdwg.mxu0
    %v2026 = vsel %vm728, %v2023, -inf
    %2027 = vmax.xlane.f32.xlu0 %v2026
    %v2028 = vpop.xlane.xlu0 %2027
    %v2029 = vsub.f32 %v2023, %v2028
    %v2030 = vmul.f32 %v2029, 1.442695
    %v2031 = vpow.pop %v2030
    %v2032 = vsel %vm728, %v2031, 0.0
    %2033 = vadd.xlane.f32.xlu0 %v2032
    %v2034 = vpop.xlane.xlu0 %2033
    %v2035 = vpack.c.bf16 %v2031, %v2031
    %2036 = vrot.lane.b32.xlu0 %v1790, 104
    %v2037 = vpop.permute.xlu0 %2036
    %v2040 = vsel %vm728, %v2035, 0
    %2042 = vmatpush.bf16.msra.mxu0 0
    %2043 = vmatpush.bf16.msra.mxu0 0
    %2044 = vmatpush.bf16.msra.mxu0 0
    %2045 = vmatpush.bf16.msra.mxu0 0
    %2046 = vmatpush.bf16.msra.mxu0 0
    %2047 = vmatpush.bf16.msra.mxu0 0
    %2048 = vmatpush.bf16.msra.mxu0 0
    %2049 = vmatpush.bf16.msra.mxu0 %v2037
    %2050 = vmatmul.bf16.gmra.mxu0 %v2040
    %v2051 = vpop.f32.mrf.mxu0
    %v2052 = vadd.f32 0.0, %v2051
    %v2053 = vpop.f32.mrf.mxu0
    %2054 = vdwg.mxu0
    %v2055 = vrcp.pop %v2034
    %v2056 = vmul.f32 %v2052, %v2055
    %v2057 = vpack.c.bf16 %v2056, %v2056
    %v2059 = vsel %vm708, %v2057, 0
    %2061 = vmatpush.bf16.msra.mxu0 0
    %2062 = vmatpush.bf16.msra.mxu0 0
    %2063 = vmatpush.bf16.msra.mxu0 0
    %2064 = vmatpush.bf16.msra.mxu0 0
    %2065 = vmatpush.bf16.msra.mxu0 0
    %2066 = vmatpush.bf16.msra.mxu0 0
    %2067 = vmatpush.bf16.msra.mxu0 0
    %2068 = vmatpush.bf16.msra.mxu0 %v991
    %2069 = vmatmul.bf16.gmra.mxu0 %v2059
    %v2070 = vpop.f32.mrf.mxu0
    %v2071 = vadd.f32 0.0, %v2070
    %v2072 = vpop.f32.mrf.mxu0
    %2073 = vdwg.mxu0
    %v2074 = vadd.f32 %v2002, %v2071
    %v2076 = vrot.slane %v2074, 1
    %v2077 = vrot.slane %v2074, 2
    %v2078 = vrot.slane %v2074, 3
    %v2079 = vrot.slane %v2074, 4
    %v2080 = vrot.slane %v2074, 5
    %v2081 = vrot.slane %v2074, 6
    %v2082 = vrot.slane %v2074, 7
    %v2091 = vadd.f32 %v1473, %v2074
    %v2092 = vadd.f32 %v1474, %v2076
    %v2093 = vadd.f32 %v1475, %v2077
    %v2094 = vadd.f32 %v1476, %v2078
    %v2095 = vadd.f32 %v1477, %v2079
    %v2096 = vadd.f32 %v1478, %v2080
    %v2097 = vadd.f32 %v1479, %v2081
    %v2098 = vadd.f32 %v1480, %v2082
    %v2107 = vrot.slane %v2092, 7
    %v2108 = vsel %vm469, %v2107, %v2091
    %v2109 = vrot.slane %v2093, 6
    %v2110 = vsel %vm472, %v2109, %v2108
    %v2111 = vrot.slane %v2094, 5
    %v2112 = vsel %vm475, %v2111, %v2110
    %v2113 = vrot.slane %v2095, 4
    %v2114 = vsel %vm478, %v2113, %v2112
    %v2115 = vrot.slane %v2096, 3
    %v2116 = vsel %vm481, %v2115, %v2114
    %v2117 = vrot.slane %v2097, 2
    %v2118 = vsel %vm484, %v2117, %v2116
    %v2119 = vrot.slane %v2098, 1
    %v2120 = vsel %vm487, %v2119, %v2118
    %v2122 = vsel %vm502, %v2120, 0.0
    %2123 = vadd.xlane.f32.xlu0 %v2122
    %v2124 = vpop.xlane.xlu0 %2123
    %v2125 = vmul.f32 %v2124, %v1063
    %v2127 = vrot.slane %v2125, 1
    %v2128 = vrot.slane %v2125, 2
    %v2129 = vrot.slane %v2125, 3
    %v2130 = vrot.slane %v2125, 4
    %v2131 = vrot.slane %v2125, 5
    %v2132 = vrot.slane %v2125, 6
    %v2133 = vrot.slane %v2125, 7
    %v2142 = vsub.f32 %v2091, %v2125
    %v2143 = vsub.f32 %v2092, %v2127
    %v2144 = vsub.f32 %v2093, %v2128
    %v2145 = vsub.f32 %v2094, %v2129
    %v2146 = vsub.f32 %v2095, %v2130
    %v2147 = vsub.f32 %v2096, %v2131
    %v2148 = vsub.f32 %v2097, %v2132
    %v2149 = vsub.f32 %v2098, %v2133
    %v2150 = vmul.f32 %v2142, %v2142
    %v2151 = vmul.f32 %v2143, %v2143
    %v2152 = vmul.f32 %v2144, %v2144
    %v2153 = vmul.f32 %v2145, %v2145
    %v2154 = vmul.f32 %v2146, %v2146
    %v2155 = vmul.f32 %v2147, %v2147
    %v2156 = vmul.f32 %v2148, %v2148
    %v2157 = vmul.f32 %v2149, %v2149
    %v2166 = vrot.slane %v2151, 7
    %v2167 = vsel %vm469, %v2166, %v2150
    %v2168 = vrot.slane %v2152, 6
    %v2169 = vsel %vm472, %v2168, %v2167
    %v2170 = vrot.slane %v2153, 5
    %v2171 = vsel %vm475, %v2170, %v2169
    %v2172 = vrot.slane %v2154, 4
    %v2173 = vsel %vm478, %v2172, %v2171
    %v2174 = vrot.slane %v2155, 3
    %v2175 = vsel %vm481, %v2174, %v2173
    %v2176 = vrot.slane %v2156, 2
    %v2177 = vsel %vm484, %v2176, %v2175
    %v2178 = vrot.slane %v2157, 1
    %v2179 = vsel %vm487, %v2178, %v2177
    %v2181 = vsel %vm502, %v2179, 0.0
    %2182 = vadd.xlane.f32.xlu0 %v2181
    %v2183 = vpop.xlane.xlu0 %2182
    %v2184 = vmul.f32 %v2183, %v1063
    %v2185 = vadd.f32 %v2184, 1e-05
    %v2186 = vrsqrt.pop %v2185
    %v2187 = vmul.f32 %v2186, %v2185
    %v2188 = vmul.f32 %v2187, %v2186
    %v2189 = vmul.f32 0.5, %v2188
    %v2190 = vsub.f32 1.5, %v2189
    %v2191 = vmul.f32 %v2186, %v2190
    %vm2192 = vweird.f32 %v2185
    %vm2193 = vweird.f32 %v2186
    %vm2194 = vmor %vm2192, %vm2193
    %v2195 = vsel %vm2194, %v2186, %v2191
    %v2197 = vrot.slane %v2195, 1
    %v2198 = vrot.slane %v2195, 2
    %v2199 = vrot.slane %v2195, 3
    %v2200 = vrot.slane %v2195, 4
    %v2201 = vrot.slane %v2195, 5
    %v2202 = vrot.slane %v2195, 6
    %v2203 = vrot.slane %v2195, 7
    %v2212 = vmul.f32 %v2142, %v2195
    %v2213 = vmul.f32 %v2143, %v2197
    %v2214 = vmul.f32 %v2144, %v2198
    %v2215 = vmul.f32 %v2145, %v2199
    %v2216 = vmul.f32 %v2146, %v2200
    %v2217 = vmul.f32 %v2147, %v2201
    %v2218 = vmul.f32 %v2148, %v2202
    %v2219 = vmul.f32 %v2149, %v2203
    %v2220 = vmul.f32 %v2212, %v1160
    %v2221 = vmul.f32 %v2213, %v1160
    %v2222 = vmul.f32 %v2214, %v1160
    %v2223 = vmul.f32 %v2215, %v1160
    %v2224 = vmul.f32 %v2216, %v1160
    %v2225 = vmul.f32 %v2217, %v1160
    %v2226 = vmul.f32 %v2218, %v1160
    %v2227 = vmul.f32 %v2219, %v1160
    %v2228 = vadd.f32 %v2220, %v1171
    %v2229 = vadd.f32 %v2221, %v1171
    %v2230 = vadd.f32 %v2222, %v1171
    %v2231 = vadd.f32 %v2223, %v1171
    %v2232 = vadd.f32 %v2224, %v1171
    %v2233 = vadd.f32 %v2225, %v1171
    %v2234 = vadd.f32 %v2226, %v1171
    %v2235 = vadd.f32 %v2227, %v1171
    %v2236 = vpack.c.bf16 %v2228, %v2228
    %v2237 = vpack.c.bf16 %v2229, %v2229
    %v2238 = vpack.c.bf16 %v2230, %v2230
    %v2239 = vpack.c.bf16 %v2231, %v2231
    %v2240 = vpack.c.bf16 %v2232, %v2232
    %v2241 = vpack.c.bf16 %v2233, %v2233
    %v2242 = vpack.c.bf16 %v2234, %v2234
    %v2243 = vpack.c.bf16 %v2235, %v2235
    %v2252 = vunpack.c.l.b16 %v2236
    %v2253 = vunpack.c.l.b16 %v2237
    %v2254 = vunpack.c.l.b16 %v2238
    %v2255 = vunpack.c.l.b16 %v2239
    %v2256 = vunpack.c.l.b16 %v2240
    %v2257 = vunpack.c.l.b16 %v2241
    %v2258 = vunpack.c.l.b16 %v2242
    %v2259 = vunpack.c.l.b16 %v2243
    %v2260 = vrot.slane %v2253, 7
    %v2261 = vsel %vm469, %v2260, %v2252
    %v2262 = vrot.slane %v2254, 6
    %v2263 = vsel %vm472, %v2262, %v2261
    %v2264 = vrot.slane %v2255, 5
    %v2265 = vsel %vm475, %v2264, %v2263
    %v2266 = vrot.slane %v2256, 4
    %v2267 = vsel %vm478, %v2266, %v2265
    %v2268 = vrot.slane %v2257, 3
    %v2269 = vsel %vm481, %v2268, %v2267
    %v2270 = vrot.slane %v2258, 2
    %v2271 = vsel %vm484, %v2270, %v2269
    %v2272 = vrot.slane %v2259, 1
    %v2273 = vsel %vm487, %v2272, %v2271
    %v2274 = vpack.c.b16 %v2273, %v2273
    %v2276 = vsel %vm502, %v2274, 0
    %2278 = vmatpush.bf16.msra.mxu0 0
    %2279 = vmatpush.bf16.msra.mxu0 0
    %2280 = vmatpush.bf16.msra.mxu0 0
    %2281 = vmatpush.bf16.msra.mxu0 0
    %2282 = vmatpush.bf16.msra.mxu0 0
    %2283 = vmatpush.bf16.msra.mxu0 0
    %2284 = vmatpush.bf16.msra.mxu0 %v1232
    %2285 = vmatpush.bf16.msra.mxu0 %v1231
    %2286 = vmatmul.bf16.gmra.mxu0 %v2276
    %v2287 = vpop.f32.mrf.mxu0
    %v2288 = vadd.f32 %v1190, %v2287
    %v2289 = vpop.f32.mrf.mxu0
    %2290 = vdwg.mxu0
    %v2291 = vmax.f32 %v2288, 0.0
    %v2292 = vpack.c.bf16 %v2291, %v2291
    %v2294 = vsel %vm1280, %v2292, 0
    %2296 = vmatpush.bf16.msra.mxu0 0
    %2297 = vmatpush.bf16.msra.mxu0 0
    %2298 = vmatpush.bf16.msra.mxu0 0
    %2299 = vmatpush.bf16.msra.mxu0 0
    %2300 = vmatpush.bf16.msra.mxu0 %v1275
    %2301 = vmatpush.bf16.msra.mxu0 %v1274
    %2302 = vmatpush.bf16.msra.mxu0 %v1273
    %2303 = vmatpush.bf16.msra.mxu0 %v1272
    %2304 = vmatmul.bf16.gmra.mxu0 %v2294
    %v2305 = vpop.f32.mrf.mxu0
    %v2306 = vadd.f32 %v1254, %v2305
    %v2307 = vpop.f32.mrf.mxu0
    %2308 = vdwg.mxu0
    %v2310 = vrot.slane %v2306, 1
    %v2311 = vrot.slane %v2306, 2
    %v2312 = vrot.slane %v2306, 3
    %v2313 = vrot.slane %v2306, 4
    %v2314 = vrot.slane %v2306, 5
    %v2315 = vrot.slane %v2306, 6
    %v2316 = vrot.slane %v2306, 7
    %v2325 = vadd.f32 %v2228, %v2306
    %v2326 = vadd.f32 %v2229, %v2310
    %v2327 = vadd.f32 %v2230, %v2311
    %v2328 = vadd.f32 %v2231, %v2312
    %v2329 = vadd.f32 %v2232, %v2313
    %v2330 = vadd.f32 %v2233, %v2314
    %v2331 = vadd.f32 %v2234, %v2315
    %v2332 = vadd.f32 %v2235, %v2316
    %v2341 = vrot.slane %v2326, 7
    %v2342 = vsel %vm469, %v2341, %v2325
    %v2343 = vrot.slane %v2327, 6
    %v2344 = vsel %vm472, %v2343, %v2342
    %v2345 = vrot.slane %v2328, 5
    %v2346 = vsel %vm475, %v2345, %v2344
    %v2347 = vrot.slane %v2329, 4
    %v2348 = vsel %vm478, %v2347, %v2346
    %v2349 = vrot.slane %v2330, 3
    %v2350 = vsel %vm481, %v2349, %v2348
    %v2351 = vrot.slane %v2331, 2
    %v2352 = vsel %vm484, %v2351, %v2350
    %v2353 = vrot.slane %v2332, 1
    %v2354 = vsel %vm487, %v2353, %v2352
    %v2356 = vsel %vm502, %v2354, 0.0
    %2357 = vadd.xlane.f32.xlu0 %v2356
    %v2358 = vpop.xlane.xlu0 %2357
    %v2359 = vmul.f32 %v2358, %v1063
    %v2361 = vrot.slane %v2359, 1
    %v2362 = vrot.slane %v2359, 2
    %v2363 = vrot.slane %v2359, 3
    %v2364 = vrot.slane %v2359, 4
    %v2365 = vrot.slane %v2359, 5
    %v2366 = vrot.slane %v2359, 6
    %v2367 = vrot.slane %v2359, 7
    %v2376 = vsub.f32 %v2325, %v2359
    %v2377 = vsub.f32 %v2326, %v2361
    %v2378 = vsub.f32 %v2327, %v2362
    %v2379 = vsub.f32 %v2328, %v2363
    %v2380 = vsub.f32 %v2329, %v2364
    %v2381 = vsub.f32 %v2330, %v2365
    %v2382 = vsub.f32 %v2331, %v2366
    %v2383 = vsub.f32 %v2332, %v2367
    %v2384 = vmul.f32 %v2376, %v2376
    %v2385 = vmul.f32 %v2377, %v2377
    %v2386 = vmul.f32 %v2378, %v2378
    %v2387 = vmul.f32 %v2379, %v2379
    %v2388 = vmul.f32 %v2380, %v2380
    %v2389 = vmul.f32 %v2381, %v2381
    %v2390 = vmul.f32 %v2382, %v2382
    %v2391 = vmul.f32 %v2383, %v2383
    %v2400 = vrot.slane %v2385, 7
    %v2401 = vsel %vm469, %v2400, %v2384
    %v2402 = vrot.slane %v2386, 6
    %v2403 = vsel %vm472, %v2402, %v2401
    %v2404 = vrot.slane %v2387, 5
    %v2405 = vsel %vm475, %v2404, %v2403
    %v2406 = vrot.slane %v2388, 4
    %v2407 = vsel %vm478, %v2406, %v2405
    %v2408 = vrot.slane %v2389, 3
    %v2409 = vsel %vm481, %v2408, %v2407
    %v2410 = vrot.slane %v2390, 2
    %v2411 = vsel %vm484, %v2410, %v2409
    %v2412 = vrot.slane %v2391, 1
    %v2413 = vsel %vm487, %v2412, %v2411
    %v2415 = vsel %vm502, %v2413, 0.0
    %2416 = vadd.xlane.f32.xlu0 %v2415
    %v2417 = vpop.xlane.xlu0 %2416
    %v2418 = vmul.f32 %v2417, %v1063
    %v2419 = vadd.f32 %v2418, 1e-05
    %v2420 = vrsqrt.pop %v2419
    %v2421 = vmul.f32 %v2420, %v2419
    %v2422 = vmul.f32 %v2421, %v2420
    %v2423 = vmul.f32 0.5, %v2422
    %v2424 = vsub.f32 1.5, %v2423
    %v2425 = vmul.f32 %v2420, %v2424
    %vm2426 = vweird.f32 %v2419
    %vm2427 = vweird.f32 %v2420
    %vm2428 = vmor %vm2426, %vm2427
    %v2429 = vsel %vm2428, %v2420, %v2425
    %v2431 = vrot.slane %v2429, 1
    %v2432 = vrot.slane %v2429, 2
    %v2433 = vrot.slane %v2429, 3
    %v2434 = vrot.slane %v2429, 4
    %v2435 = vrot.slane %v2429, 5
    %v2436 = vrot.slane %v2429, 6
    %v2437 = vrot.slane %v2429, 7
    %v2446 = vmul.f32 %v2376, %v2429
    %v2447 = vmul.f32 %v2377, %v2431
    %v2448 = vmul.f32 %v2378, %v2432
    %v2449 = vmul.f32 %v2379, %v2433
    %v2450 = vmul.f32 %v2380, %v2434
    %v2451 = vmul.f32 %v2381, %v2435
    %v2452 = vmul.f32 %v2382, %v2436
    %v2453 = vmul.f32 %v2383, %v2437
    %v2454 = vmul.f32 %v2446, %v1443
    %v2455 = vmul.f32 %v2447, %v1443
    %v2456 = vmul.f32 %v2448, %v1443
    %v2457 = vmul.f32 %v2449, %v1443
    %v2458 = vmul.f32 %v2450, %v1443
    %v2459 = vmul.f32 %v2451, %v1443
    %v2460 = vmul.f32 %v2452, %v1443
    %v2461 = vmul.f32 %v2453, %v1443
    %v2462 = vadd.f32 %v2454, %v1454
    %v2463 = vadd.f32 %v2455, %v1454
    %v2464 = vadd.f32 %v2456, %v1454
    %v2465 = vadd.f32 %v2457, %v1454
    %v2466 = vadd.f32 %v2458, %v1454
    %v2467 = vadd.f32 %v2459, %v1454
    %v2468 = vadd.f32 %v2460, %v1454
    %v2469 = vadd.f32 %v2461, %v1454
    %2470 = vst.msk [vmem:[#allocation28 + $0x1] sm:$0x1] %vm1464, %v2462
    %2471 = vst.msk [vmem:[#allocation28 + $0x3] sm:$0x1] %vm1464, %v2463
    %2472 = vst.msk [vmem:[#allocation28 + $0x5] sm:$0x1] %vm1464, %v2464
    %2473 = vst.msk [vmem:[#allocation28 + $0x7] sm:$0x1] %vm1464, %v2465
    %2474 = vst.msk [vmem:[#allocation28 + $0x9] sm:$0x1] %vm1464, %v2466
    %2475 = vst.msk [vmem:[#allocation28 + $0xb] sm:$0x1] %vm1464, %v2467
    %2476 = vst.msk [vmem:[#allocation28 + $0xd] sm:$0x1] %vm1464, %v2468
    %2477 = vst.msk [vmem:[#allocation28 + $0xf] sm:$0x1] %vm1464, %v2469
    // Predicated region
    $region146: #{transformer_decoder_layer.1} parent=1 // pred_check
      _
    $region147: #{transformer_decoder_layer.1} parent=1 // pred_check_branch
      %2479 = sbr.rel (0) target = $region149
    $region148: #{transformer_decoder_layer.1} parent=1 // pred_region
      %2481 = vsyncadd [#allocation4], 0
      %s2482 = sshll.u32 [#allocation28], 4
      %s2483 = int_to_ptr.vmem [resolvable:$true] %s2482
      %s2484 = sshll.u32 %s20, 4
      %s2485 = int_to_ptr.hbm [resolvable:$true] %s2484
      %2490 = dma.vmem_to_hbm [thread:$0]  %s2483, 256, %s2485, [#allocation4], 32, 32, 2
    $region149: #{transformer_decoder_layer.1} parent=1 // pred_fallthru
      _
    // Predicated region
    $region150: #{transformer_decoder_layer.1} parent=1 // pred_check
      _
    $region151: #{transformer_decoder_layer.1} parent=1 // pred_check_branch
      %2492 = sbr.rel (0) target = $region153
    $region152: #{transformer_decoder_layer.1} parent=1 // pred_region
      %2494 = dma.done [#allocation4], 256
    $region153: #{transformer_decoder_layer.1} parent=1 // pred_fallthru
      _
    %2495 = vsyncpa [#allocation3], 1
    %2496 = vsyncpa [#allocation6], 1
    %2497 = vsyncpa [#allocation9], 1
    %2498 = vsyncpa [#allocation12], 1
    %2499 = vsyncpa [#allocation15], 1
    %2500 = vsyncpa [#allocation18], 1
    %2501 = vsyncpa [#allocation21], 1
    %2502 = vsyncpa [#allocation24], 1
    %2503 = vsyncpa [#allocation27], 1
    %2504 = vsyncpa [#allocation4], 1

</llo_original>
